<compile_context>
chip_gen: v5e
topology: v5e:2x2
jax: 0.10.0
libtpu: 0.0.40
codegen_flags: <defaults>
</compile_context>

<pallas_src>
import functools
import math

import jax
import jax.numpy as jnp
from jax.experimental import pallas as pl
from jax.experimental.pallas import tpu as pltpu


# ----------------------------- in-kernel helpers ---------------------------

def _layernorm(x, gamma, beta, eps):
    mean = jnp.mean(x, axis=-1, keepdims=True)
    d = x - mean
    var = jnp.mean(d * d, axis=-1, keepdims=True)
    return d * jax.lax.rsqrt(var + eps) * gamma + beta


def _gelu(x):
    # tanh-approximate GELU (f32 epilogue).
    # TODO(synk): PyTorch nn.GELU / HF BERT default to the exact erf form; swap in
    # 0.5*x*(1+erf(x/sqrt(2))) if bit parity with the reference matters.
    return 0.5 * x * (1.0 + jnp.tanh(0.7978845608028654 * (x + 0.044715 * x * x * x)))


# --------------------------- fused encoder layer ----------------------------
# One pallas_call per encoder layer. Grid over batch ("parallel" -> megacore-shardable on
# v7x). Per grid step the kernel sees one (S, H) sequence; weights use constant index maps
# so they stay resident in VMEM across steps. Heads live on a leading (non-lane) dim of the
# QKV / Wo weights, so per-head math is batched einsums with no lane-misaligned slicing.

def _encoder_layer_kernel(*refs, num_heads, eps, fuse_input_ln):
    f32, bf16 = jnp.float32, jnp.bfloat16

    x_ref, mask_ref = refs[0], refs[1]
    idx = 2
    if fuse_input_ln:
        iln_g_ref, iln_b_ref = refs[2], refs[3]
        idx = 4
    (wqkv_ref, bqkv_ref, wo_ref, bo_ref,
     ln1_g_ref, ln1_b_ref,
     wff1_ref, bff1_ref, wff2_ref, bff2_ref,
     ln2_g_ref, ln2_b_ref, o_ref) = refs[idx:]

    x = x_ref[...]                                             # (S, H) f32
    if fuse_input_ln:                                          # embedding LayerNorm fused in
        x = _layernorm(x, iln_g_ref[...], iln_b_ref[...], eps)
    S, H = x.shape
    nH = num_heads
    xb = x.astype(bf16)                                        # cast activations once

    # Batched per-head QKV projection: heads on the leading dim, K = H contraction.
    # 1/sqrt(head_dim) was folded into Wq / bq on the host.
    xh = jnp.broadcast_to(xb[None], (3 * nH, S, H))            # (3nH, S, H) bf16
    qkv = jnp.einsum("nsh,nhd->nsd", xh, wqkv_ref[...],
                     preferred_element_type=f32) + bqkv_ref[...]   # (3nH, S, D) f32
    q = qkv[:nH].astype(bf16)                                  # (nH, S, D)
    k = qkv[nH:2 * nH].astype(bf16)
    v = qkv[2 * nH:].astype(bf16)

    # Additive key mask built in-kernel from the raw (1, 1, S) attention mask.
    bias = (1.0 - mask_ref[...]) * -1e9                        # (1, 1, S)

    s = jnp.einsum("nqd,nkd->nqk", q, k,
                   preferred_element_type=f32) + bias          # (nH, S, S)
    m = jnp.max(s, axis=-1, keepdims=True)
    p = jnp.exp(s - m)
    denom = jnp.sum(p, axis=-1, keepdims=True)                 # (nH, S, 1), >= 1
    ctx = jnp.einsum("nqk,nkd->nqd", p.astype(bf16), v,
                     preferred_element_type=f32)               # (nH, S, D)
    # Normalize after the PV matmul (S*D instead of S*S divides) on the EUP.
    ctx = ctx * pl.reciprocal(denom, approx=True)

    # Output projection: batched per-head (S,D)@(D,H) + head-sum == merged-heads @ Wo.
    attn = jnp.einsum("nsd,ndh->nsh", ctx.astype(bf16), wo_ref[...],
                      preferred_element_type=f32)              # (nH, S, H)
    attn = jnp.sum(attn, axis=0) + bo_ref[...]                 # (S, H)

    # residual + LayerNorm 1
    x1 = _layernorm(attn + x, ln1_g_ref[...], ln1_b_ref[...], eps)

    # FFN (bf16 matmuls, f32 epilogue)
    ff = jnp.dot(x1.astype(bf16), wff1_ref[...],
                 preferred_element_type=f32) + bff1_ref[...]   # (S, I)
    ff = _gelu(ff)
    ff2 = jnp.dot(ff.astype(bf16), wff2_ref[...],
                  preferred_element_type=f32) + bff2_ref[...]  # (S, H)

    # residual + LayerNorm 2
    x2 = _layernorm(ff2 + x1, ln2_g_ref[...], ln2_b_ref[...], eps)
    o_ref[...] = x2.astype(o_ref.dtype)


def _resident_spec(a):
    # Full-array block whose index never changes with the grid step -> stays in VMEM.
    zeros = (0,) * a.ndim
    return pl.BlockSpec(a.shape, lambda b: zeros)


def encoder_layer(x, mask3, lyr, *, B, S, H, nH, input_ln=None, eps=1e-12):
    fuse = input_ln is not None
    operands = [x, mask3]
    in_specs = [pl.BlockSpec((S, H), lambda b: (b, 0)),
                pl.BlockSpec((1, 1, S), lambda b: (b, 0, 0))]
    if fuse:
        operands += list(input_ln)
        in_specs += [_resident_spec(a) for a in input_ln]
    weights = [lyr["wqkv"], lyr["bqkv"], lyr["wo"], lyr["bo"],
               lyr["ln1_g"], lyr["ln1_b"],
               lyr["wff1"], lyr["bff1"], lyr["wff2"], lyr["bff2"],
               lyr["ln2_g"], lyr["ln2_b"]]
    operands += weights
    in_specs += [_resident_spec(w) for w in weights]

    kernel = functools.partial(_encoder_layer_kernel, num_heads=nH, eps=eps,
                               fuse_input_ln=fuse)
    # TODO(synk): at real BERT shapes add a token-tile grid axis, an explicit
    # vmem_limit_bytes for v7x (64 MiB VMEM), and bf16 layer outputs.
    return pl.pallas_call(
        kernel,
        out_shape=jax.ShapeDtypeStruct((B * S, H), jnp.float32),
        grid=(B,),
        in_specs=in_specs,
        out_specs=pl.BlockSpec((S, H), lambda b: (b, 0)),
        compiler_params=pltpu.CompilerParams(dimension_semantics=("parallel",)),
    )(*operands)


# ------------------------- pooler + classifier heads ------------------------

def _heads_kernel(x_ref, wp_ref, bp_ref, wh_ref, bh_ref, o_ref, *, B, S):
    f32, bf16 = jnp.float32, jnp.bfloat16
    # CLS rows (row 0 of each sequence) extracted in-kernel -- no XLA-glue gather.
    # TODO(synk): at scale, DMA only the CLS rows (or fuse into the last layer) instead
    # of reading the full (B*S, H) activation.
    cls = jnp.concatenate([x_ref[pl.ds(b * S, 1), :] for b in range(B)], axis=0)  # (B, H)
    pooled = jnp.tanh(jnp.dot(cls.astype(bf16), wp_ref[...],
                              preferred_element_type=f32) + bp_ref[...])          # (B, H)
    out = jnp.dot(pooled.astype(bf16), wh_ref[...],
                  preferred_element_type=f32) + bh_ref[...]                       # (B, 128)
    o_ref[...] = out.astype(o_ref.dtype)


def fused_heads(x, wp, bp, wh, bh, *, B, S):
    NPAD = wh.shape[1]
    vmem = pl.BlockSpec(memory_space=pltpu.MemorySpace.VMEM)
    return pl.pallas_call(
        functools.partial(_heads_kernel, B=B, S=S),
        out_shape=jax.ShapeDtypeStruct((B, NPAD), jnp.float32),
        in_specs=[vmem] * 5,
        out_specs=vmem,
    )(x, wp, bp, wh, bh)


# --------------------------- Model (glue + params) -------------------------

CFG = dict(
    vocab_size=100,
    max_position=16,
    type_vocab=2,
    hidden=32,
    num_heads=4,
    head_dim=8,
    intermediate=64,
    num_layers=2,
    num_risk_categories=5,
)

_HEAD_PAD = 128   # lane-dense padded width for the fused classifier/severity output


def init_params(key, cfg):
    H, I = cfg["hidden"], cfg["intermediate"]
    nH, D = cfg["num_heads"], cfg["head_dim"]
    nc = cfg["num_risk_categories"]
    scale = 1.0 / math.sqrt(D)
    keys = iter(jax.random.split(key, 64))

    def w(shape):
        return jax.random.normal(next(keys), shape, jnp.float32) * 0.02

    def per_head_cols(mat):
        # (H, H) -> (nH, H, D): head h owns output columns [h*D:(h+1)*D].
        return jnp.transpose(mat.reshape(H, nH, D), (1, 0, 2))

    p = dict(
        word_emb=w((cfg["vocab_size"], H)),
        pos_emb=w((cfg["max_position"], H)),
        type_emb=w((cfg["type_vocab"], H)),
        emb_ln_g=jnp.ones((1, H), jnp.float32),
        emb_ln_b=jnp.zeros((1, H), jnp.float32),
        layers=[],
    )
    for _ in range(cfg["num_layers"]):
        wq, wk, wv = w((H, H)), w((H, H)), w((H, H))
        bq = jnp.zeros((nH, 1, D), jnp.float32)
        bk = jnp.zeros((nH, 1, D), jnp.float32)
        bv = jnp.zeros((nH, 1, D), jnp.float32)
        # Heads on the leading dim; 1/sqrt(D) folded into the Q projection (weights + bias).
        wqkv = jnp.concatenate([per_head_cols(wq) * scale,
                                per_head_cols(wk),
                                per_head_cols(wv)], axis=0)          # (3nH, H, D)
        bqkv = jnp.concatenate([bq * scale, bk, bv], axis=0)         # (3nH, 1, D)
        wo = w((H, H))
        p["layers"].append(dict(
            wqkv=wqkv.astype(jnp.bfloat16),
            bqkv=bqkv,
            wo=wo.reshape(nH, D, H).astype(jnp.bfloat16),            # head h = rows [h*D:(h+1)*D]
            bo=jnp.zeros((1, H), jnp.float32),
            ln1_g=jnp.ones((1, H), jnp.float32),
            ln1_b=jnp.zeros((1, H), jnp.float32),
            wff1=w((H, I)).astype(jnp.bfloat16),
            bff1=jnp.zeros((1, I), jnp.float32),
            wff2=w((I, H)).astype(jnp.bfloat16),
            bff2=jnp.zeros((1, H), jnp.float32),
            ln2_g=jnp.ones((1, H), jnp.float32),
            ln2_b=jnp.zeros((1, H), jnp.float32),
        ))

    # Fused classifier (nc cols) + severity (1 col) head, zero-padded to 128 lanes.
    wh = jnp.zeros((H, _HEAD_PAD), jnp.float32)
    wh = wh.at[:, :nc].set(w((H, nc)))
    wh = wh.at[:, nc:nc + 1].set(w((H, 1)))
    p["pooler_w"] = w((H, H)).astype(jnp.bfloat16)
    p["pooler_b"] = jnp.zeros((1, H), jnp.float32)
    p["heads_w"] = wh.astype(jnp.bfloat16)
    p["heads_b"] = jnp.zeros((1, _HEAD_PAD), jnp.float32)
    return p


def risk_analyzer_forward(params, input_ids, attention_mask, cfg=CFG):
    B, S = input_ids.shape
    H, nH = cfg["hidden"], cfg["num_heads"]
    nc = cfg["num_risk_categories"]

    # --- embeddings (table gathers stay in XLA glue) ---
    positions = jnp.arange(S, dtype=jnp.int32)
    emb = (jnp.take(params["word_emb"], input_ids, axis=0)
           + jnp.take(params["pos_emb"], positions, axis=0)[None, :, :]
           + params["type_emb"][0][None, None, :])            # token_type_ids == 0
    x = emb.reshape(B * S, H).astype(jnp.float32)

    mask3 = attention_mask.astype(jnp.float32).reshape(B, 1, S)

    for i, lyr in enumerate(params["layers"]):
        x = encoder_layer(
            x, mask3, lyr, B=B, S=S, H=H, nH=nH,
            input_ln=(params["emb_ln_g"], params["emb_ln_b"]) if i == 0 else None)

    # --- BERT pooler + heads, fused (lane-dense padded output) ---
    out = fused_heads(x, params["pooler_w"], params["pooler_b"],
                      params["heads_w"], params["heads_b"], B=B, S=S)
    risk_logits = out[:, :nc]
    severity_score = out[:, nc:nc + 1]     # raw linear, matching the reference forward()
    return risk_logits, severity_score


# --------------------------------- main -------------------------------------

if __name__ == "__main__":
    key = jax.random.PRNGKey(0)
    k_param, k_ids = jax.random.split(key)

    params = init_params(k_param, CFG)

    B, S = 2, 8
    input_ids = jax.random.randint(k_ids, (B, S), 0, CFG["vocab_size"], dtype=jnp.int32)
    # last two positions of the second sequence are padding
    attention_mask = jnp.array(
        [[1, 1, 1, 1, 1, 1, 1, 1],
         [1, 1, 1, 1, 1, 1, 0, 0]], dtype=jnp.int32)

    fwd = jax.jit(functools.partial(risk_analyzer_forward, cfg=CFG))
    risk_logits, severity_score = fwd(params, input_ids, attention_mask)
    jax.block_until_ready((risk_logits, severity_score))

    assert risk_logits.shape == (B, CFG["num_risk_categories"])
    assert severity_score.shape == (B, 1)
    assert jnp.all(jnp.isfinite(risk_logits)) and jnp.all(jnp.isfinite(severity_score))
    print("KERNEL_OK")
</pallas_src>

<mosaic_0001>
module attributes {stable_mosaic.version = 11 : i64} {
  func.func @_heads_kernel(%arg0: memref<16x32xf32, #tpu.memory_space<vmem>>, %arg1: memref<32x32xbf16, #tpu.memory_space<vmem>>, %arg2: memref<1x32xf32, #tpu.memory_space<vmem>>, %arg3: memref<32x128xbf16, #tpu.memory_space<vmem>>, %arg4: memref<1x128xf32, #tpu.memory_space<vmem>>, %arg5: memref<2x128xf32, #tpu.memory_space<vmem>>) attributes {dimension_semantics = [], scalar_prefetch = 0 : i64, scratch_operands = 0 : i64, tpu.core_type = #tpu.core_type<tc>} {
    %c0 = arith.constant 0 : index
    %c0_0 = arith.constant 0 : index
    %0 = vector.load %arg0[%c0, %c0_0] : memref<16x32xf32, #tpu.memory_space<vmem>>, vector<1x32xf32>
    %c8 = arith.constant 8 : index
    %c0_1 = arith.constant 0 : index
    %1 = vector.load %arg0[%c8, %c0_1] : memref<16x32xf32, #tpu.memory_space<vmem>>, vector<1x32xf32>
    %2 = tpu.concatenate %0, %1 in 0 : vector<1x32xf32>, vector<1x32xf32> -> vector<2x32xf32>
    %3 = arith.truncf %2 : vector<2x32xf32> to vector<2x32xbf16>
    %c0_2 = arith.constant 0 : index
    %c0_3 = arith.constant 0 : index
    %4 = vector.load %arg1[%c0_2, %c0_3] : memref<32x32xbf16, #tpu.memory_space<vmem>>, vector<32x32xbf16>
    %cst = arith.constant dense<0.000000e+00> : vector<2x32xf32>
    %5 = tpu.matmul %3, %4, %cst {dimension_numbers = #tpu.dot_dimension_numbers<[1], [0], [0], [1], [0, 0, 1, 1], [], []>} : vector<2x32xbf16>, vector<32x32xbf16>, vector<2x32xf32> -> vector<2x32xf32>
    %c0_4 = arith.constant 0 : index
    %c0_5 = arith.constant 0 : index
    %6 = vector.load %arg2[%c0_4, %c0_5] : memref<1x32xf32, #tpu.memory_space<vmem>>, vector<1x32xf32>
    %7 = vector.broadcast %6 : vector<1x32xf32> to vector<2x32xf32>
    %8 = arith.addf %5, %7 : vector<2x32xf32>
    %9 = math.tanh %8 : vector<2x32xf32>
    %10 = arith.truncf %9 : vector<2x32xf32> to vector<2x32xbf16>
    %c0_6 = arith.constant 0 : index
    %c0_7 = arith.constant 0 : index
    %11 = vector.load %arg3[%c0_6, %c0_7] : memref<32x128xbf16, #tpu.memory_space<vmem>>, vector<32x128xbf16>
    %cst_8 = arith.constant dense<0.000000e+00> : vector<2x128xf32>
    %12 = tpu.matmul %10, %11, %cst_8 {dimension_numbers = #tpu.dot_dimension_numbers<[1], [0], [0], [1], [0, 0, 1, 1], [], []>} : vector<2x32xbf16>, vector<32x128xbf16>, vector<2x128xf32> -> vector<2x128xf32>
    %c0_9 = arith.constant 0 : index
    %c0_10 = arith.constant 0 : index
    %13 = vector.load %arg4[%c0_9, %c0_10] : memref<1x128xf32, #tpu.memory_space<vmem>>, vector<1x128xf32>
    %14 = vector.broadcast %13 : vector<1x128xf32> to vector<2x128xf32>
    %15 = arith.addf %12, %14 : vector<2x128xf32>
    %c0_11 = arith.constant 0 : index
    %c0_12 = arith.constant 0 : index
    %16 = vector.load %arg5[%c0_11, %c0_12] : memref<2x128xf32, #tpu.memory_space<vmem>>, vector<2x128xf32>
    tpu.vector_store %arg5[%c0_11, %c0_12], %15 {strides = array<i32>} : memref<2x128xf32, #tpu.memory_space<vmem>>, vector<2x128xf32>,
    return
  }
}

module attributes {stable_mosaic.version = 11 : i64} {
  func.func @_encoder_layer_kernel(%arg0: i32, %arg1: memref<8x32xf32, #tpu.memory_space<vmem>>, %arg2: memref<1x1x8xf32, #tpu.memory_space<vmem>>, %arg3: memref<12x32x8xbf16, #tpu.memory_space<vmem>>, %arg4: memref<12x1x8xf32, #tpu.memory_space<vmem>>, %arg5: memref<4x8x32xbf16, #tpu.memory_space<vmem>>, %arg6: memref<1x32xf32, #tpu.memory_space<vmem>>, %arg7: memref<1x32xf32, #tpu.memory_space<vmem>>, %arg8: memref<1x32xf32, #tpu.memory_space<vmem>>, %arg9: memref<32x64xbf16, #tpu.memory_space<vmem>>, %arg10: memref<1x64xf32, #tpu.memory_space<vmem>>, %arg11: memref<64x32xbf16, #tpu.memory_space<vmem>>, %arg12: memref<1x32xf32, #tpu.memory_space<vmem>>, %arg13: memref<1x32xf32, #tpu.memory_space<vmem>>, %arg14: memref<1x32xf32, #tpu.memory_space<vmem>>, %arg15: memref<8x32xf32, #tpu.memory_space<vmem>>) attributes {dimension_semantics = [#tpu.dimension_semantics<parallel>], iteration_bounds = array<i64: 2>, scalar_prefetch = 0 : i64, scratch_operands = 0 : i64, tpu.core_type = #tpu.core_type<tc>, window_params = [{transform_indices = @transform_0, window_bounds = array<i64: 8, 32>}, {transform_indices = @transform_1, window_bounds = array<i64: 1, 1, 8>}, {pipeline_mode = #tpu.pipeline_mode<synchronous>, transform_indices = @transform_2, window_bounds = array<i64: 12, 32, 8>}, {pipeline_mode = #tpu.pipeline_mode<synchronous>, transform_indices = @transform_3, window_bounds = array<i64: 12, 1, 8>}, {pipeline_mode = #tpu.pipeline_mode<synchronous>, transform_indices = @transform_4, window_bounds = array<i64: 4, 8, 32>}, {pipeline_mode = #tpu.pipeline_mode<synchronous>, transform_indices = @transform_5, window_bounds = array<i64: 1, 32>}, {pipeline_mode = #tpu.pipeline_mode<synchronous>, transform_indices = @transform_6, window_bounds = array<i64: 1, 32>}, {pipeline_mode = #tpu.pipeline_mode<synchronous>, transform_indices = @transform_7, window_bounds = array<i64: 1, 32>}, {pipeline_mode = #tpu.pipeline_mode<synchronous>, transform_indices = @transform_8, window_bounds = array<i64: 32, 64>}, {pipeline_mode = #tpu.pipeline_mode<synchronous>, transform_indices = @transform_9, window_bounds = array<i64: 1, 64>}, {pipeline_mode = #tpu.pipeline_mode<synchronous>, transform_indices = @transform_10, window_bounds = array<i64: 64, 32>}, {pipeline_mode = #tpu.pipeline_mode<synchronous>, transform_indices = @transform_11, window_bounds = array<i64: 1, 32>}, {pipeline_mode = #tpu.pipeline_mode<synchronous>, transform_indices = @transform_12, window_bounds = array<i64: 1, 32>}, {pipeline_mode = #tpu.pipeline_mode<synchronous>, transform_indices = @transform_13, window_bounds = array<i64: 1, 32>}, {transform_indices = @transform_14, window_bounds = array<i64: 8, 32>}]} {
    %c0 = arith.constant 0 : index
    %c0_0 = arith.constant 0 : index
    %0 = vector.load %arg1[%c0, %c0_0] : memref<8x32xf32, #tpu.memory_space<vmem>>, vector<8x32xf32>
    %1 = arith.truncf %0 : vector<8x32xf32> to vector<8x32xbf16>
    %2 = vector.shape_cast %1 : vector<8x32xbf16> to vector<1x8x32xbf16>
    %3 = vector.shape_cast %2 : vector<1x8x32xbf16> to vector<1x8x32xbf16>
    %4 = vector.broadcast %3 : vector<1x8x32xbf16> to vector<12x8x32xbf16>
    %c0_1 = arith.constant 0 : index
    %c0_2 = arith.constant 0 : index
    %c0_3 = arith.constant 0 : index
    %5 = vector.load %arg3[%c0_1, %c0_2, %c0_3] : memref<12x32x8xbf16, #tpu.memory_space<vmem>>, vector<12x32x8xbf16>
    "tpu.trace_start"() <{level = 10 : i32, message = "nsh,nhd->nsd"}> : () -> ()
    %cst = arith.constant dense<0.000000e+00> : vector<12x8x8xf32>
    %6 = tpu.matmul %4, %5, %cst {dimension_numbers = #tpu.dot_dimension_numbers<[2], [1], [1], [2], [0, 0, 0, 1, 1, 2], [0], [0]>} : vector<12x8x32xbf16>, vector<12x32x8xbf16>, vector<12x8x8xf32> -> vector<12x8x8xf32>
    "tpu.trace_stop"() : () -> ()
    %c0_4 = arith.constant 0 : index
    %c0_5 = arith.constant 0 : index
    %c0_6 = arith.constant 0 : index
    %7 = vector.load %arg4[%c0_4, %c0_5, %c0_6] : memref<12x1x8xf32, #tpu.memory_space<vmem>>, vector<12x1x8xf32>
    %8 = vector.broadcast %7 : vector<12x1x8xf32> to vector<12x8x8xf32>
    %9 = arith.addf %6, %8 : vector<12x8x8xf32>
    %10 = vector.extract_strided_slice %9 {offsets = [0, 0, 0], sizes = [4, 8, 8], strides = [1, 1, 1]} : vector<12x8x8xf32> to vector<4x8x8xf32>
    %11 = arith.truncf %10 : vector<4x8x8xf32> to vector<4x8x8xbf16>
    %12 = vector.extract_strided_slice %9 {offsets = [4, 0, 0], sizes = [4, 8, 8], strides = [1, 1, 1]} : vector<12x8x8xf32> to vector<4x8x8xf32>
    %13 = arith.truncf %12 : vector<4x8x8xf32> to vector<4x8x8xbf16>
    %14 = vector.extract_strided_slice %9 {offsets = [8, 0, 0], sizes = [4, 8, 8], strides = [1, 1, 1]} : vector<12x8x8xf32> to vector<4x8x8xf32>
    %15 = arith.truncf %14 : vector<4x8x8xf32> to vector<4x8x8xbf16>
    %c0_7 = arith.constant 0 : index
    %c0_8 = arith.constant 0 : index
    %c0_9 = arith.constant 0 : index
    %16 = vector.load %arg2[%c0_7, %c0_8, %c0_9] : memref<1x1x8xf32, #tpu.memory_space<vmem>>, vector<1x1x8xf32>
    %cst_10 = arith.constant 1.000000e+00 : f32
    %17 = vector.broadcast %cst_10 : f32 to vector<1x1x8xf32>
    %18 = arith.subf %17, %16 : vector<1x1x8xf32>
    %cst_11 = arith.constant -1.000000e+09 : f32
    %19 = vector.broadcast %cst_11 : f32 to vector<1x1x8xf32>
    %20 = arith.mulf %18, %19 : vector<1x1x8xf32>
    "tpu.trace_start"() <{level = 10 : i32, message = "nqd,nkd->nqk"}> : () -> ()
    %cst_12 = arith.constant dense<0.000000e+00> : vector<4x8x8xf32>
    %21 = tpu.matmul %11, %13, %cst_12 {dimension_numbers = #tpu.dot_dimension_numbers<[2], [2], [1], [1], [0, 0, 0, 1, 1, 1], [0], [0]>} : vector<4x8x8xbf16>, vector<4x8x8xbf16>, vector<4x8x8xf32> -> vector<4x8x8xf32>
    "tpu.trace_stop"() : () -> ()
    %22 = vector.broadcast %20 : vector<1x1x8xf32> to vector<4x8x8xf32>
    %23 = arith.addf %21, %22 : vector<4x8x8xf32>
    %cst_13 = arith.constant dense<0xFF800000> : vector<4x8xf32>
    %24 = vector.multi_reduction <maximumf>, %23, %cst_13 [2] : vector<4x8x8xf32> to vector<4x8xf32>
    %25 = vector.shape_cast %24 : vector<4x8xf32> to vector<4x8x1xf32>
    %26 = vector.broadcast %25 : vector<4x8x1xf32> to vector<4x8x8xf32>
    %27 = arith.subf %23, %26 : vector<4x8x8xf32>
    %28 = math.exp %27 : vector<4x8x8xf32>
    %cst_14 = arith.constant dense<0.000000e+00> : vector<4x8xf32>
    %29 = vector.multi_reduction <add>, %28, %cst_14 [2] : vector<4x8x8xf32> to vector<4x8xf32>
    %30 = vector.shape_cast %29 : vector<4x8xf32> to vector<4x8x1xf32>
    %31 = arith.truncf %28 : vector<4x8x8xf32> to vector<4x8x8xbf16>
    "tpu.trace_start"() <{level = 10 : i32, message = "nqk,nkd->nqd"}> : () -> ()
    %cst_15 = arith.constant dense<0.000000e+00> : vector<4x8x8xf32>
    %32 = tpu.matmul %31, %15, %cst_15 {dimension_numbers = #tpu.dot_dimension_numbers<[2], [1], [1], [2], [0, 0, 0, 1, 1, 2], [0], [0]>} : vector<4x8x8xbf16>, vector<4x8x8xbf16>, vector<4x8x8xf32> -> vector<4x8x8xf32>
    "tpu.trace_stop"() : () -> ()
    %33 = tpu.reciprocal %30 {approx = true} : vector<4x8x1xf32> -> vector<4x8x1xf32>
    %34 = vector.broadcast %33 : vector<4x8x1xf32> to vector<4x8x8xf32>
    %35 = arith.mulf %32, %34 : vector<4x8x8xf32>
    %36 = arith.truncf %35 : vector<4x8x8xf32> to vector<4x8x8xbf16>
    %c0_16 = arith.constant 0 : index
    %c0_17 = arith.constant 0 : index
    %c0_18 = arith.constant 0 : index
    %37 = vector.load %arg5[%c0_16, %c0_17, %c0_18] : memref<4x8x32xbf16, #tpu.memory_space<vmem>>, vector<4x8x32xbf16>
    "tpu.trace_start"() <{level = 10 : i32, message = "nsd,ndh->nsh"}> : () -> ()
    %cst_19 = arith.constant dense<0.000000e+00> : vector<4x8x32xf32>
    %38 = tpu.matmul %36, %37, %cst_19 {dimension_numbers = #tpu.dot_dimension_numbers<[2], [1], [1], [2], [0, 0, 0, 1, 1, 2], [0], [0]>} : vector<4x8x8xbf16>, vector<4x8x32xbf16>, vector<4x8x32xf32> -> vector<4x8x32xf32>
    "tpu.trace_stop"() : () -> ()
    %cst_20 = arith.constant dense<0.000000e+00> : vector<8x32xf32>
    %39 = vector.multi_reduction <add>, %38, %cst_20 [0] : vector<4x8x32xf32> to vector<8x32xf32>
    %c0_21 = arith.constant 0 : index
    %c0_22 = arith.constant 0 : index
    %40 = vector.load %arg6[%c0_21, %c0_22] : memref<1x32xf32, #tpu.memory_space<vmem>>, vector<1x32xf32>
    %41 = vector.broadcast %40 : vector<1x32xf32> to vector<8x32xf32>
    %42 = arith.addf %39, %41 : vector<8x32xf32>
    %43 = arith.addf %42, %0 : vector<8x32xf32>
    %c0_23 = arith.constant 0 : index
    %c0_24 = arith.constant 0 : index
    %44 = vector.load %arg7[%c0_23, %c0_24] : memref<1x32xf32, #tpu.memory_space<vmem>>, vector<1x32xf32>
    %c0_25 = arith.constant 0 : index
    %c0_26 = arith.constant 0 : index
    %45 = vector.load %arg8[%c0_25, %c0_26] : memref<1x32xf32, #tpu.memory_space<vmem>>, vector<1x32xf32>
    %cst_27 = arith.constant dense<0.000000e+00> : vector<8xf32>
    %46 = vector.multi_reduction <add>, %43, %cst_27 [1] : vector<8x32xf32> to vector<8xf32>
    %47 = vector.shape_cast %46 : vector<8xf32> to vector<8x1xf32>
    %cst_28 = arith.constant 3.200000e+01 : f32
    %48 = vector.broadcast %cst_28 : f32 to vector<8x1xf32>
    %49 = arith.divf %47, %48 : vector<8x1xf32>
    %50 = vector.broadcast %49 : vector<8x1xf32> to vector<8x32xf32>
    %51 = arith.subf %43, %50 : vector<8x32xf32>
    %52 = arith.mulf %51, %51 : vector<8x32xf32>
    %cst_29 = arith.constant dense<0.000000e+00> : vector<8xf32>
    %53 = vector.multi_reduction <add>, %52, %cst_29 [1] : vector<8x32xf32> to vector<8xf32>
    %54 = vector.shape_cast %53 : vector<8xf32> to vector<8x1xf32>
    %cst_30 = arith.constant 3.200000e+01 : f32
    %55 = vector.broadcast %cst_30 : f32 to vector<8x1xf32>
    %56 = arith.divf %54, %55 : vector<8x1xf32>
    %cst_31 = arith.constant 9.99999996E-13 : f32
    %57 = vector.broadcast %cst_31 : f32 to vector<8x1xf32>
    %58 = arith.addf %56, %57 : vector<8x1xf32>
    %59 = math.rsqrt %58 : vector<8x1xf32>
    %60 = vector.broadcast %59 : vector<8x1xf32> to vector<8x32xf32>
    %61 = arith.mulf %51, %60 : vector<8x32xf32>
    %62 = vector.broadcast %44 : vector<1x32xf32> to vector<8x32xf32>
    %63 = arith.mulf %61, %62 : vector<8x32xf32>
    %64 = vector.broadcast %45 : vector<1x32xf32> to vector<8x32xf32>
    %65 = arith.addf %63, %64 : vector<8x32xf32>
    %66 = arith.truncf %65 : vector<8x32xf32> to vector<8x32xbf16>
    %c0_32 = arith.constant 0 : index
    %c0_33 = arith.constant 0 : index
    %67 = vector.load %arg9[%c0_32, %c0_33] : memref<32x64xbf16, #tpu.memory_space<vmem>>, vector<32x64xbf16>
    %cst_34 = arith.constant dense<0.000000e+00> : vector<8x64xf32>
    %68 = tpu.matmul %66, %67, %cst_34 {dimension_numbers = #tpu.dot_dimension_numbers<[1], [0], [0], [1], [0, 0, 1, 1], [], []>} : vector<8x32xbf16>, vector<32x64xbf16>, vector<8x64xf32> -> vector<8x64xf32>
    %c0_35 = arith.constant 0 : index
    %c0_36 = arith.constant 0 : index
    %69 = vector.load %arg10[%c0_35, %c0_36] : memref<1x64xf32, #tpu.memory_space<vmem>>, vector<1x64xf32>
    %70 = vector.broadcast %69 : vector<1x64xf32> to vector<8x64xf32>
    %71 = arith.addf %68, %70 : vector<8x64xf32>
    %cst_37 = arith.constant 5.000000e-01 : f32
    %72 = vector.broadcast %cst_37 : f32 to vector<8x64xf32>
    %73 = arith.mulf %72, %71 : vector<8x64xf32>
    %cst_38 = arith.constant 4.471500e-02 : f32
    %74 = vector.broadcast %cst_38 : f32 to vector<8x64xf32>
    %75 = arith.mulf %74, %71 : vector<8x64xf32>
    %76 = arith.mulf %75, %71 : vector<8x64xf32>
    %77 = arith.mulf %76, %71 : vector<8x64xf32>
    %78 = arith.addf %71, %77 : vector<8x64xf32>
    %cst_39 = arith.constant 0.797884583 : f32
    %79 = vector.broadcast %cst_39 : f32 to vector<8x64xf32>
    %80 = arith.mulf %79, %78 : vector<8x64xf32>
    %81 = math.tanh %80 : vector<8x64xf32>
    %cst_40 = arith.constant 1.000000e+00 : f32
    %82 = vector.broadcast %cst_40 : f32 to vector<8x64xf32>
    %83 = arith.addf %82, %81 : vector<8x64xf32>
    %84 = arith.mulf %73, %83 : vector<8x64xf32>
    %85 = arith.truncf %84 : vector<8x64xf32> to vector<8x64xbf16>
    %c0_41 = arith.constant 0 : index
    %c0_42 = arith.constant 0 : index
    %86 = vector.load %arg11[%c0_41, %c0_42] : memref<64x32xbf16, #tpu.memory_space<vmem>>, vector<64x32xbf16>
    %cst_43 = arith.constant dense<0.000000e+00> : vector<8x32xf32>
    %87 = tpu.matmul %85, %86, %cst_43 {dimension_numbers = #tpu.dot_dimension_numbers<[1], [0], [0], [1], [0, 0, 1, 1], [], []>} : vector<8x64xbf16>, vector<64x32xbf16>, vector<8x32xf32> -> vector<8x32xf32>
    %c0_44 = arith.constant 0 : index
    %c0_45 = arith.constant 0 : index
    %88 = vector.load %arg12[%c0_44, %c0_45] : memref<1x32xf32, #tpu.memory_space<vmem>>, vector<1x32xf32>
    %89 = vector.broadcast %88 : vector<1x32xf32> to vector<8x32xf32>
    %90 = arith.addf %87, %89 : vector<8x32xf32>
    %91 = arith.addf %90, %65 : vector<8x32xf32>
    %c0_46 = arith.constant 0 : index
    %c0_47 = arith.constant 0 : index
    %92 = vector.load %arg13[%c0_46, %c0_47] : memref<1x32xf32, #tpu.memory_space<vmem>>, vector<1x32xf32>
    %c0_48 = arith.constant 0 : index
    %c0_49 = arith.constant 0 : index
    %93 = vector.load %arg14[%c0_48, %c0_49] : memref<1x32xf32, #tpu.memory_space<vmem>>, vector<1x32xf32>
    %cst_50 = arith.constant dense<0.000000e+00> : vector<8xf32>
    %94 = vector.multi_reduction <add>, %91, %cst_50 [1] : vector<8x32xf32> to vector<8xf32>
    %95 = vector.shape_cast %94 : vector<8xf32> to vector<8x1xf32>
    %cst_51 = arith.constant 3.200000e+01 : f32
    %96 = vector.broadcast %cst_51 : f32 to vector<8x1xf32>
    %97 = arith.divf %95, %96 : vector<8x1xf32>
    %98 = vector.broadcast %97 : vector<8x1xf32> to vector<8x32xf32>
    %99 = arith.subf %91, %98 : vector<8x32xf32>
    %100 = arith.mulf %99, %99 : vector<8x32xf32>
    %cst_52 = arith.constant dense<0.000000e+00> : vector<8xf32>
    %101 = vector.multi_reduction <add>, %100, %cst_52 [1] : vector<8x32xf32> to vector<8xf32>
    %102 = vector.shape_cast %101 : vector<8xf32> to vector<8x1xf32>
    %cst_53 = arith.constant 3.200000e+01 : f32
    %103 = vector.broadcast %cst_53 : f32 to vector<8x1xf32>
    %104 = arith.divf %102, %103 : vector<8x1xf32>
    %cst_54 = arith.constant 9.99999996E-13 : f32
    %105 = vector.broadcast %cst_54 : f32 to vector<8x1xf32>
    %106 = arith.addf %104, %105 : vector<8x1xf32>
    %107 = math.rsqrt %106 : vector<8x1xf32>
    %108 = vector.broadcast %107 : vector<8x1xf32> to vector<8x32xf32>
    %109 = arith.mulf %99, %108 : vector<8x32xf32>
    %110 = vector.broadcast %92 : vector<1x32xf32> to vector<8x32xf32>
    %111 = arith.mulf %109, %110 : vector<8x32xf32>
    %112 = vector.broadcast %93 : vector<1x32xf32> to vector<8x32xf32>
    %113 = arith.addf %111, %112 : vector<8x32xf32>
    %c0_55 = arith.constant 0 : index
    %c0_56 = arith.constant 0 : index
    %114 = vector.load %arg15[%c0_55, %c0_56] : memref<8x32xf32, #tpu.memory_space<vmem>>, vector<8x32xf32>
    tpu.vector_store %arg15[%c0_55, %c0_56], %113 {strides = array<i32>} : memref<8x32xf32, #tpu.memory_space<vmem>>, vector<8x32xf32>,
    return
  }
  func.func @transform_0(%arg0: i32) -> (i32, i32) {
    %c0_i32 = arith.constant 0 : i32
    %c0_i32_0 = arith.constant 0 : i32
    return %arg0, %c0_i32 : i32, i32
  }
  func.func @transform_1(%arg0: i32) -> (i32, i32, i32) {
    %c0_i32 = arith.constant 0 : i32
    %c0_i32_0 = arith.constant 0 : i32
    %c0_i32_1 = arith.constant 0 : i32
    return %arg0, %c0_i32, %c0_i32_0 : i32, i32, i32
  }
  func.func @transform_2(%arg0: i32) -> (i32, i32, i32) {
    %c0_i32 = arith.constant 0 : i32
    %c0_i32_0 = arith.constant 0 : i32
    %c0_i32_1 = arith.constant 0 : i32
    %c0_i32_2 = arith.constant 0 : i32
    return %c0_i32, %c0_i32_0, %c0_i32_1 : i32, i32, i32
  }
  func.func @transform_3(%arg0: i32) -> (i32, i32, i32) {
    %c0_i32 = arith.constant 0 : i32
    %c0_i32_0 = arith.constant 0 : i32
    %c0_i32_1 = arith.constant 0 : i32
    %c0_i32_2 = arith.constant 0 : i32
    return %c0_i32, %c0_i32_0, %c0_i32_1 : i32, i32, i32
  }
  func.func @transform_4(%arg0: i32) -> (i32, i32, i32) {
    %c0_i32 = arith.constant 0 : i32
    %c0_i32_0 = arith.constant 0 : i32
    %c0_i32_1 = arith.constant 0 : i32
    %c0_i32_2 = arith.constant 0 : i32
    return %c0_i32, %c0_i32_0, %c0_i32_1 : i32, i32, i32
  }
  func.func @transform_5(%arg0: i32) -> (i32, i32) {
    %c0_i32 = arith.constant 0 : i32
    %c0_i32_0 = arith.constant 0 : i32
    %c0_i32_1 = arith.constant 0 : i32
    return %c0_i32, %c0_i32_0 : i32, i32
  }
  func.func @transform_6(%arg0: i32) -> (i32, i32) {
    %c0_i32 = arith.constant 0 : i32
    %c0_i32_0 = arith.constant 0 : i32
    %c0_i32_1 = arith.constant 0 : i32
    return %c0_i32, %c0_i32_0 : i32, i32
  }
  func.func @transform_7(%arg0: i32) -> (i32, i32) {
    %c0_i32 = arith.constant 0 : i32
    %c0_i32_0 = arith.constant 0 : i32
    %c0_i32_1 = arith.constant 0 : i32
    return %c0_i32, %c0_i32_0 : i32, i32
  }
  func.func @transform_8(%arg0: i32) -> (i32, i32) {
    %c0_i32 = arith.constant 0 : i32
    %c0_i32_0 = arith.constant 0 : i32
    %c0_i32_1 = arith.constant 0 : i32
    return %c0_i32, %c0_i32_0 : i32, i32
  }
  func.func @transform_9(%arg0: i32) -> (i32, i32) {
    %c0_i32 = arith.constant 0 : i32
    %c0_i32_0 = arith.constant 0 : i32
    %c0_i32_1 = arith.constant 0 : i32
    return %c0_i32, %c0_i32_0 : i32, i32
  }
  func.func @transform_10(%arg0: i32) -> (i32, i32) {
    %c0_i32 = arith.constant 0 : i32
    %c0_i32_0 = arith.constant 0 : i32
    %c0_i32_1 = arith.constant 0 : i32
    return %c0_i32, %c0_i32_0 : i32, i32
  }
  func.func @transform_11(%arg0: i32) -> (i32, i32) {
    %c0_i32 = arith.constant 0 : i32
    %c0_i32_0 = arith.constant 0 : i32
    %c0_i32_1 = arith.constant 0 : i32
    return %c0_i32, %c0_i32_0 : i32, i32
  }
  func.func @transform_12(%arg0: i32) -> (i32, i32) {
    %c0_i32 = arith.constant 0 : i32
    %c0_i32_0 = arith.constant 0 : i32
    %c0_i32_1 = arith.constant 0 : i32
    return %c0_i32, %c0_i32_0 : i32, i32
  }
  func.func @transform_13(%arg0: i32) -> (i32, i32) {
    %c0_i32 = arith.constant 0 : i32
    %c0_i32_0 = arith.constant 0 : i32
    %c0_i32_1 = arith.constant 0 : i32
    return %c0_i32, %c0_i32_0 : i32, i32
  }
  func.func @transform_14(%arg0: i32) -> (i32, i32) {
    %c0_i32 = arith.constant 0 : i32
    %c0_i32_0 = arith.constant 0 : i32
    return %arg0, %c0_i32 : i32, i32
  }
}

module attributes {stable_mosaic.version = 11 : i64} {
  func.func @_encoder_layer_kernel(%arg0: i32, %arg1: memref<8x32xf32, #tpu.memory_space<vmem>>, %arg2: memref<1x1x8xf32, #tpu.memory_space<vmem>>, %arg3: memref<1x32xf32, #tpu.memory_space<vmem>>, %arg4: memref<1x32xf32, #tpu.memory_space<vmem>>, %arg5: memref<12x32x8xbf16, #tpu.memory_space<vmem>>, %arg6: memref<12x1x8xf32, #tpu.memory_space<vmem>>, %arg7: memref<4x8x32xbf16, #tpu.memory_space<vmem>>, %arg8: memref<1x32xf32, #tpu.memory_space<vmem>>, %arg9: memref<1x32xf32, #tpu.memory_space<vmem>>, %arg10: memref<1x32xf32, #tpu.memory_space<vmem>>, %arg11: memref<32x64xbf16, #tpu.memory_space<vmem>>, %arg12: memref<1x64xf32, #tpu.memory_space<vmem>>, %arg13: memref<64x32xbf16, #tpu.memory_space<vmem>>, %arg14: memref<1x32xf32, #tpu.memory_space<vmem>>, %arg15: memref<1x32xf32, #tpu.memory_space<vmem>>, %arg16: memref<1x32xf32, #tpu.memory_space<vmem>>, %arg17: memref<8x32xf32, #tpu.memory_space<vmem>>) attributes {dimension_semantics = [#tpu.dimension_semantics<parallel>], iteration_bounds = array<i64: 2>, scalar_prefetch = 0 : i64, scratch_operands = 0 : i64, tpu.core_type = #tpu.core_type<tc>, window_params = [{transform_indices = @transform_0, window_bounds = array<i64: 8, 32>}, {transform_indices = @transform_1, window_bounds = array<i64: 1, 1, 8>}, {pipeline_mode = #tpu.pipeline_mode<synchronous>, transform_indices = @transform_2, window_bounds = array<i64: 1, 32>}, {pipeline_mode = #tpu.pipeline_mode<synchronous>, transform_indices = @transform_3, window_bounds = array<i64: 1, 32>}, {pipeline_mode = #tpu.pipeline_mode<synchronous>, transform_indices = @transform_4, window_bounds = array<i64: 12, 32, 8>}, {pipeline_mode = #tpu.pipeline_mode<synchronous>, transform_indices = @transform_5, window_bounds = array<i64: 12, 1, 8>}, {pipeline_mode = #tpu.pipeline_mode<synchronous>, transform_indices = @transform_6, window_bounds = array<i64: 4, 8, 32>}, {pipeline_mode = #tpu.pipeline_mode<synchronous>, transform_indices = @transform_7, window_bounds = array<i64: 1, 32>}, {pipeline_mode = #tpu.pipeline_mode<synchronous>, transform_indices = @transform_8, window_bounds = array<i64: 1, 32>}, {pipeline_mode = #tpu.pipeline_mode<synchronous>, transform_indices = @transform_9, window_bounds = array<i64: 1, 32>}, {pipeline_mode = #tpu.pipeline_mode<synchronous>, transform_indices = @transform_10, window_bounds = array<i64: 32, 64>}, {pipeline_mode = #tpu.pipeline_mode<synchronous>, transform_indices = @transform_11, window_bounds = array<i64: 1, 64>}, {pipeline_mode = #tpu.pipeline_mode<synchronous>, transform_indices = @transform_12, window_bounds = array<i64: 64, 32>}, {pipeline_mode = #tpu.pipeline_mode<synchronous>, transform_indices = @transform_13, window_bounds = array<i64: 1, 32>}, {pipeline_mode = #tpu.pipeline_mode<synchronous>, transform_indices = @transform_14, window_bounds = array<i64: 1, 32>}, {pipeline_mode = #tpu.pipeline_mode<synchronous>, transform_indices = @transform_15, window_bounds = array<i64: 1, 32>}, {transform_indices = @transform_16, window_bounds = array<i64: 8, 32>}]} {
    %c0 = arith.constant 0 : index
    %c0_0 = arith.constant 0 : index
    %0 = vector.load %arg1[%c0, %c0_0] : memref<8x32xf32, #tpu.memory_space<vmem>>, vector<8x32xf32>
    %c0_1 = arith.constant 0 : index
    %c0_2 = arith.constant 0 : index
    %1 = vector.load %arg3[%c0_1, %c0_2] : memref<1x32xf32, #tpu.memory_space<vmem>>, vector<1x32xf32>
    %c0_3 = arith.constant 0 : index
    %c0_4 = arith.constant 0 : index
    %2 = vector.load %arg4[%c0_3, %c0_4] : memref<1x32xf32, #tpu.memory_space<vmem>>, vector<1x32xf32>
    %cst = arith.constant dense<0.000000e+00> : vector<8xf32>
    %3 = vector.multi_reduction <add>, %0, %cst [1] : vector<8x32xf32> to vector<8xf32>
    %4 = vector.shape_cast %3 : vector<8xf32> to vector<8x1xf32>
    %cst_5 = arith.constant 3.200000e+01 : f32
    %5 = vector.broadcast %cst_5 : f32 to vector<8x1xf32>
    %6 = arith.divf %4, %5 : vector<8x1xf32>
    %7 = vector.broadcast %6 : vector<8x1xf32> to vector<8x32xf32>
    %8 = arith.subf %0, %7 : vector<8x32xf32>
    %9 = arith.mulf %8, %8 : vector<8x32xf32>
    %cst_6 = arith.constant dense<0.000000e+00> : vector<8xf32>
    %10 = vector.multi_reduction <add>, %9, %cst_6 [1] : vector<8x32xf32> to vector<8xf32>
    %11 = vector.shape_cast %10 : vector<8xf32> to vector<8x1xf32>
    %cst_7 = arith.constant 3.200000e+01 : f32
    %12 = vector.broadcast %cst_7 : f32 to vector<8x1xf32>
    %13 = arith.divf %11, %12 : vector<8x1xf32>
    %cst_8 = arith.constant 9.99999996E-13 : f32
    %14 = vector.broadcast %cst_8 : f32 to vector<8x1xf32>
    %15 = arith.addf %13, %14 : vector<8x1xf32>
    %16 = math.rsqrt %15 : vector<8x1xf32>
    %17 = vector.broadcast %16 : vector<8x1xf32> to vector<8x32xf32>
    %18 = arith.mulf %8, %17 : vector<8x32xf32>
    %19 = vector.broadcast %1 : vector<1x32xf32> to vector<8x32xf32>
    %20 = arith.mulf %18, %19 : vector<8x32xf32>
    %21 = vector.broadcast %2 : vector<1x32xf32> to vector<8x32xf32>
    %22 = arith.addf %20, %21 : vector<8x32xf32>
    %23 = arith.truncf %22 : vector<8x32xf32> to vector<8x32xbf16>
    %24 = vector.shape_cast %23 : vector<8x32xbf16> to vector<1x8x32xbf16>
    %25 = vector.shape_cast %24 : vector<1x8x32xbf16> to vector<1x8x32xbf16>
    %26 = vector.broadcast %25 : vector<1x8x32xbf16> to vector<12x8x32xbf16>
    %c0_9 = arith.constant 0 : index
    %c0_10 = arith.constant 0 : index
    %c0_11 = arith.constant 0 : index
    %27 = vector.load %arg5[%c0_9, %c0_10, %c0_11] : memref<12x32x8xbf16, #tpu.memory_space<vmem>>, vector<12x32x8xbf16>
    "tpu.trace_start"() <{level = 10 : i32, message = "nsh,nhd->nsd"}> : () -> ()
    %cst_12 = arith.constant dense<0.000000e+00> : vector<12x8x8xf32>
    %28 = tpu.matmul %26, %27, %cst_12 {dimension_numbers = #tpu.dot_dimension_numbers<[2], [1], [1], [2], [0, 0, 0, 1, 1, 2], [0], [0]>} : vector<12x8x32xbf16>, vector<12x32x8xbf16>, vector<12x8x8xf32> -> vector<12x8x8xf32>
    "tpu.trace_stop"() : () -> ()
    %c0_13 = arith.constant 0 : index
    %c0_14 = arith.constant 0 : index
    %c0_15 = arith.constant 0 : index
    %29 = vector.load %arg6[%c0_13, %c0_14, %c0_15] : memref<12x1x8xf32, #tpu.memory_space<vmem>>, vector<12x1x8xf32>
    %30 = vector.broadcast %29 : vector<12x1x8xf32> to vector<12x8x8xf32>
    %31 = arith.addf %28, %30 : vector<12x8x8xf32>
    %32 = vector.extract_strided_slice %31 {offsets = [0, 0, 0], sizes = [4, 8, 8], strides = [1, 1, 1]} : vector<12x8x8xf32> to vector<4x8x8xf32>
    %33 = arith.truncf %32 : vector<4x8x8xf32> to vector<4x8x8xbf16>
    %34 = vector.extract_strided_slice %31 {offsets = [4, 0, 0], sizes = [4, 8, 8], strides = [1, 1, 1]} : vector<12x8x8xf32> to vector<4x8x8xf32>
    %35 = arith.truncf %34 : vector<4x8x8xf32> to vector<4x8x8xbf16>
    %36 = vector.extract_strided_slice %31 {offsets = [8, 0, 0], sizes = [4, 8, 8], strides = [1, 1, 1]} : vector<12x8x8xf32> to vector<4x8x8xf32>
    %37 = arith.truncf %36 : vector<4x8x8xf32> to vector<4x8x8xbf16>
    %c0_16 = arith.constant 0 : index
    %c0_17 = arith.constant 0 : index
    %c0_18 = arith.constant 0 : index
    %38 = vector.load %arg2[%c0_16, %c0_17, %c0_18] : memref<1x1x8xf32, #tpu.memory_space<vmem>>, vector<1x1x8xf32>
    %cst_19 = arith.constant 1.000000e+00 : f32
    %39 = vector.broadcast %cst_19 : f32 to vector<1x1x8xf32>
    %40 = arith.subf %39, %38 : vector<1x1x8xf32>
    %cst_20 = arith.constant -1.000000e+09 : f32
    %41 = vector.broadcast %cst_20 : f32 to vector<1x1x8xf32>
    %42 = arith.mulf %40, %41 : vector<1x1x8xf32>
    "tpu.trace_start"() <{level = 10 : i32, message = "nqd,nkd->nqk"}> : () -> ()
    %cst_21 = arith.constant dense<0.000000e+00> : vector<4x8x8xf32>
    %43 = tpu.matmul %33, %35, %cst_21 {dimension_numbers = #tpu.dot_dimension_numbers<[2], [2], [1], [1], [0, 0, 0, 1, 1, 1], [0], [0]>} : vector<4x8x8xbf16>, vector<4x8x8xbf16>, vector<4x8x8xf32> -> vector<4x8x8xf32>
    "tpu.trace_stop"() : () -> ()
    %44 = vector.broadcast %42 : vector<1x1x8xf32> to vector<4x8x8xf32>
    %45 = arith.addf %43, %44 : vector<4x8x8xf32>
    %cst_22 = arith.constant dense<0xFF800000> : vector<4x8xf32>
    %46 = vector.multi_reduction <maximumf>, %45, %cst_22 [2] : vector<4x8x8xf32> to vector<4x8xf32>
    %47 = vector.shape_cast %46 : vector<4x8xf32> to vector<4x8x1xf32>
    %48 = vector.broadcast %47 : vector<4x8x1xf32> to vector<4x8x8xf32>
    %49 = arith.subf %45, %48 : vector<4x8x8xf32>
    %50 = math.exp %49 : vector<4x8x8xf32>
    %cst_23 = arith.constant dense<0.000000e+00> : vector<4x8xf32>
    %51 = vector.multi_reduction <add>, %50, %cst_23 [2] : vector<4x8x8xf32> to vector<4x8xf32>
    %52 = vector.shape_cast %51 : vector<4x8xf32> to vector<4x8x1xf32>
    %53 = arith.truncf %50 : vector<4x8x8xf32> to vector<4x8x8xbf16>
    "tpu.trace_start"() <{level = 10 : i32, message = "nqk,nkd->nqd"}> : () -> ()
    %cst_24 = arith.constant dense<0.000000e+00> : vector<4x8x8xf32>
    %54 = tpu.matmul %53, %37, %cst_24 {dimension_numbers = #tpu.dot_dimension_numbers<[2], [1], [1], [2], [0, 0, 0, 1, 1, 2], [0], [0]>} : vector<4x8x8xbf16>, vector<4x8x8xbf16>, vector<4x8x8xf32> -> vector<4x8x8xf32>
    "tpu.trace_stop"() : () -> ()
    %55 = tpu.reciprocal %52 {approx = true} : vector<4x8x1xf32> -> vector<4x8x1xf32>
    %56 = vector.broadcast %55 : vector<4x8x1xf32> to vector<4x8x8xf32>
    %57 = arith.mulf %54, %56 : vector<4x8x8xf32>
    %58 = arith.truncf %57 : vector<4x8x8xf32> to vector<4x8x8xbf16>
    %c0_25 = arith.constant 0 : index
    %c0_26 = arith.constant 0 : index
    %c0_27 = arith.constant 0 : index
    %59 = vector.load %arg7[%c0_25, %c0_26, %c0_27] : memref<4x8x32xbf16, #tpu.memory_space<vmem>>, vector<4x8x32xbf16>
    "tpu.trace_start"() <{level = 10 : i32, message = "nsd,ndh->nsh"}> : () -> ()
    %cst_28 = arith.constant dense<0.000000e+00> : vector<4x8x32xf32>
    %60 = tpu.matmul %58, %59, %cst_28 {dimension_numbers = #tpu.dot_dimension_numbers<[2], [1], [1], [2], [0, 0, 0, 1, 1, 2], [0], [0]>} : vector<4x8x8xbf16>, vector<4x8x32xbf16>, vector<4x8x32xf32> -> vector<4x8x32xf32>
    "tpu.trace_stop"() : () -> ()
    %cst_29 = arith.constant dense<0.000000e+00> : vector<8x32xf32>
    %61 = vector.multi_reduction <add>, %60, %cst_29 [0] : vector<4x8x32xf32> to vector<8x32xf32>
    %c0_30 = arith.constant 0 : index
    %c0_31 = arith.constant 0 : index
    %62 = vector.load %arg8[%c0_30, %c0_31] : memref<1x32xf32, #tpu.memory_space<vmem>>, vector<1x32xf32>
    %63 = vector.broadcast %62 : vector<1x32xf32> to vector<8x32xf32>
    %64 = arith.addf %61, %63 : vector<8x32xf32>
    %65 = arith.addf %64, %22 : vector<8x32xf32>
    %c0_32 = arith.constant 0 : index
    %c0_33 = arith.constant 0 : index
    %66 = vector.load %arg9[%c0_32, %c0_33] : memref<1x32xf32, #tpu.memory_space<vmem>>, vector<1x32xf32>
    %c0_34 = arith.constant 0 : index
    %c0_35 = arith.constant 0 : index
    %67 = vector.load %arg10[%c0_34, %c0_35] : memref<1x32xf32, #tpu.memory_space<vmem>>, vector<1x32xf32>
    %cst_36 = arith.constant dense<0.000000e+00> : vector<8xf32>
    %68 = vector.multi_reduction <add>, %65, %cst_36 [1] : vector<8x32xf32> to vector<8xf32>
    %69 = vector.shape_cast %68 : vector<8xf32> to vector<8x1xf32>
    %cst_37 = arith.constant 3.200000e+01 : f32
    %70 = vector.broadcast %cst_37 : f32 to vector<8x1xf32>
    %71 = arith.divf %69, %70 : vector<8x1xf32>
    %72 = vector.broadcast %71 : vector<8x1xf32> to vector<8x32xf32>
    %73 = arith.subf %65, %72 : vector<8x32xf32>
    %74 = arith.mulf %73, %73 : vector<8x32xf32>
    %cst_38 = arith.constant dense<0.000000e+00> : vector<8xf32>
    %75 = vector.multi_reduction <add>, %74, %cst_38 [1] : vector<8x32xf32> to vector<8xf32>
    %76 = vector.shape_cast %75 : vector<8xf32> to vector<8x1xf32>
    %cst_39 = arith.constant 3.200000e+01 : f32
    %77 = vector.broadcast %cst_39 : f32 to vector<8x1xf32>
    %78 = arith.divf %76, %77 : vector<8x1xf32>
    %cst_40 = arith.constant 9.99999996E-13 : f32
    %79 = vector.broadcast %cst_40 : f32 to vector<8x1xf32>
    %80 = arith.addf %78, %79 : vector<8x1xf32>
    %81 = math.rsqrt %80 : vector<8x1xf32>
    %82 = vector.broadcast %81 : vector<8x1xf32> to vector<8x32xf32>
    %83 = arith.mulf %73, %82 : vector<8x32xf32>
    %84 = vector.broadcast %66 : vector<1x32xf32> to vector<8x32xf32>
    %85 = arith.mulf %83, %84 : vector<8x32xf32>
    %86 = vector.broadcast %67 : vector<1x32xf32> to vector<8x32xf32>
    %87 = arith.addf %85, %86 : vector<8x32xf32>
    %88 = arith.truncf %87 : vector<8x32xf32> to vector<8x32xbf16>
    %c0_41 = arith.constant 0 : index
    %c0_42 = arith.constant 0 : index
    %89 = vector.load %arg11[%c0_41, %c0_42] : memref<32x64xbf16, #tpu.memory_space<vmem>>, vector<32x64xbf16>
    %cst_43 = arith.constant dense<0.000000e+00> : vector<8x64xf32>
    %90 = tpu.matmul %88, %89, %cst_43 {dimension_numbers = #tpu.dot_dimension_numbers<[1], [0], [0], [1], [0, 0, 1, 1], [], []>} : vector<8x32xbf16>, vector<32x64xbf16>, vector<8x64xf32> -> vector<8x64xf32>
    %c0_44 = arith.constant 0 : index
    %c0_45 = arith.constant 0 : index
    %91 = vector.load %arg12[%c0_44, %c0_45] : memref<1x64xf32, #tpu.memory_space<vmem>>, vector<1x64xf32>
    %92 = vector.broadcast %91 : vector<1x64xf32> to vector<8x64xf32>
    %93 = arith.addf %90, %92 : vector<8x64xf32>
    %cst_46 = arith.constant 5.000000e-01 : f32
    %94 = vector.broadcast %cst_46 : f32 to vector<8x64xf32>
    %95 = arith.mulf %94, %93 : vector<8x64xf32>
    %cst_47 = arith.constant 4.471500e-02 : f32
    %96 = vector.broadcast %cst_47 : f32 to vector<8x64xf32>
    %97 = arith.mulf %96, %93 : vector<8x64xf32>
    %98 = arith.mulf %97, %93 : vector<8x64xf32>
    %99 = arith.mulf %98, %93 : vector<8x64xf32>
    %100 = arith.addf %93, %99 : vector<8x64xf32>
    %cst_48 = arith.constant 0.797884583 : f32
    %101 = vector.broadcast %cst_48 : f32 to vector<8x64xf32>
    %102 = arith.mulf %101, %100 : vector<8x64xf32>
    %103 = math.tanh %102 : vector<8x64xf32>
    %cst_49 = arith.constant 1.000000e+00 : f32
    %104 = vector.broadcast %cst_49 : f32 to vector<8x64xf32>
    %105 = arith.addf %104, %103 : vector<8x64xf32>
    %106 = arith.mulf %95, %105 : vector<8x64xf32>
    %107 = arith.truncf %106 : vector<8x64xf32> to vector<8x64xbf16>
    %c0_50 = arith.constant 0 : index
    %c0_51 = arith.constant 0 : index
    %108 = vector.load %arg13[%c0_50, %c0_51] : memref<64x32xbf16, #tpu.memory_space<vmem>>, vector<64x32xbf16>
    %cst_52 = arith.constant dense<0.000000e+00> : vector<8x32xf32>
    %109 = tpu.matmul %107, %108, %cst_52 {dimension_numbers = #tpu.dot_dimension_numbers<[1], [0], [0], [1], [0, 0, 1, 1], [], []>} : vector<8x64xbf16>, vector<64x32xbf16>, vector<8x32xf32> -> vector<8x32xf32>
    %c0_53 = arith.constant 0 : index
    %c0_54 = arith.constant 0 : index
    %110 = vector.load %arg14[%c0_53, %c0_54] : memref<1x32xf32, #tpu.memory_space<vmem>>, vector<1x32xf32>
    %111 = vector.broadcast %110 : vector<1x32xf32> to vector<8x32xf32>
    %112 = arith.addf %109, %111 : vector<8x32xf32>
    %113 = arith.addf %112, %87 : vector<8x32xf32>
    %c0_55 = arith.constant 0 : index
    %c0_56 = arith.constant 0 : index
    %114 = vector.load %arg15[%c0_55, %c0_56] : memref<1x32xf32, #tpu.memory_space<vmem>>, vector<1x32xf32>
    %c0_57 = arith.constant 0 : index
    %c0_58 = arith.constant 0 : index
    %115 = vector.load %arg16[%c0_57, %c0_58] : memref<1x32xf32, #tpu.memory_space<vmem>>, vector<1x32xf32>
    %cst_59 = arith.constant dense<0.000000e+00> : vector<8xf32>
    %116 = vector.multi_reduction <add>, %113, %cst_59 [1] : vector<8x32xf32> to vector<8xf32>
    %117 = vector.shape_cast %116 : vector<8xf32> to vector<8x1xf32>
    %cst_60 = arith.constant 3.200000e+01 : f32
    %118 = vector.broadcast %cst_60 : f32 to vector<8x1xf32>
    %119 = arith.divf %117, %118 : vector<8x1xf32>
    %120 = vector.broadcast %119 : vector<8x1xf32> to vector<8x32xf32>
    %121 = arith.subf %113, %120 : vector<8x32xf32>
    %122 = arith.mulf %121, %121 : vector<8x32xf32>
    %cst_61 = arith.constant dense<0.000000e+00> : vector<8xf32>
    %123 = vector.multi_reduction <add>, %122, %cst_61 [1] : vector<8x32xf32> to vector<8xf32>
    %124 = vector.shape_cast %123 : vector<8xf32> to vector<8x1xf32>
    %cst_62 = arith.constant 3.200000e+01 : f32
    %125 = vector.broadcast %cst_62 : f32 to vector<8x1xf32>
    %126 = arith.divf %124, %125 : vector<8x1xf32>
    %cst_63 = arith.constant 9.99999996E-13 : f32
    %127 = vector.broadcast %cst_63 : f32 to vector<8x1xf32>
    %128 = arith.addf %126, %127 : vector<8x1xf32>
    %129 = math.rsqrt %128 : vector<8x1xf32>
    %130 = vector.broadcast %129 : vector<8x1xf32> to vector<8x32xf32>
    %131 = arith.mulf %121, %130 : vector<8x32xf32>
    %132 = vector.broadcast %114 : vector<1x32xf32> to vector<8x32xf32>
    %133 = arith.mulf %131, %132 : vector<8x32xf32>
    %134 = vector.broadcast %115 : vector<1x32xf32> to vector<8x32xf32>
    %135 = arith.addf %133, %134 : vector<8x32xf32>
    %c0_64 = arith.constant 0 : index
    %c0_65 = arith.constant 0 : index
    %136 = vector.load %arg17[%c0_64, %c0_65] : memref<8x32xf32, #tpu.memory_space<vmem>>, vector<8x32xf32>
    tpu.vector_store %arg17[%c0_64, %c0_65], %135 {strides = array<i32>} : memref<8x32xf32, #tpu.memory_space<vmem>>, vector<8x32xf32>,
    return
  }
  func.func @transform_0(%arg0: i32) -> (i32, i32) {
    %c0_i32 = arith.constant 0 : i32
    %c0_i32_0 = arith.constant 0 : i32
    return %arg0, %c0_i32 : i32, i32
  }
  func.func @transform_1(%arg0: i32) -> (i32, i32, i32) {
    %c0_i32 = arith.constant 0 : i32
    %c0_i32_0 = arith.constant 0 : i32
    %c0_i32_1 = arith.constant 0 : i32
    return %arg0, %c0_i32, %c0_i32_0 : i32, i32, i32
  }
  func.func @transform_2(%arg0: i32) -> (i32, i32) {
    %c0_i32 = arith.constant 0 : i32
    %c0_i32_0 = arith.constant 0 : i32
    %c0_i32_1 = arith.constant 0 : i32
    return %c0_i32, %c0_i32_0 : i32, i32
  }
  func.func @transform_3(%arg0: i32) -> (i32, i32) {
    %c0_i32 = arith.constant 0 : i32
    %c0_i32_0 = arith.constant 0 : i32
    %c0_i32_1 = arith.constant 0 : i32
    return %c0_i32, %c0_i32_0 : i32, i32
  }
  func.func @transform_4(%arg0: i32) -> (i32, i32, i32) {
    %c0_i32 = arith.constant 0 : i32
    %c0_i32_0 = arith.constant 0 : i32
    %c0_i32_1 = arith.constant 0 : i32
    %c0_i32_2 = arith.constant 0 : i32
    return %c0_i32, %c0_i32_0, %c0_i32_1 : i32, i32, i32
  }
  func.func @transform_5(%arg0: i32) -> (i32, i32, i32) {
    %c0_i32 = arith.constant 0 : i32
    %c0_i32_0 = arith.constant 0 : i32
    %c0_i32_1 = arith.constant 0 : i32
    %c0_i32_2 = arith.constant 0 : i32
    return %c0_i32, %c0_i32_0, %c0_i32_1 : i32, i32, i32
  }
  func.func @transform_6(%arg0: i32) -> (i32, i32, i32) {
    %c0_i32 = arith.constant 0 : i32
    %c0_i32_0 = arith.constant 0 : i32
    %c0_i32_1 = arith.constant 0 : i32
    %c0_i32_2 = arith.constant 0 : i32
    return %c0_i32, %c0_i32_0, %c0_i32_1 : i32, i32, i32
  }
  func.func @transform_7(%arg0: i32) -> (i32, i32) {
    %c0_i32 = arith.constant 0 : i32
    %c0_i32_0 = arith.constant 0 : i32
    %c0_i32_1 = arith.constant 0 : i32
    return %c0_i32, %c0_i32_0 : i32, i32
  }
  func.func @transform_8(%arg0: i32) -> (i32, i32) {
    %c0_i32 = arith.constant 0 : i32
    %c0_i32_0 = arith.constant 0 : i32
    %c0_i32_1 = arith.constant 0 : i32
    return %c0_i32, %c0_i32_0 : i32, i32
  }
  func.func @transform_9(%arg0: i32) -> (i32, i32) {
    %c0_i32 = arith.constant 0 : i32
    %c0_i32_0 = arith.constant 0 : i32
    %c0_i32_1 = arith.constant 0 : i32
    return %c0_i32, %c0_i32_0 : i32, i32
  }
  func.func @transform_10(%arg0: i32) -> (i32, i32) {
    %c0_i32 = arith.constant 0 : i32
    %c0_i32_0 = arith.constant 0 : i32
    %c0_i32_1 = arith.constant 0 : i32
    return %c0_i32, %c0_i32_0 : i32, i32
  }
  func.func @transform_11(%arg0: i32) -> (i32, i32) {
    %c0_i32 = arith.constant 0 : i32
    %c0_i32_0 = arith.constant 0 : i32
    %c0_i32_1 = arith.constant 0 : i32
    return %c0_i32, %c0_i32_0 : i32, i32
  }
  func.func @transform_12(%arg0: i32) -> (i32, i32) {
    %c0_i32 = arith.constant 0 : i32
    %c0_i32_0 = arith.constant 0 : i32
    %c0_i32_1 = arith.constant 0 : i32
    return %c0_i32, %c0_i32_0 : i32, i32
  }
  func.func @transform_13(%arg0: i32) -> (i32, i32) {
    %c0_i32 = arith.constant 0 : i32
    %c0_i32_0 = arith.constant 0 : i32
    %c0_i32_1 = arith.constant 0 : i32
    return %c0_i32, %c0_i32_0 : i32, i32
  }
  func.func @transform_14(%arg0: i32) -> (i32, i32) {
    %c0_i32 = arith.constant 0 : i32
    %c0_i32_0 = arith.constant 0 : i32
    %c0_i32_1 = arith.constant 0 : i32
    return %c0_i32, %c0_i32_0 : i32, i32
  }
  func.func @transform_15(%arg0: i32) -> (i32, i32) {
    %c0_i32 = arith.constant 0 : i32
    %c0_i32_0 = arith.constant 0 : i32
    %c0_i32_1 = arith.constant 0 : i32
    return %c0_i32, %c0_i32_0 : i32, i32
  }
  func.func @transform_16(%arg0: i32) -> (i32, i32) {
    %c0_i32 = arith.constant 0 : i32
    %c0_i32_0 = arith.constant 0 : i32
    return %arg0, %c0_i32 : i32, i32
  }
}

</mosaic_0001>

<llo_original>
// kernel: risk_analyzer_forward.5
$region0: #{risk_analyzer_forward.5}
  #allocation0 [shape = 'u32[]', space=smem, size = 0x4, offset = 0x4, fixed_abs, tag = 'smem constant byte address 0x4 - core index']
  #allocation1 [shape = 'u32[72,128]{1,0:T(1,128)}', space=vmem, size = 0x9000, scoped, tag = 'internal scratch']
  %s0 = inlined_call_operand.vmem [shape: f32[16,32], index: 0, kind: input, shape index: {}]
  %s1 = inlined_call_operand.vmem [shape: bf16[32,32], index: 1, kind: input, shape index: {}]
  %s2 = inlined_call_operand.vmem [shape: f32[1,32], index: 2, kind: input, shape index: {}]
  %s3 = inlined_call_operand.vmem [shape: bf16[32,128], index: 3, kind: input, shape index: {}]
  %s4 = inlined_call_operand.vmem [shape: f32[1,128], index: 4, kind: input, shape index: {}]
  %s5 = inlined_call_operand.vmem [shape: f32[2,128], index: 5, kind: output, shape index: {}]
  %s6 = sld [smem:[#allocation0]]
  $region30: #{risk_analyzer_forward.5} parent=0
    _
  %s8 = ssub.s32 1, %s6
  %s9 = scalar_select 0, %s8, %s6
  // Predicated region
  $region2: #{risk_analyzer_forward.5} parent=0 // pred_check
    _
  $region3: #{risk_analyzer_forward.5} parent=0 // pred_check_branch
    %11 = sbr.rel (0) target = $region5
  $region4: #{risk_analyzer_forward.5} parent=0 // pred_region
    _
  $region5: #{risk_analyzer_forward.5} parent=0 // pred_fallthru
    _
  // Predicated region
  $region6: #{risk_analyzer_forward.5} parent=0 // pred_check
    _
  $region7: #{risk_analyzer_forward.5} parent=0 // pred_check_branch
    %13 = sbr.rel (0) target = $region9
  $region8: #{risk_analyzer_forward.5} parent=0 // pred_region
    _
  $region9: #{risk_analyzer_forward.5} parent=0 // pred_fallthru
    _
  // Predicated region
  $region10: #{risk_analyzer_forward.5} parent=0 // pred_check
    _
  $region11: #{risk_analyzer_forward.5} parent=0 // pred_check_branch
    %15 = sbr.rel (0) target = $region13
  $region12: #{risk_analyzer_forward.5} parent=0 // pred_region
    _
  $region13: #{risk_analyzer_forward.5} parent=0 // pred_fallthru
    _
  // Predicated region
  $region14: #{risk_analyzer_forward.5} parent=0 // pred_check
    _
  $region15: #{risk_analyzer_forward.5} parent=0 // pred_check_branch
    %17 = sbr.rel (0) target = $region17
  $region16: #{risk_analyzer_forward.5} parent=0 // pred_region
    _
  $region17: #{risk_analyzer_forward.5} parent=0 // pred_fallthru
    _
  // Predicated region
  $region18: #{risk_analyzer_forward.5} parent=0 // pred_check
    _
  $region19: #{risk_analyzer_forward.5} parent=0 // pred_check_branch
    %19 = sbr.rel (0) target = $region21
  $region20: #{risk_analyzer_forward.5} parent=0 // pred_region
    _
  $region21: #{risk_analyzer_forward.5} parent=0 // pred_fallthru
    _
  %v21 = vld [vmem:[%s0] sm:$0x1]
  %v22 = vld [vmem:[%s0 + $0x8] sm:$0x1]
  %v24 = vrot.slane %v22, 7
  %vm26 = vcmask 1040384
  %v27 = vsel %vm26, %v21, %v24
  %v28 = vpack.c.bf16 %v27, %v27
  %v29 = vld [vmem:[%s1] sm:$0xf]
  %v30 = vld [vmem:[%s1 + $0x4] sm:$0xf]
  %v31 = vld [vmem:[%s1 + $0x8] sm:$0xf]
  %v32 = vld [vmem:[%s1 + $0xc] sm:$0xf]
  %v33 = vld [vmem:[%s2] sm:$0x1]
  %v35 = vperm.slane %v33, 0
  %v41 = vunpack.c.l.b16 %v29
  %v42 = vunpack.c.l.b16 %v30
  %v43 = vunpack.c.l.b16 %v31
  %v44 = vunpack.c.l.b16 %v32
  %v45 = vpack.c.b16 %v42, %v41
  %v46 = vpack.c.b16 %v44, %v43
  %vm49 = vcmask 261120
  %v51 = vsel %vm49, %v28, 0
  %53 = vmatpush.bf16.msra.mxu0 0
  %54 = vmatpush.bf16.msra.mxu0 0
  %55 = vmatpush.bf16.msra.mxu0 0
  %56 = vmatpush.bf16.msra.mxu0 0
  %57 = vmatpush.bf16.msra.mxu0 0
  %58 = vmatpush.bf16.msra.mxu0 0
  %59 = vmatpush.bf16.msra.mxu0 %v46
  %60 = vmatpush.bf16.msra.mxu0 %v45
  %61 = vmatmul.bf16.gmra.mxu0 %v51
  %v62 = vpop.f32.mrf.mxu0
  %v63 = vadd.f32 %v35, %v62
  %v64 = vpop.f32.mrf.mxu0
  %65 = vdwg.mxu0
  %v66 = vtanh.pop %v63
  %v67 = vpack.c.bf16 %v66, %v66
  %v68 = vld [vmem:[%s3] sm:$0xf]
  %v69 = vld [vmem:[%s3 + $0x4] sm:$0xf]
  %v70 = vld [vmem:[%s3 + $0x8] sm:$0xf]
  %v71 = vld [vmem:[%s3 + $0xc] sm:$0xf]
  %v72 = vld [vmem:[%s4] sm:$0x1]
  %v74 = vperm.slane %v72, 0
  %v80 = vunpack.c.l.b16 %v68
  %v81 = vunpack.c.l.b16 %v69
  %v82 = vunpack.c.l.b16 %v70
  %v83 = vunpack.c.l.b16 %v71
  %v84 = vpack.c.b16 %v81, %v80
  %v85 = vpack.c.b16 %v83, %v82
  %v89 = vsel %vm49, %v67, 0
  %91 = vmatpush.bf16.msra.mxu0 0
  %92 = vmatpush.bf16.msra.mxu0 0
  %93 = vmatpush.bf16.msra.mxu0 0
  %94 = vmatpush.bf16.msra.mxu0 0
  %95 = vmatpush.bf16.msra.mxu0 0
  %96 = vmatpush.bf16.msra.mxu0 0
  %97 = vmatpush.bf16.msra.mxu0 %v85
  %98 = vmatpush.bf16.msra.mxu0 %v84
  %99 = vmatmul.bf16.gmra.mxu0 %v89
  %v100 = vpop.f32.mrf.mxu0
  %v101 = vadd.f32 %v74, %v100
  %v102 = vpop.f32.mrf.mxu0
  %103 = vdwg.mxu0
  %104 = vst [vmem:[%s5] sm:$0x3] %v101
  // Predicated region
  $region22: #{risk_analyzer_forward.5} parent=0 // pred_check
    _
  $region23: #{risk_analyzer_forward.5} parent=0 // pred_check_branch
    %106 = sbr.rel (0) target = $region25
  $region24: #{risk_analyzer_forward.5} parent=0 // pred_region
    _
  $region25: #{risk_analyzer_forward.5} parent=0 // pred_fallthru
    _
  // Predicated region
  $region26: #{risk_analyzer_forward.5} parent=0 // pred_check
    _
  $region27: #{risk_analyzer_forward.5} parent=0 // pred_check_branch
    %108 = sbr.rel (0) target = $region29
  $region28: #{risk_analyzer_forward.5} parent=0 // pred_region
    _
  $region29: #{risk_analyzer_forward.5} parent=0 // pred_fallthru
    _

// kernel: risk_analyzer_forward.4
$region0: #{risk_analyzer_forward.4}
  #allocation0 [shape = 'u32[]', space=smem, size = 0x4, offset = 0x4, fixed_abs, tag = 'smem constant byte address 0x4 - core index']
  #allocation1 [shape = 'u32[72,128]{1,0:T(1,128)}', space=vmem, size = 0x9000, scoped, tag = 'internal scratch']
  %s0 = inlined_call_operand.vmem [shape: f32[16,32], index: 0, kind: input, shape index: {}]
  %s1 = inlined_call_operand.vmem [shape: f32[2,1,8], index: 1, kind: input, shape index: {}]
  %s2 = inlined_call_operand.vmem [shape: bf16[12,32,8], index: 2, kind: input, shape index: {}]
  %s3 = inlined_call_operand.vmem [shape: f32[12,1,8], index: 3, kind: input, shape index: {}]
  %s4 = inlined_call_operand.vmem [shape: bf16[4,8,32], index: 4, kind: input, shape index: {}]
  %s5 = inlined_call_operand.vmem [shape: f32[1,32], index: 5, kind: input, shape index: {}]
  %s6 = inlined_call_operand.vmem [shape: f32[1,32], index: 6, kind: input, shape index: {}]
  %s7 = inlined_call_operand.vmem [shape: f32[1,32], index: 7, kind: input, shape index: {}]
  %s8 = inlined_call_operand.vmem [shape: bf16[32,64], index: 8, kind: input, shape index: {}]
  %s9 = inlined_call_operand.vmem [shape: f32[1,64], index: 9, kind: input, shape index: {}]
  %s10 = inlined_call_operand.vmem [shape: bf16[64,32], index: 10, kind: input, shape index: {}]
  %s11 = inlined_call_operand.vmem [shape: f32[1,32], index: 11, kind: input, shape index: {}]
  %s12 = inlined_call_operand.vmem [shape: f32[1,32], index: 12, kind: input, shape index: {}]
  %s13 = inlined_call_operand.vmem [shape: f32[1,32], index: 13, kind: input, shape index: {}]
  %s14 = inlined_call_operand.vmem [shape: f32[16,32], index: 14, kind: output, shape index: {}]
  %s15 = sld [smem:[#allocation0]]
  $region89: #{risk_analyzer_forward.4} parent=0
    _
  %s17 = ssub.s32 1, %s15
  %s18 = scalar_select 0, %s17, %s15
  loop: start=0, step=1, limit=4
  $region2: #{risk_analyzer_forward.4} parent=0 // loop_pre_header
    _
  $region3: #{risk_analyzer_forward.4} parent=0 // loop_header
    %s20 = sphi 0, %s24
    %p21 = scmp.ge.s32.totalorder %s20, 4
    %s30 = sphi 0, %s32
    %s33 = sphi 0, %s30
    %s34 = sphi 0, %s33
    %s50 = sphi 0, %s34
    %s56 = sphi 0, %s58
    %s59 = sphi 0, %s56
    %s60 = sphi 0, %s59
    %s76 = sphi 0, %s60
    %s80 = sphi 0, %s80
    %s82 = sphi 0, %s80
    %s83 = sphi 0, %s82
    %s97 = sphi 0, %s83
    %s101 = sphi 0, %s101
    %s103 = sphi 0, %s101
    %s104 = sphi 0, %s103
    %s118 = sphi 0, %s104
    %s122 = sphi 0, %s122
    %s124 = sphi 0, %s122
    %s125 = sphi 0, %s124
    %s139 = sphi 0, %s125
    %s143 = sphi 0, %s143
    %s145 = sphi 0, %s143
    %s146 = sphi 0, %s145
    %s160 = sphi 0, %s146
    %s164 = sphi 0, %s164
    %s166 = sphi 0, %s164
    %s167 = sphi 0, %s166
    %s181 = sphi 0, %s167
    %s185 = sphi 0, %s185
    %s187 = sphi 0, %s185
    %s188 = sphi 0, %s187
    %s202 = sphi 0, %s188
    %s206 = sphi 0, %s206
    %s208 = sphi 0, %s206
    %s209 = sphi 0, %s208
    %s223 = sphi 0, %s209
    %s227 = sphi 0, %s227
    %s229 = sphi 0, %s227
    %s230 = sphi 0, %s229
    %s244 = sphi 0, %s230
    %s248 = sphi 0, %s248
    %s250 = sphi 0, %s248
    %s251 = sphi 0, %s250
    %s265 = sphi 0, %s251
    %s269 = sphi 0, %s269
    %s271 = sphi 0, %s269
    %s272 = sphi 0, %s271
    %s286 = sphi 0, %s272
    %s290 = sphi 0, %s290
    %s292 = sphi 0, %s290
    %s293 = sphi 0, %s292
    %s307 = sphi 0, %s293
    %s311 = sphi 0, %s311
    %s313 = sphi 0, %s311
    %s314 = sphi 0, %s313
    %s328 = sphi 0, %s314
    %s334 = sphi 0, %s336
    %s337 = sphi 0, %s334
    %s338 = sphi 0, %s337
    %s354 = sphi 0, %s338
  $region4: #{risk_analyzer_forward.4} parent=0 // loop_header_branch
    %23 = sbr.rel (%p21) target = $region8
  $region5: #{risk_analyzer_forward.4} parent=0 // loop_body
    %s25 = ssub.s32 %s20, 1
    %s26 = ssub.s32 %s20, 2
    %s27 = sadd.s32 %s20, 1
    %s28 = ssub.s32 %s20, %s27
    %p29 = scmp.eq.s32.totalorder %s28, 0
    %s31 = sadd.s32 %s30, 1
    %s32 = scalar_select %p29, %s30, %s31
    %p35 = pneg %p29
    %p36 = scmp.eq.s32.totalorder %s20, 1
    %p37 = por %p35, %p36
    %p38 = scmp.ne.s32.totalorder %s30, %s33
    %p39 = scmp.eq.s32.totalorder %s20, 0
    %p40 = por %p38, %p39
    %p41 = scmp.ne.s32.totalorder %s30, %s33
    %p42 = scmp.eq.s32.totalorder %s25, 1
    %p43 = por %p41, %p42
    %p44 = scmp.ne.s32.totalorder %s33, %s34
    %p45 = scmp.eq.s32.totalorder %s25, 0
    %p46 = por %p44, %p45
    %p47 = scmp.ne.s32.totalorder %s33, %s34
    %p48 = scmp.eq.s32.totalorder %s26, 1
    %p49 = por %p47, %p48
    %p51 = scmp.ne.s32.totalorder %s34, %s50
    %p52 = scmp.eq.s32.totalorder %s26, 0
    %p53 = por %p51, %p52
    %s54 = ssub.s32 %s20, %s27
    %p55 = scmp.eq.s32.totalorder %s54, 0
    %s57 = sadd.s32 %s56, 1
    %s58 = scalar_select %p55, %s56, %s57
    %p61 = pneg %p55
    %p62 = scmp.eq.s32.totalorder %s20, 1
    %p63 = por %p61, %p62
    %p64 = scmp.ne.s32.totalorder %s56, %s59
    %p65 = scmp.eq.s32.totalorder %s20, 0
    %p66 = por %p64, %p65
    %p67 = scmp.ne.s32.totalorder %s56, %s59
    %p68 = scmp.eq.s32.totalorder %s25, 1
    %p69 = por %p67, %p68
    %p70 = scmp.ne.s32.totalorder %s59, %s60
    %p71 = scmp.eq.s32.totalorder %s25, 0
    %p72 = por %p70, %p71
    %p73 = scmp.ne.s32.totalorder %s59, %s60
    %p74 = scmp.eq.s32.totalorder %s26, 1
    %p75 = por %p73, %p74
    %p77 = scmp.ne.s32.totalorder %s60, %s76
    %p78 = scmp.eq.s32.totalorder %s26, 0
    %p79 = por %p77, %p78
    %s81 = sadd.s32 %s80, 1
    %p84 = scmp.eq.s32.totalorder %s20, 1
    %p85 = scmp.ne.s32.totalorder %s80, %s82
    %p86 = scmp.eq.s32.totalorder %s20, 0
    %p87 = por %p85, %p86
    %p88 = scmp.ne.s32.totalorder %s80, %s82
    %p89 = scmp.eq.s32.totalorder %s25, 1
    %p90 = por %p88, %p89
    %p91 = scmp.ne.s32.totalorder %s82, %s83
    %p92 = scmp.eq.s32.totalorder %s25, 0
    %p93 = por %p91, %p92
    %p94 = scmp.ne.s32.totalorder %s82, %s83
    %p95 = scmp.eq.s32.totalorder %s26, 1
    %p96 = por %p94, %p95
    %p98 = scmp.ne.s32.totalorder %s83, %s97
    %p99 = scmp.eq.s32.totalorder %s26, 0
    %p100 = por %p98, %p99
    %s102 = sadd.s32 %s101, 1
    %p105 = scmp.eq.s32.totalorder %s20, 1
    %p106 = scmp.ne.s32.totalorder %s101, %s103
    %p107 = scmp.eq.s32.totalorder %s20, 0
    %p108 = por %p106, %p107
    %p109 = scmp.ne.s32.totalorder %s101, %s103
    %p110 = scmp.eq.s32.totalorder %s25, 1
    %p111 = por %p109, %p110
    %p112 = scmp.ne.s32.totalorder %s103, %s104
    %p113 = scmp.eq.s32.totalorder %s25, 0
    %p114 = por %p112, %p113
    %p115 = scmp.ne.s32.totalorder %s103, %s104
    %p116 = scmp.eq.s32.totalorder %s26, 1
    %p117 = por %p115, %p116
    %p119 = scmp.ne.s32.totalorder %s104, %s118
    %p120 = scmp.eq.s32.totalorder %s26, 0
    %p121 = por %p119, %p120
    %s123 = sadd.s32 %s122, 1
    %p126 = scmp.eq.s32.totalorder %s20, 1
    %p127 = scmp.ne.s32.totalorder %s122, %s124
    %p128 = scmp.eq.s32.totalorder %s20, 0
    %p129 = por %p127, %p128
    %p130 = scmp.ne.s32.totalorder %s122, %s124
    %p131 = scmp.eq.s32.totalorder %s25, 1
    %p132 = por %p130, %p131
    %p133 = scmp.ne.s32.totalorder %s124, %s125
    %p134 = scmp.eq.s32.totalorder %s25, 0
    %p135 = por %p133, %p134
    %p136 = scmp.ne.s32.totalorder %s124, %s125
    %p137 = scmp.eq.s32.totalorder %s26, 1
    %p138 = por %p136, %p137
    %p140 = scmp.ne.s32.totalorder %s125, %s139
    %p141 = scmp.eq.s32.totalorder %s26, 0
    %p142 = por %p140, %p141
    %s144 = sadd.s32 %s143, 1
    %p147 = scmp.eq.s32.totalorder %s20, 1
    %p148 = scmp.ne.s32.totalorder %s143, %s145
    %p149 = scmp.eq.s32.totalorder %s20, 0
    %p150 = por %p148, %p149
    %p151 = scmp.ne.s32.totalorder %s143, %s145
    %p152 = scmp.eq.s32.totalorder %s25, 1
    %p153 = por %p151, %p152
    %p154 = scmp.ne.s32.totalorder %s145, %s146
    %p155 = scmp.eq.s32.totalorder %s25, 0
    %p156 = por %p154, %p155
    %p157 = scmp.ne.s32.totalorder %s145, %s146
    %p158 = scmp.eq.s32.totalorder %s26, 1
    %p159 = por %p157, %p158
    %p161 = scmp.ne.s32.totalorder %s146, %s160
    %p162 = scmp.eq.s32.totalorder %s26, 0
    %p163 = por %p161, %p162
    %s165 = sadd.s32 %s164, 1
    %p168 = scmp.eq.s32.totalorder %s20, 1
    %p169 = scmp.ne.s32.totalorder %s164, %s166
    %p170 = scmp.eq.s32.totalorder %s20, 0
    %p171 = por %p169, %p170
    %p172 = scmp.ne.s32.totalorder %s164, %s166
    %p173 = scmp.eq.s32.totalorder %s25, 1
    %p174 = por %p172, %p173
    %p175 = scmp.ne.s32.totalorder %s166, %s167
    %p176 = scmp.eq.s32.totalorder %s25, 0
    %p177 = por %p175, %p176
    %p178 = scmp.ne.s32.totalorder %s166, %s167
    %p179 = scmp.eq.s32.totalorder %s26, 1
    %p180 = por %p178, %p179
    %p182 = scmp.ne.s32.totalorder %s167, %s181
    %p183 = scmp.eq.s32.totalorder %s26, 0
    %p184 = por %p182, %p183
    %s186 = sadd.s32 %s185, 1
    %p189 = scmp.eq.s32.totalorder %s20, 1
    %p190 = scmp.ne.s32.totalorder %s185, %s187
    %p191 = scmp.eq.s32.totalorder %s20, 0
    %p192 = por %p190, %p191
    %p193 = scmp.ne.s32.totalorder %s185, %s187
    %p194 = scmp.eq.s32.totalorder %s25, 1
    %p195 = por %p193, %p194
    %p196 = scmp.ne.s32.totalorder %s187, %s188
    %p197 = scmp.eq.s32.totalorder %s25, 0
    %p198 = por %p196, %p197
    %p199 = scmp.ne.s32.totalorder %s187, %s188
    %p200 = scmp.eq.s32.totalorder %s26, 1
    %p201 = por %p199, %p200
    %p203 = scmp.ne.s32.totalorder %s188, %s202
    %p204 = scmp.eq.s32.totalorder %s26, 0
    %p205 = por %p203, %p204
    %s207 = sadd.s32 %s206, 1
    %p210 = scmp.eq.s32.totalorder %s20, 1
    %p211 = scmp.ne.s32.totalorder %s206, %s208
    %p212 = scmp.eq.s32.totalorder %s20, 0
    %p213 = por %p211, %p212
    %p214 = scmp.ne.s32.totalorder %s206, %s208
    %p215 = scmp.eq.s32.totalorder %s25, 1
    %p216 = por %p214, %p215
    %p217 = scmp.ne.s32.totalorder %s208, %s209
    %p218 = scmp.eq.s32.totalorder %s25, 0
    %p219 = por %p217, %p218
    %p220 = scmp.ne.s32.totalorder %s208, %s209
    %p221 = scmp.eq.s32.totalorder %s26, 1
    %p222 = por %p220, %p221
    %p224 = scmp.ne.s32.totalorder %s209, %s223
    %p225 = scmp.eq.s32.totalorder %s26, 0
    %p226 = por %p224, %p225
    %s228 = sadd.s32 %s227, 1
    %p231 = scmp.eq.s32.totalorder %s20, 1
    %p232 = scmp.ne.s32.totalorder %s227, %s229
    %p233 = scmp.eq.s32.totalorder %s20, 0
    %p234 = por %p232, %p233
    %p235 = scmp.ne.s32.totalorder %s227, %s229
    %p236 = scmp.eq.s32.totalorder %s25, 1
    %p237 = por %p235, %p236
    %p238 = scmp.ne.s32.totalorder %s229, %s230
    %p239 = scmp.eq.s32.totalorder %s25, 0
    %p240 = por %p238, %p239
    %p241 = scmp.ne.s32.totalorder %s229, %s230
    %p242 = scmp.eq.s32.totalorder %s26, 1
    %p243 = por %p241, %p242
    %p245 = scmp.ne.s32.totalorder %s230, %s244
    %p246 = scmp.eq.s32.totalorder %s26, 0
    %p247 = por %p245, %p246
    %s249 = sadd.s32 %s248, 1
    %p252 = scmp.eq.s32.totalorder %s20, 1
    %p253 = scmp.ne.s32.totalorder %s248, %s250
    %p254 = scmp.eq.s32.totalorder %s20, 0
    %p255 = por %p253, %p254
    %p256 = scmp.ne.s32.totalorder %s248, %s250
    %p257 = scmp.eq.s32.totalorder %s25, 1
    %p258 = por %p256, %p257
    %p259 = scmp.ne.s32.totalorder %s250, %s251
    %p260 = scmp.eq.s32.totalorder %s25, 0
    %p261 = por %p259, %p260
    %p262 = scmp.ne.s32.totalorder %s250, %s251
    %p263 = scmp.eq.s32.totalorder %s26, 1
    %p264 = por %p262, %p263
    %p266 = scmp.ne.s32.totalorder %s251, %s265
    %p267 = scmp.eq.s32.totalorder %s26, 0
    %p268 = por %p266, %p267
    %s270 = sadd.s32 %s269, 1
    %p273 = scmp.eq.s32.totalorder %s20, 1
    %p274 = scmp.ne.s32.totalorder %s269, %s271
    %p275 = scmp.eq.s32.totalorder %s20, 0
    %p276 = por %p274, %p275
    %p277 = scmp.ne.s32.totalorder %s269, %s271
    %p278 = scmp.eq.s32.totalorder %s25, 1
    %p279 = por %p277, %p278
    %p280 = scmp.ne.s32.totalorder %s271, %s272
    %p281 = scmp.eq.s32.totalorder %s25, 0
    %p282 = por %p280, %p281
    %p283 = scmp.ne.s32.totalorder %s271, %s272
    %p284 = scmp.eq.s32.totalorder %s26, 1
    %p285 = por %p283, %p284
    %p287 = scmp.ne.s32.totalorder %s272, %s286
    %p288 = scmp.eq.s32.totalorder %s26, 0
    %p289 = por %p287, %p288
    %s291 = sadd.s32 %s290, 1
    %p294 = scmp.eq.s32.totalorder %s20, 1
    %p295 = scmp.ne.s32.totalorder %s290, %s292
    %p296 = scmp.eq.s32.totalorder %s20, 0
    %p297 = por %p295, %p296
    %p298 = scmp.ne.s32.totalorder %s290, %s292
    %p299 = scmp.eq.s32.totalorder %s25, 1
    %p300 = por %p298, %p299
    %p301 = scmp.ne.s32.totalorder %s292, %s293
    %p302 = scmp.eq.s32.totalorder %s25, 0
    %p303 = por %p301, %p302
    %p304 = scmp.ne.s32.totalorder %s292, %s293
    %p305 = scmp.eq.s32.totalorder %s26, 1
    %p306 = por %p304, %p305
    %p308 = scmp.ne.s32.totalorder %s293, %s307
    %p309 = scmp.eq.s32.totalorder %s26, 0
    %p310 = por %p308, %p309
    %s312 = sadd.s32 %s311, 1
    %p315 = scmp.eq.s32.totalorder %s20, 1
    %p316 = scmp.ne.s32.totalorder %s311, %s313
    %p317 = scmp.eq.s32.totalorder %s20, 0
    %p318 = por %p316, %p317
    %p319 = scmp.ne.s32.totalorder %s311, %s313
    %p320 = scmp.eq.s32.totalorder %s25, 1
    %p321 = por %p319, %p320
    %p322 = scmp.ne.s32.totalorder %s313, %s314
    %p323 = scmp.eq.s32.totalorder %s25, 0
    %p324 = por %p322, %p323
    %p325 = scmp.ne.s32.totalorder %s313, %s314
    %p326 = scmp.eq.s32.totalorder %s26, 1
    %p327 = por %p325, %p326
    %p329 = scmp.ne.s32.totalorder %s314, %s328
    %p330 = scmp.eq.s32.totalorder %s26, 0
    %p331 = por %p329, %p330
    %s332 = ssub.s32 %s20, %s27
    %p333 = scmp.eq.s32.totalorder %s332, 0
    %s335 = sadd.s32 %s334, 1
    %s336 = scalar_select %p333, %s334, %s335
    %p339 = pneg %p333
    %p340 = scmp.eq.s32.totalorder %s20, 1
    %p341 = por %p339, %p340
    %p342 = scmp.ne.s32.totalorder %s334, %s337
    %p343 = scmp.eq.s32.totalorder %s20, 0
    %p344 = por %p342, %p343
    %p345 = scmp.ne.s32.totalorder %s334, %s337
    %p346 = scmp.eq.s32.totalorder %s25, 1
    %p347 = por %p345, %p346
    %p348 = scmp.ne.s32.totalorder %s337, %s338
    %p349 = scmp.eq.s32.totalorder %s25, 0
    %p350 = por %p348, %p349
    %p351 = scmp.ne.s32.totalorder %s337, %s338
    %p352 = scmp.eq.s32.totalorder %s26, 1
    %p353 = por %p351, %p352
    %p355 = scmp.ne.s32.totalorder %s338, %s354
    %p356 = scmp.eq.s32.totalorder %s26, 0
    %p357 = por %p355, %p356
    %p358 = scmp.le.s32.totalorder 1, %s20
    %p359 = scmp.lt.s32.totalorder %s20, 3
    %p360 = pnand %p358, %p359
    %p361 = pneg %p360
    // Predicated region
    $region9: #{risk_analyzer_forward.4} parent=5 // pred_check
      _
    $region10: #{risk_analyzer_forward.4} parent=5 // pred_check_branch
      %363 = sbr.rel (%p360) target = $region12
    $region11: #{risk_analyzer_forward.4} parent=5 // pred_region
      %s364 = ssub.s32 %s20, 1
      // Predicated region
      $region13: #{risk_analyzer_forward.4} parent=11 // pred_check
        %p365 = pneg %p93
      $region14: #{risk_analyzer_forward.4} parent=11 // pred_check_branch
        %367 = sbr.rel (%p365) target = $region16
      $region15: #{risk_analyzer_forward.4} parent=11 // pred_region
        _
      $region16: #{risk_analyzer_forward.4} parent=11 // pred_fallthru
        _
      // Predicated region
      $region17: #{risk_analyzer_forward.4} parent=11 // pred_check
        %p368 = pneg %p114
      $region18: #{risk_analyzer_forward.4} parent=11 // pred_check_branch
        %370 = sbr.rel (%p368) target = $region20
      $region19: #{risk_analyzer_forward.4} parent=11 // pred_region
        _
      $region20: #{risk_analyzer_forward.4} parent=11 // pred_fallthru
        _
      // Predicated region
      $region21: #{risk_analyzer_forward.4} parent=11 // pred_check
        %p371 = pneg %p135
      $region22: #{risk_analyzer_forward.4} parent=11 // pred_check_branch
        %373 = sbr.rel (%p371) target = $region24
      $region23: #{risk_analyzer_forward.4} parent=11 // pred_region
        _
      $region24: #{risk_analyzer_forward.4} parent=11 // pred_fallthru
        _
      // Predicated region
      $region25: #{risk_analyzer_forward.4} parent=11 // pred_check
        %p374 = pneg %p156
      $region26: #{risk_analyzer_forward.4} parent=11 // pred_check_branch
        %376 = sbr.rel (%p374) target = $region28
      $region27: #{risk_analyzer_forward.4} parent=11 // pred_region
        _
      $region28: #{risk_analyzer_forward.4} parent=11 // pred_fallthru
        _
      // Predicated region
      $region29: #{risk_analyzer_forward.4} parent=11 // pred_check
        %p377 = pneg %p177
      $region30: #{risk_analyzer_forward.4} parent=11 // pred_check_branch
        %379 = sbr.rel (%p377) target = $region32
      $region31: #{risk_analyzer_forward.4} parent=11 // pred_region
        _
      $region32: #{risk_analyzer_forward.4} parent=11 // pred_fallthru
        _
      // Predicated region
      $region33: #{risk_analyzer_forward.4} parent=11 // pred_check
        %p380 = pneg %p198
      $region34: #{risk_analyzer_forward.4} parent=11 // pred_check_branch
        %382 = sbr.rel (%p380) target = $region36
      $region35: #{risk_analyzer_forward.4} parent=11 // pred_region
        _
      $region36: #{risk_analyzer_forward.4} parent=11 // pred_fallthru
        _
      // Predicated region
      $region37: #{risk_analyzer_forward.4} parent=11 // pred_check
        %p383 = pneg %p219
      $region38: #{risk_analyzer_forward.4} parent=11 // pred_check_branch
        %385 = sbr.rel (%p383) target = $region40
      $region39: #{risk_analyzer_forward.4} parent=11 // pred_region
        _
      $region40: #{risk_analyzer_forward.4} parent=11 // pred_fallthru
        _
      // Predicated region
      $region41: #{risk_analyzer_forward.4} parent=11 // pred_check
        %p386 = pneg %p240
      $region42: #{risk_analyzer_forward.4} parent=11 // pred_check_branch
        %388 = sbr.rel (%p386) target = $region44
      $region43: #{risk_analyzer_forward.4} parent=11 // pred_region
        _
      $region44: #{risk_analyzer_forward.4} parent=11 // pred_fallthru
        _
      // Predicated region
      $region45: #{risk_analyzer_forward.4} parent=11 // pred_check
        %p389 = pneg %p261
      $region46: #{risk_analyzer_forward.4} parent=11 // pred_check_branch
        %391 = sbr.rel (%p389) target = $region48
      $region47: #{risk_analyzer_forward.4} parent=11 // pred_region
        _
      $region48: #{risk_analyzer_forward.4} parent=11 // pred_fallthru
        _
      // Predicated region
      $region49: #{risk_analyzer_forward.4} parent=11 // pred_check
        %p392 = pneg %p282
      $region50: #{risk_analyzer_forward.4} parent=11 // pred_check_branch
        %394 = sbr.rel (%p392) target = $region52
      $region51: #{risk_analyzer_forward.4} parent=11 // pred_region
        _
      $region52: #{risk_analyzer_forward.4} parent=11 // pred_fallthru
        _
      // Predicated region
      $region53: #{risk_analyzer_forward.4} parent=11 // pred_check
        %p395 = pneg %p303
      $region54: #{risk_analyzer_forward.4} parent=11 // pred_check_branch
        %397 = sbr.rel (%p395) target = $region56
      $region55: #{risk_analyzer_forward.4} parent=11 // pred_region
        _
      $region56: #{risk_analyzer_forward.4} parent=11 // pred_fallthru
        _
      // Predicated region
      $region57: #{risk_analyzer_forward.4} parent=11 // pred_check
        %p398 = pneg %p324
      $region58: #{risk_analyzer_forward.4} parent=11 // pred_check_branch
        %400 = sbr.rel (%p398) target = $region60
      $region59: #{risk_analyzer_forward.4} parent=11 // pred_region
        _
      $region60: #{risk_analyzer_forward.4} parent=11 // pred_fallthru
        _
    $region12: #{risk_analyzer_forward.4} parent=5 // pred_fallthru
      _
    %p401 = scmp.lt.s32.totalorder %s20, 2
    // Predicated region
    $region61: #{risk_analyzer_forward.4} parent=5 // pred_check
      %p402 = pneg %p401
    $region62: #{risk_analyzer_forward.4} parent=5 // pred_check_branch
      %404 = sbr.rel (%p402) target = $region64
    $region63: #{risk_analyzer_forward.4} parent=5 // pred_region
      // Predicated region
      $region65: #{risk_analyzer_forward.4} parent=63 // pred_check
        %p405 = pneg %p40
      $region66: #{risk_analyzer_forward.4} parent=63 // pred_check_branch
        %407 = sbr.rel (%p405) target = $region68
      $region67: #{risk_analyzer_forward.4} parent=63 // pred_region
        %p408 = scmp.lt.s32.totalorder %s20, 1
        %s409 = scalar_select %p408, %s20, 1
        %s410 = smul.addr %s409, 8
        %s411 = scalar_lea.vmem %s0, %s410
      $region68: #{risk_analyzer_forward.4} parent=63 // pred_fallthru
        _
      // Predicated region
      $region69: #{risk_analyzer_forward.4} parent=63 // pred_check
        %p412 = pneg %p66
      $region70: #{risk_analyzer_forward.4} parent=63 // pred_check_branch
        %414 = sbr.rel (%p412) target = $region72
      $region71: #{risk_analyzer_forward.4} parent=63 // pred_region
        %p415 = scmp.lt.s32.totalorder %s20, 1
        %s416 = scalar_select %p415, %s20, 1
        %s417 = scalar_lea.vmem %s1, %s416
      $region72: #{risk_analyzer_forward.4} parent=63 // pred_fallthru
        _
    $region64: #{risk_analyzer_forward.4} parent=5 // pred_fallthru
      _
    %p418 = scmp.le.s32.totalorder 1, %s20
    %p419 = scmp.lt.s32.totalorder %s20, 3
    %p420 = pnand %p418, %p419
    %p421 = pneg %p420
    // Predicated region
    $region73: #{risk_analyzer_forward.4} parent=5 // pred_check
      _
    $region74: #{risk_analyzer_forward.4} parent=5 // pred_check_branch
      %423 = sbr.rel (%p420) target = $region76
    $region75: #{risk_analyzer_forward.4} parent=5 // pred_region
      %s424 = ssub.s32 %s20, 1
      %p425 = scmp.lt.s32.totalorder %s25, 1
      %s426 = scalar_select %p425, %s25, 1
      %s427 = smul.addr %s426, 8
      %s428 = scalar_lea.vmem %s0, %s427
      %p429 = pneg %p46
      %p430 = pneg %p43
      %p431 = scmp.lt.s32.totalorder %s25, 1
      %s432 = scalar_select %p431, %s25, 1
      %s433 = scalar_lea.vmem %s1, %s432
      %p434 = pneg %p72
      %p435 = pneg %p69
      %p436 = pneg %p93
      %p437 = pneg %p90
      %p438 = pneg %p114
      %p439 = pneg %p111
      %p440 = pneg %p135
      %p441 = pneg %p132
      %p442 = pneg %p156
      %p443 = pneg %p153
      %p444 = pneg %p177
      %p445 = pneg %p174
      %p446 = pneg %p198
      %p447 = pneg %p195
      %p448 = pneg %p219
      %p449 = pneg %p216
      %p450 = pneg %p240
      %p451 = pneg %p237
      %p452 = pneg %p261
      %p453 = pneg %p258
      %p454 = pneg %p282
      %p455 = pneg %p279
      %p456 = pneg %p303
      %p457 = pneg %p300
      %p458 = pneg %p324
      %p459 = pneg %p321
      %p460 = pneg %p350
      %p461 = pneg %p347
      %p462 = scmp.lt.s32.totalorder %s25, 1
      %s463 = scalar_select %p462, %s25, 1
      %s464 = smul.addr %s463, 8
      %s465 = scalar_lea.vmem %s14, %s464
      %p466 = scmp.lt.s32.totalorder %s25, 1
      %s467 = scalar_select %p466, %s25, 1
      %s468 = smul.addr %s467, 8
      %s469 = scalar_lea.vmem %s0, %s468
      %p470 = scmp.lt.s32.totalorder %s25, 1
      %s471 = scalar_select %p470, %s25, 1
      %s472 = scalar_lea.vmem %s1, %s471
      %p473 = scmp.lt.s32.totalorder %s25, 1
      %s474 = scalar_select %p473, %s25, 1
      %s475 = smul.addr %s474, 8
      %s476 = scalar_lea.vmem %s14, %s475
      %v478 = vld [vmem:[%s469] sm:$0xff]
      %v479 = vpack.c.bf16 %v478, %v478
      %v480 = vld [vmem:[%s2] sm:$0xf]
      %v481 = vld [vmem:[%s2 + $0x4] sm:$0xf]
      %v482 = vld [vmem:[%s2 + $0x8] sm:$0xf]
      %v483 = vld [vmem:[%s2 + $0xc] sm:$0xf]
      %v484 = vld [vmem:[%s2 + $0x10] sm:$0xf]
      %v485 = vld [vmem:[%s2 + $0x14] sm:$0xf]
      %v486 = vld [vmem:[%s2 + $0x18] sm:$0xf]
      %v487 = vld [vmem:[%s2 + $0x1c] sm:$0xf]
      %v488 = vld [vmem:[%s2 + $0x20] sm:$0xf]
      %v489 = vld [vmem:[%s2 + $0x24] sm:$0xf]
      %v490 = vld [vmem:[%s2 + $0x28] sm:$0xf]
      %v491 = vld [vmem:[%s2 + $0x2c] sm:$0xf]
      %v492 = vld [vmem:[%s2 + $0x30] sm:$0xf]
      %v493 = vld [vmem:[%s2 + $0x34] sm:$0xf]
      %v494 = vld [vmem:[%s2 + $0x38] sm:$0xf]
      %v495 = vld [vmem:[%s2 + $0x3c] sm:$0xf]
      %v496 = vld [vmem:[%s2 + $0x40] sm:$0xf]
      %v497 = vld [vmem:[%s2 + $0x44] sm:$0xf]
      %v498 = vld [vmem:[%s2 + $0x48] sm:$0xf]
      %v499 = vld [vmem:[%s2 + $0x4c] sm:$0xf]
      %v500 = vld [vmem:[%s2 + $0x50] sm:$0xf]
      %v501 = vld [vmem:[%s2 + $0x54] sm:$0xf]
      %v502 = vld [vmem:[%s2 + $0x58] sm:$0xf]
      %v503 = vld [vmem:[%s2 + $0x5c] sm:$0xf]
      %v504 = vld [vmem:[%s2 + $0x60] sm:$0xf]
      %v505 = vld [vmem:[%s2 + $0x64] sm:$0xf]
      %v506 = vld [vmem:[%s2 + $0x68] sm:$0xf]
      %v507 = vld [vmem:[%s2 + $0x6c] sm:$0xf]
      %v508 = vld [vmem:[%s2 + $0x70] sm:$0xf]
      %v509 = vld [vmem:[%s2 + $0x74] sm:$0xf]
      %v510 = vld [vmem:[%s2 + $0x78] sm:$0xf]
      %v511 = vld [vmem:[%s2 + $0x7c] sm:$0xf]
      %v512 = vld [vmem:[%s2 + $0x80] sm:$0xf]
      %v513 = vld [vmem:[%s2 + $0x84] sm:$0xf]
      %v514 = vld [vmem:[%s2 + $0x88] sm:$0xf]
      %v515 = vld [vmem:[%s2 + $0x8c] sm:$0xf]
      %v516 = vld [vmem:[%s2 + $0x90] sm:$0xf]
      %v517 = vld [vmem:[%s2 + $0x94] sm:$0xf]
      %v518 = vld [vmem:[%s2 + $0x98] sm:$0xf]
      %v519 = vld [vmem:[%s2 + $0x9c] sm:$0xf]
      %v520 = vld [vmem:[%s2 + $0xa0] sm:$0xf]
      %v521 = vld [vmem:[%s2 + $0xa4] sm:$0xf]
      %v522 = vld [vmem:[%s2 + $0xa8] sm:$0xf]
      %v523 = vld [vmem:[%s2 + $0xac] sm:$0xf]
      %v524 = vld [vmem:[%s2 + $0xb0] sm:$0xf]
      %v525 = vld [vmem:[%s2 + $0xb4] sm:$0xf]
      %v526 = vld [vmem:[%s2 + $0xb8] sm:$0xf]
      %v527 = vld [vmem:[%s2 + $0xbc] sm:$0xf]
      %v528 = vld [vmem:[%s3] sm:$0x1]
      %v529 = vld [vmem:[%s3 + $0x1] sm:$0x1]
      %v530 = vld [vmem:[%s3 + $0x2] sm:$0x1]
      %v531 = vld [vmem:[%s3 + $0x3] sm:$0x1]
      %v532 = vld [vmem:[%s3 + $0x4] sm:$0x1]
      %v533 = vld [vmem:[%s3 + $0x5] sm:$0x1]
      %v534 = vld [vmem:[%s3 + $0x6] sm:$0x1]
      %v535 = vld [vmem:[%s3 + $0x7] sm:$0x1]
      %v536 = vld [vmem:[%s3 + $0x8] sm:$0x1]
      %v537 = vld [vmem:[%s3 + $0x9] sm:$0x1]
      %v538 = vld [vmem:[%s3 + $0xa] sm:$0x1]
      %v539 = vld [vmem:[%s3 + $0xb] sm:$0x1]
      %v552 = vperm.slane %v528, 0
      %v553 = vperm.slane %v529, 0
      %v554 = vperm.slane %v530, 0
      %v555 = vperm.slane %v531, 0
      %v556 = vperm.slane %v532, 0
      %v557 = vperm.slane %v533, 0
      %v558 = vperm.slane %v534, 0
      %v559 = vperm.slane %v535, 0
      %v560 = vperm.slane %v536, 0
      %v561 = vperm.slane %v537, 0
      %v562 = vperm.slane %v538, 0
      %v563 = vperm.slane %v539, 0
      %v580 = vunpack.c.l.b16 %v480
      %v581 = vunpack.c.l.b16 %v481
      %v582 = vunpack.c.l.b16 %v482
      %v583 = vunpack.c.l.b16 %v483
      %v584 = vpack.c.b16 %v581, %v580
      %v585 = vpack.c.b16 %v583, %v582
      %vm588 = vcmask 261120
      %v590 = vsel %vm588, %v479, 0
      %592 = vmatpush.bf16.msra.mxu0 0
      %593 = vmatpush.bf16.msra.mxu0 0
      %594 = vmatpush.bf16.msra.mxu0 0
      %595 = vmatpush.bf16.msra.mxu0 0
      %596 = vmatpush.bf16.msra.mxu0 0
      %597 = vmatpush.bf16.msra.mxu0 0
      %598 = vmatpush.bf16.msra.mxu0 %v585
      %599 = vmatpush.bf16.msra.mxu0 %v584
      %600 = vmatmul.bf16.gmra.mxu0 %v590
      %v601 = vpop.f32.mrf.mxu0
      %v602 = vadd.f32 %v552, %v601
      %v603 = vpop.f32.mrf.mxu0
      %604 = vdwg.mxu0
      %v609 = vunpack.c.l.b16 %v484
      %v610 = vunpack.c.l.b16 %v485
      %v611 = vunpack.c.l.b16 %v486
      %v612 = vunpack.c.l.b16 %v487
      %v613 = vpack.c.b16 %v610, %v609
      %v614 = vpack.c.b16 %v612, %v611
      %617 = vmatpush.bf16.msra.mxu0 0
      %618 = vmatpush.bf16.msra.mxu0 0
      %619 = vmatpush.bf16.msra.mxu0 0
      %620 = vmatpush.bf16.msra.mxu0 0
      %621 = vmatpush.bf16.msra.mxu0 0
      %622 = vmatpush.bf16.msra.mxu0 0
      %623 = vmatpush.bf16.msra.mxu0 %v614
      %624 = vmatpush.bf16.msra.mxu0 %v613
      %625 = vmatmul.bf16.gmra.mxu0 %v590
      %v626 = vpop.f32.mrf.mxu0
      %v627 = vadd.f32 %v553, %v626
      %v628 = vpop.f32.mrf.mxu0
      %629 = vdwg.mxu0
      %v634 = vunpack.c.l.b16 %v488
      %v635 = vunpack.c.l.b16 %v489
      %v636 = vunpack.c.l.b16 %v490
      %v637 = vunpack.c.l.b16 %v491
      %v638 = vpack.c.b16 %v635, %v634
      %v639 = vpack.c.b16 %v637, %v636
      %642 = vmatpush.bf16.msra.mxu0 0
      %643 = vmatpush.bf16.msra.mxu0 0
      %644 = vmatpush.bf16.msra.mxu0 0
      %645 = vmatpush.bf16.msra.mxu0 0
      %646 = vmatpush.bf16.msra.mxu0 0
      %647 = vmatpush.bf16.msra.mxu0 0
      %648 = vmatpush.bf16.msra.mxu0 %v639
      %649 = vmatpush.bf16.msra.mxu0 %v638
      %650 = vmatmul.bf16.gmra.mxu0 %v590
      %v651 = vpop.f32.mrf.mxu0
      %v652 = vadd.f32 %v554, %v651
      %v653 = vpop.f32.mrf.mxu0
      %654 = vdwg.mxu0
      %v659 = vunpack.c.l.b16 %v492
      %v660 = vunpack.c.l.b16 %v493
      %v661 = vunpack.c.l.b16 %v494
      %v662 = vunpack.c.l.b16 %v495
      %v663 = vpack.c.b16 %v660, %v659
      %v664 = vpack.c.b16 %v662, %v661
      %667 = vmatpush.bf16.msra.mxu0 0
      %668 = vmatpush.bf16.msra.mxu0 0
      %669 = vmatpush.bf16.msra.mxu0 0
      %670 = vmatpush.bf16.msra.mxu0 0
      %671 = vmatpush.bf16.msra.mxu0 0
      %672 = vmatpush.bf16.msra.mxu0 0
      %673 = vmatpush.bf16.msra.mxu0 %v664
      %674 = vmatpush.bf16.msra.mxu0 %v663
      %675 = vmatmul.bf16.gmra.mxu0 %v590
      %v676 = vpop.f32.mrf.mxu0
      %v677 = vadd.f32 %v555, %v676
      %v678 = vpop.f32.mrf.mxu0
      %679 = vdwg.mxu0
      %v684 = vunpack.c.l.b16 %v496
      %v685 = vunpack.c.l.b16 %v497
      %v686 = vunpack.c.l.b16 %v498
      %v687 = vunpack.c.l.b16 %v499
      %v688 = vpack.c.b16 %v685, %v684
      %v689 = vpack.c.b16 %v687, %v686
      %692 = vmatpush.bf16.msra.mxu0 0
      %693 = vmatpush.bf16.msra.mxu0 0
      %694 = vmatpush.bf16.msra.mxu0 0
      %695 = vmatpush.bf16.msra.mxu0 0
      %696 = vmatpush.bf16.msra.mxu0 0
      %697 = vmatpush.bf16.msra.mxu0 0
      %698 = vmatpush.bf16.msra.mxu0 %v689
      %699 = vmatpush.bf16.msra.mxu0 %v688
      %700 = vmatmul.bf16.gmra.mxu0 %v590
      %v701 = vpop.f32.mrf.mxu0
      %v702 = vadd.f32 %v556, %v701
      %v703 = vpop.f32.mrf.mxu0
      %704 = vdwg.mxu0
      %v709 = vunpack.c.l.b16 %v500
      %v710 = vunpack.c.l.b16 %v501
      %v711 = vunpack.c.l.b16 %v502
      %v712 = vunpack.c.l.b16 %v503
      %v713 = vpack.c.b16 %v710, %v709
      %v714 = vpack.c.b16 %v712, %v711
      %717 = vmatpush.bf16.msra.mxu0 0
      %718 = vmatpush.bf16.msra.mxu0 0
      %719 = vmatpush.bf16.msra.mxu0 0
      %720 = vmatpush.bf16.msra.mxu0 0
      %721 = vmatpush.bf16.msra.mxu0 0
      %722 = vmatpush.bf16.msra.mxu0 0
      %723 = vmatpush.bf16.msra.mxu0 %v714
      %724 = vmatpush.bf16.msra.mxu0 %v713
      %725 = vmatmul.bf16.gmra.mxu0 %v590
      %v726 = vpop.f32.mrf.mxu0
      %v727 = vadd.f32 %v557, %v726
      %v728 = vpop.f32.mrf.mxu0
      %729 = vdwg.mxu0
      %v734 = vunpack.c.l.b16 %v504
      %v735 = vunpack.c.l.b16 %v505
      %v736 = vunpack.c.l.b16 %v506
      %v737 = vunpack.c.l.b16 %v507
      %v738 = vpack.c.b16 %v735, %v734
      %v739 = vpack.c.b16 %v737, %v736
      %742 = vmatpush.bf16.msra.mxu0 0
      %743 = vmatpush.bf16.msra.mxu0 0
      %744 = vmatpush.bf16.msra.mxu0 0
      %745 = vmatpush.bf16.msra.mxu0 0
      %746 = vmatpush.bf16.msra.mxu0 0
      %747 = vmatpush.bf16.msra.mxu0 0
      %748 = vmatpush.bf16.msra.mxu0 %v739
      %749 = vmatpush.bf16.msra.mxu0 %v738
      %750 = vmatmul.bf16.gmra.mxu0 %v590
      %v751 = vpop.f32.mrf.mxu0
      %v752 = vadd.f32 %v558, %v751
      %v753 = vpop.f32.mrf.mxu0
      %754 = vdwg.mxu0
      %v759 = vunpack.c.l.b16 %v508
      %v760 = vunpack.c.l.b16 %v509
      %v761 = vunpack.c.l.b16 %v510
      %v762 = vunpack.c.l.b16 %v511
      %v763 = vpack.c.b16 %v760, %v759
      %v764 = vpack.c.b16 %v762, %v761
      %767 = vmatpush.bf16.msra.mxu0 0
      %768 = vmatpush.bf16.msra.mxu0 0
      %769 = vmatpush.bf16.msra.mxu0 0
      %770 = vmatpush.bf16.msra.mxu0 0
      %771 = vmatpush.bf16.msra.mxu0 0
      %772 = vmatpush.bf16.msra.mxu0 0
      %773 = vmatpush.bf16.msra.mxu0 %v764
      %774 = vmatpush.bf16.msra.mxu0 %v763
      %775 = vmatmul.bf16.gmra.mxu0 %v590
      %v776 = vpop.f32.mrf.mxu0
      %v777 = vadd.f32 %v559, %v776
      %v778 = vpop.f32.mrf.mxu0
      %779 = vdwg.mxu0
      %v784 = vunpack.c.l.b16 %v512
      %v785 = vunpack.c.l.b16 %v513
      %v786 = vunpack.c.l.b16 %v514
      %v787 = vunpack.c.l.b16 %v515
      %v788 = vpack.c.b16 %v785, %v784
      %v789 = vpack.c.b16 %v787, %v786
      %792 = vmatpush.bf16.msra.mxu0 0
      %793 = vmatpush.bf16.msra.mxu0 0
      %794 = vmatpush.bf16.msra.mxu0 0
      %795 = vmatpush.bf16.msra.mxu0 0
      %796 = vmatpush.bf16.msra.mxu0 0
      %797 = vmatpush.bf16.msra.mxu0 0
      %798 = vmatpush.bf16.msra.mxu0 %v789
      %799 = vmatpush.bf16.msra.mxu0 %v788
      %800 = vmatmul.bf16.gmra.mxu0 %v590
      %v801 = vpop.f32.mrf.mxu0
      %v802 = vadd.f32 %v560, %v801
      %v803 = vpop.f32.mrf.mxu0
      %804 = vdwg.mxu0
      %v809 = vunpack.c.l.b16 %v516
      %v810 = vunpack.c.l.b16 %v517
      %v811 = vunpack.c.l.b16 %v518
      %v812 = vunpack.c.l.b16 %v519
      %v813 = vpack.c.b16 %v810, %v809
      %v814 = vpack.c.b16 %v812, %v811
      %817 = vmatpush.bf16.msra.mxu0 0
      %818 = vmatpush.bf16.msra.mxu0 0
      %819 = vmatpush.bf16.msra.mxu0 0
      %820 = vmatpush.bf16.msra.mxu0 0
      %821 = vmatpush.bf16.msra.mxu0 0
      %822 = vmatpush.bf16.msra.mxu0 0
      %823 = vmatpush.bf16.msra.mxu0 %v814
      %824 = vmatpush.bf16.msra.mxu0 %v813
      %825 = vmatmul.bf16.gmra.mxu0 %v590
      %v826 = vpop.f32.mrf.mxu0
      %v827 = vadd.f32 %v561, %v826
      %v828 = vpop.f32.mrf.mxu0
      %829 = vdwg.mxu0
      %v834 = vunpack.c.l.b16 %v520
      %v835 = vunpack.c.l.b16 %v521
      %v836 = vunpack.c.l.b16 %v522
      %v837 = vunpack.c.l.b16 %v523
      %v838 = vpack.c.b16 %v835, %v834
      %v839 = vpack.c.b16 %v837, %v836
      %842 = vmatpush.bf16.msra.mxu0 0
      %843 = vmatpush.bf16.msra.mxu0 0
      %844 = vmatpush.bf16.msra.mxu0 0
      %845 = vmatpush.bf16.msra.mxu0 0
      %846 = vmatpush.bf16.msra.mxu0 0
      %847 = vmatpush.bf16.msra.mxu0 0
      %848 = vmatpush.bf16.msra.mxu0 %v839
      %849 = vmatpush.bf16.msra.mxu0 %v838
      %850 = vmatmul.bf16.gmra.mxu0 %v590
      %v851 = vpop.f32.mrf.mxu0
      %v852 = vadd.f32 %v562, %v851
      %v853 = vpop.f32.mrf.mxu0
      %854 = vdwg.mxu0
      %v859 = vunpack.c.l.b16 %v524
      %v860 = vunpack.c.l.b16 %v525
      %v861 = vunpack.c.l.b16 %v526
      %v862 = vunpack.c.l.b16 %v527
      %v863 = vpack.c.b16 %v860, %v859
      %v864 = vpack.c.b16 %v862, %v861
      %867 = vmatpush.bf16.msra.mxu0 0
      %868 = vmatpush.bf16.msra.mxu0 0
      %869 = vmatpush.bf16.msra.mxu0 0
      %870 = vmatpush.bf16.msra.mxu0 0
      %871 = vmatpush.bf16.msra.mxu0 0
      %872 = vmatpush.bf16.msra.mxu0 0
      %873 = vmatpush.bf16.msra.mxu0 %v864
      %874 = vmatpush.bf16.msra.mxu0 %v863
      %875 = vmatmul.bf16.gmra.mxu0 %v590
      %v876 = vpop.f32.mrf.mxu0
      %v877 = vadd.f32 %v563, %v876
      %v878 = vpop.f32.mrf.mxu0
      %879 = vdwg.mxu0
      %v880 = vpack.c.bf16 %v602, %v602
      %v881 = vpack.c.bf16 %v627, %v627
      %v882 = vpack.c.bf16 %v652, %v652
      %v883 = vpack.c.bf16 %v677, %v677
      %v884 = vpack.c.bf16 %v702, %v702
      %v885 = vpack.c.bf16 %v727, %v727
      %v886 = vpack.c.bf16 %v752, %v752
      %v887 = vpack.c.bf16 %v777, %v777
      %v888 = vpack.c.bf16 %v802, %v802
      %v889 = vpack.c.bf16 %v827, %v827
      %v890 = vpack.c.bf16 %v852, %v852
      %v891 = vpack.c.bf16 %v877, %v877
      %v892 = vld [vmem:[%s472] sm:$0x1]
      %v893 = vsub.f32 1.0, %v892
      %v894 = vmul.f32 %v893, -1e+09
      %v896 = vperm.slane %v894, 0
      %vm898 = vcmask 64512
      %v900 = vsel %vm898, %v880, 0
      %v903 = vsel %vm898, %v884, 0
      %905 = vmatpush.bf16.xpose.msra.mxu0 0
      %906 = vmatpush.bf16.xpose.msra.mxu0 0
      %907 = vmatpush.bf16.xpose.msra.mxu0 0
      %908 = vmatpush.bf16.xpose.msra.mxu0 0
      %909 = vmatpush.bf16.xpose.msra.mxu0 0
      %910 = vmatpush.bf16.xpose.msra.mxu0 0
      %911 = vmatpush.bf16.xpose.msra.mxu0 0
      %912 = vmatpush.bf16.xpose.msra.mxu0 %v903
      %913 = vmatmul.bf16.gmra.mxu0 %v900
      %v914 = vpop.f32.mrf.mxu0
      %v915 = vadd.f32 %v896, %v914
      %v916 = vpop.f32.mrf.mxu0
      %917 = vdwg.mxu0
      %v919 = vsel %vm898, %v881, 0
      %v922 = vsel %vm898, %v885, 0
      %924 = vmatpush.bf16.xpose.msra.mxu0 0
      %925 = vmatpush.bf16.xpose.msra.mxu0 0
      %926 = vmatpush.bf16.xpose.msra.mxu0 0
      %927 = vmatpush.bf16.xpose.msra.mxu0 0
      %928 = vmatpush.bf16.xpose.msra.mxu0 0
      %929 = vmatpush.bf16.xpose.msra.mxu0 0
      %930 = vmatpush.bf16.xpose.msra.mxu0 0
      %931 = vmatpush.bf16.xpose.msra.mxu0 %v922
      %932 = vmatmul.bf16.gmra.mxu0 %v919
      %v933 = vpop.f32.mrf.mxu0
      %v934 = vadd.f32 %v896, %v933
      %v935 = vpop.f32.mrf.mxu0
      %936 = vdwg.mxu0
      %v938 = vsel %vm898, %v882, 0
      %v941 = vsel %vm898, %v886, 0
      %943 = vmatpush.bf16.xpose.msra.mxu0 0
      %944 = vmatpush.bf16.xpose.msra.mxu0 0
      %945 = vmatpush.bf16.xpose.msra.mxu0 0
      %946 = vmatpush.bf16.xpose.msra.mxu0 0
      %947 = vmatpush.bf16.xpose.msra.mxu0 0
      %948 = vmatpush.bf16.xpose.msra.mxu0 0
      %949 = vmatpush.bf16.xpose.msra.mxu0 0
      %950 = vmatpush.bf16.xpose.msra.mxu0 %v941
      %951 = vmatmul.bf16.gmra.mxu0 %v938
      %v952 = vpop.f32.mrf.mxu0
      %v953 = vadd.f32 %v896, %v952
      %v954 = vpop.f32.mrf.mxu0
      %955 = vdwg.mxu0
      %v957 = vsel %vm898, %v883, 0
      %v960 = vsel %vm898, %v887, 0
      %962 = vmatpush.bf16.xpose.msra.mxu0 0
      %963 = vmatpush.bf16.xpose.msra.mxu0 0
      %964 = vmatpush.bf16.xpose.msra.mxu0 0
      %965 = vmatpush.bf16.xpose.msra.mxu0 0
      %966 = vmatpush.bf16.xpose.msra.mxu0 0
      %967 = vmatpush.bf16.xpose.msra.mxu0 0
      %968 = vmatpush.bf16.xpose.msra.mxu0 0
      %969 = vmatpush.bf16.xpose.msra.mxu0 %v960
      %970 = vmatmul.bf16.gmra.mxu0 %v957
      %v971 = vpop.f32.mrf.mxu0
      %v972 = vadd.f32 %v896, %v971
      %v973 = vpop.f32.mrf.mxu0
      %974 = vdwg.mxu0
      %v975 = vsel %vm898, %v915, -inf
      %976 = vmax.xlane.f32.xlu0 %v975
      %v977 = vpop.xlane.xlu0 %976
      %v978 = vsel %vm898, %v934, -inf
      %979 = vmax.xlane.f32.xlu0 %v978
      %v980 = vpop.xlane.xlu0 %979
      %v981 = vsel %vm898, %v953, -inf
      %982 = vmax.xlane.f32.xlu0 %v981
      %v983 = vpop.xlane.xlu0 %982
      %v984 = vsel %vm898, %v972, -inf
      %985 = vmax.xlane.f32.xlu0 %v984
      %v986 = vpop.xlane.xlu0 %985
      %v987 = vsub.f32 %v915, %v977
      %v988 = vsub.f32 %v934, %v980
      %v989 = vsub.f32 %v953, %v983
      %v990 = vsub.f32 %v972, %v986
      %v991 = vmul.f32 %v987, 1.442695
      %v992 = vpow.pop %v991
      %v993 = vmul.f32 %v988, 1.442695
      %v994 = vpow.pop %v993
      %v995 = vmul.f32 %v989, 1.442695
      %v996 = vpow.pop %v995
      %v997 = vmul.f32 %v990, 1.442695
      %v998 = vpow.pop %v997
      %v999 = vsel %vm898, %v992, 0.0
      %1000 = vadd.xlane.f32.xlu0 %v999
      %v1001 = vpop.xlane.xlu0 %1000
      %v1002 = vsel %vm898, %v994, 0.0
      %1003 = vadd.xlane.f32.xlu0 %v1002
      %v1004 = vpop.xlane.xlu0 %1003
      %v1005 = vsel %vm898, %v996, 0.0
      %1006 = vadd.xlane.f32.xlu0 %v1005
      %v1007 = vpop.xlane.xlu0 %1006
      %v1008 = vsel %vm898, %v998, 0.0
      %1009 = vadd.xlane.f32.xlu0 %v1008
      %v1010 = vpop.xlane.xlu0 %1009
      %v1011 = vpack.c.bf16 %v992, %v992
      %v1012 = vpack.c.bf16 %v994, %v994
      %v1013 = vpack.c.bf16 %v996, %v996
      %v1014 = vpack.c.bf16 %v998, %v998
      %v1016 = vsel %vm898, %v1011, 0
      %vm1018 = vcmask 1043456
      %v1020 = vsel %vm1018, %v888, 0
      %1022 = vmatpush.bf16.msra.mxu0 0
      %1023 = vmatpush.bf16.msra.mxu0 0
      %1024 = vmatpush.bf16.msra.mxu0 0
      %1025 = vmatpush.bf16.msra.mxu0 0
      %1026 = vmatpush.bf16.msra.mxu0 0
      %1027 = vmatpush.bf16.msra.mxu0 0
      %1028 = vmatpush.bf16.msra.mxu0 0
      %1029 = vmatpush.bf16.msra.mxu0 %v1020
      %1030 = vmatmul.bf16.gmra.mxu0 %v1016
      %v1031 = vpop.f32.mrf.mxu0
      %v1032 = vadd.f32 0.0, %v1031
      %v1033 = vpop.f32.mrf.mxu0
      %1034 = vdwg.mxu0
      %v1036 = vsel %vm898, %v1012, 0
      %v1039 = vsel %vm1018, %v889, 0
      %1041 = vmatpush.bf16.msra.mxu0 0
      %1042 = vmatpush.bf16.msra.mxu0 0
      %1043 = vmatpush.bf16.msra.mxu0 0
      %1044 = vmatpush.bf16.msra.mxu0 0
      %1045 = vmatpush.bf16.msra.mxu0 0
      %1046 = vmatpush.bf16.msra.mxu0 0
      %1047 = vmatpush.bf16.msra.mxu0 0
      %1048 = vmatpush.bf16.msra.mxu0 %v1039
      %1049 = vmatmul.bf16.gmra.mxu0 %v1036
      %v1050 = vpop.f32.mrf.mxu0
      %v1051 = vadd.f32 0.0, %v1050
      %v1052 = vpop.f32.mrf.mxu0
      %1053 = vdwg.mxu0
      %v1055 = vsel %vm898, %v1013, 0
      %v1058 = vsel %vm1018, %v890, 0
      %1060 = vmatpush.bf16.msra.mxu0 0
      %1061 = vmatpush.bf16.msra.mxu0 0
      %1062 = vmatpush.bf16.msra.mxu0 0
      %1063 = vmatpush.bf16.msra.mxu0 0
      %1064 = vmatpush.bf16.msra.mxu0 0
      %1065 = vmatpush.bf16.msra.mxu0 0
      %1066 = vmatpush.bf16.msra.mxu0 0
      %1067 = vmatpush.bf16.msra.mxu0 %v1058
      %1068 = vmatmul.bf16.gmra.mxu0 %v1055
      %v1069 = vpop.f32.mrf.mxu0
      %v1070 = vadd.f32 0.0, %v1069
      %v1071 = vpop.f32.mrf.mxu0
      %1072 = vdwg.mxu0
      %v1074 = vsel %vm898, %v1014, 0
      %v1077 = vsel %vm1018, %v891, 0
      %1079 = vmatpush.bf16.msra.mxu0 0
      %1080 = vmatpush.bf16.msra.mxu0 0
      %1081 = vmatpush.bf16.msra.mxu0 0
      %1082 = vmatpush.bf16.msra.mxu0 0
      %1083 = vmatpush.bf16.msra.mxu0 0
      %1084 = vmatpush.bf16.msra.mxu0 0
      %1085 = vmatpush.bf16.msra.mxu0 0
      %1086 = vmatpush.bf16.msra.mxu0 %v1077
      %1087 = vmatmul.bf16.gmra.mxu0 %v1074
      %v1088 = vpop.f32.mrf.mxu0
      %v1089 = vadd.f32 0.0, %v1088
      %v1090 = vpop.f32.mrf.mxu0
      %1091 = vdwg.mxu0
      %v1092 = vrcp.pop %v1001
      %v1093 = vrcp.pop %v1004
      %v1094 = vrcp.pop %v1007
      %v1095 = vrcp.pop %v1010
      %v1096 = vmul.f32 %v1032, %v1092
      %v1097 = vmul.f32 %v1051, %v1093
      %v1098 = vmul.f32 %v1070, %v1094
      %v1099 = vmul.f32 %v1089, %v1095
      %v1100 = vpack.c.bf16 %v1096, %v1096
      %v1101 = vpack.c.bf16 %v1097, %v1097
      %v1102 = vpack.c.bf16 %v1098, %v1098
      %v1103 = vpack.c.bf16 %v1099, %v1099
      %v1104 = vld [vmem:[%s4] sm:$0xf]
      %v1105 = vld [vmem:[%s4 + $0x4] sm:$0xf]
      %v1106 = vld [vmem:[%s4 + $0x8] sm:$0xf]
      %v1107 = vld [vmem:[%s4 + $0xc] sm:$0xf]
      %v1109 = vsel %vm898, %v1100, 0
      %v1112 = vsel %vm1018, %v1104, 0
      %1114 = vmatpush.bf16.msra.mxu0 0
      %1115 = vmatpush.bf16.msra.mxu0 0
      %1116 = vmatpush.bf16.msra.mxu0 0
      %1117 = vmatpush.bf16.msra.mxu0 0
      %1118 = vmatpush.bf16.msra.mxu0 0
      %1119 = vmatpush.bf16.msra.mxu0 0
      %1120 = vmatpush.bf16.msra.mxu0 0
      %1121 = vmatpush.bf16.msra.mxu0 %v1112
      %1122 = vmatmul.bf16.gmra.mxu0 %v1109
      %v1123 = vpop.f32.mrf.mxu0
      %v1124 = vadd.f32 0.0, %v1123
      %v1125 = vpop.f32.mrf.mxu0
      %1126 = vdwg.mxu0
      %v1128 = vsel %vm898, %v1101, 0
      %v1131 = vsel %vm1018, %v1105, 0
      %1133 = vmatpush.bf16.msra.mxu0 0
      %1134 = vmatpush.bf16.msra.mxu0 0
      %1135 = vmatpush.bf16.msra.mxu0 0
      %1136 = vmatpush.bf16.msra.mxu0 0
      %1137 = vmatpush.bf16.msra.mxu0 0
      %1138 = vmatpush.bf16.msra.mxu0 0
      %1139 = vmatpush.bf16.msra.mxu0 0
      %1140 = vmatpush.bf16.msra.mxu0 %v1131
      %1141 = vmatmul.bf16.gmra.mxu0 %v1128
      %v1142 = vpop.f32.mrf.mxu0
      %v1143 = vadd.f32 0.0, %v1142
      %v1144 = vpop.f32.mrf.mxu0
      %1145 = vdwg.mxu0
      %v1147 = vsel %vm898, %v1102, 0
      %v1150 = vsel %vm1018, %v1106, 0
      %1152 = vmatpush.bf16.msra.mxu0 0
      %1153 = vmatpush.bf16.msra.mxu0 0
      %1154 = vmatpush.bf16.msra.mxu0 0
      %1155 = vmatpush.bf16.msra.mxu0 0
      %1156 = vmatpush.bf16.msra.mxu0 0
      %1157 = vmatpush.bf16.msra.mxu0 0
      %1158 = vmatpush.bf16.msra.mxu0 0
      %1159 = vmatpush.bf16.msra.mxu0 %v1150
      %1160 = vmatmul.bf16.gmra.mxu0 %v1147
      %v1161 = vpop.f32.mrf.mxu0
      %v1162 = vadd.f32 0.0, %v1161
      %v1163 = vpop.f32.mrf.mxu0
      %1164 = vdwg.mxu0
      %v1166 = vsel %vm898, %v1103, 0
      %v1169 = vsel %vm1018, %v1107, 0
      %1171 = vmatpush.bf16.msra.mxu0 0
      %1172 = vmatpush.bf16.msra.mxu0 0
      %1173 = vmatpush.bf16.msra.mxu0 0
      %1174 = vmatpush.bf16.msra.mxu0 0
      %1175 = vmatpush.bf16.msra.mxu0 0
      %1176 = vmatpush.bf16.msra.mxu0 0
      %1177 = vmatpush.bf16.msra.mxu0 0
      %1178 = vmatpush.bf16.msra.mxu0 %v1169
      %1179 = vmatmul.bf16.gmra.mxu0 %v1166
      %v1180 = vpop.f32.mrf.mxu0
      %v1181 = vadd.f32 0.0, %v1180
      %v1182 = vpop.f32.mrf.mxu0
      %1183 = vdwg.mxu0
      %v1184 = vsel %vm588, %v1124, 0.0
      %v1185 = vsel %vm588, %v1143, 0.0
      %v1186 = vadd.f32 %v1184, %v1185
      %v1187 = vsel %vm588, %v1162, 0.0
      %v1188 = vadd.f32 %v1186, %v1187
      %v1189 = vsel %vm588, %v1181, 0.0
      %v1190 = vadd.f32 %v1188, %v1189
      %v1191 = vld [vmem:[%s5] sm:$0x1]
      %v1193 = vperm.slane %v1191, 0
      %v1195 = vadd.f32 %v1190, %v1193
      %v1196 = vadd.f32 %v1195, %v478
      %v1197 = vld [vmem:[%s6] sm:$0x1]
      %v1198 = vld [vmem:[%s7] sm:$0x1]
      %v1199 = vsel %vm588, %v1196, 0.0
      %1200 = vadd.xlane.f32.xlu0 %v1199
      %v1201 = vpop.xlane.xlu0 %1200
      %v1202 = vrcp.pop 32.0
      %v1203 = vmul.f32 32.0, %v1202
      %v1204 = vsub.f32 1.0, %v1203
      %v1205 = vmul.f32 %v1202, %v1204
      %v1206 = vadd.f32 %v1202, %v1205
      %vm1207 = vweird.f32 %v1202
      %v1208 = vsel %vm1207, %v1202, %v1206
      %v1209 = vmul.f32 %v1201, %v1208
      %v1210 = vsub.f32 %v1196, %v1209
      %v1211 = vmul.f32 %v1210, %v1210
      %v1212 = vsel %vm588, %v1211, 0.0
      %1213 = vadd.xlane.f32.xlu0 %v1212
      %v1214 = vpop.xlane.xlu0 %1213
      %v1215 = vmul.f32 %v1214, %v1208
      %v1216 = vadd.f32 %v1215, 1e-12
      %v1217 = vrsqrt.pop %v1216
      %v1218 = vmul.f32 %v1217, %v1216
      %v1219 = vmul.f32 %v1218, %v1217
      %v1220 = vmul.f32 0.5, %v1219
      %v1221 = vsub.f32 1.5, %v1220
      %v1222 = vmul.f32 %v1217, %v1221
      %vm1223 = vweird.f32 %v1216
      %vm1224 = vweird.f32 %v1217
      %vm1225 = vmor %vm1223, %vm1224
      %v1226 = vsel %vm1225, %v1217, %v1222
      %v1227 = vmul.f32 %v1210, %v1226
      %v1229 = vperm.slane %v1197, 0
      %v1231 = vmul.f32 %v1227, %v1229
      %v1233 = vperm.slane %v1198, 0
      %v1235 = vadd.f32 %v1231, %v1233
      %v1236 = vpack.c.bf16 %v1235, %v1235
      %v1237 = vld [vmem:[%s8] sm:$0xf]
      %v1238 = vld [vmem:[%s8 + $0x4] sm:$0xf]
      %v1239 = vld [vmem:[%s8 + $0x8] sm:$0xf]
      %v1240 = vld [vmem:[%s8 + $0xc] sm:$0xf]
      %v1241 = vld [vmem:[%s9] sm:$0x1]
      %v1243 = vperm.slane %v1241, 0
      %v1249 = vunpack.c.l.b16 %v1237
      %v1250 = vunpack.c.l.b16 %v1238
      %v1251 = vunpack.c.l.b16 %v1239
      %v1252 = vunpack.c.l.b16 %v1240
      %v1253 = vpack.c.b16 %v1250, %v1249
      %v1254 = vpack.c.b16 %v1252, %v1251
      %v1258 = vsel %vm588, %v1236, 0
      %1260 = vmatpush.bf16.msra.mxu0 0
      %1261 = vmatpush.bf16.msra.mxu0 0
      %1262 = vmatpush.bf16.msra.mxu0 0
      %1263 = vmatpush.bf16.msra.mxu0 0
      %1264 = vmatpush.bf16.msra.mxu0 0
      %1265 = vmatpush.bf16.msra.mxu0 0
      %1266 = vmatpush.bf16.msra.mxu0 %v1254
      %1267 = vmatpush.bf16.msra.mxu0 %v1253
      %1268 = vmatmul.bf16.gmra.mxu0 %v1258
      %v1269 = vpop.f32.mrf.mxu0
      %v1270 = vadd.f32 %v1243, %v1269
      %v1271 = vpop.f32.mrf.mxu0
      %1272 = vdwg.mxu0
      %v1273 = vmul.f32 %v1270, 0.5
      %v1274 = vmul.f32 %v1270, 0.044715
      %v1275 = vmul.f32 %v1274, %v1270
      %v1276 = vmul.f32 %v1275, %v1270
      %v1277 = vadd.f32 %v1270, %v1276
      %v1278 = vmul.f32 %v1277, 0.7978846
      %v1279 = vtanh.pop %v1278
      %v1280 = vadd.f32 %v1279, 1.0
      %v1281 = vmul.f32 %v1273, %v1280
      %v1282 = vpack.c.bf16 %v1281, %v1281
      %v1283 = vld [vmem:[%s10] sm:$0xf]
      %v1284 = vld [vmem:[%s10 + $0x4] sm:$0xf]
      %v1285 = vld [vmem:[%s10 + $0x8] sm:$0xf]
      %v1286 = vld [vmem:[%s10 + $0xc] sm:$0xf]
      %v1287 = vld [vmem:[%s10 + $0x10] sm:$0xf]
      %v1288 = vld [vmem:[%s10 + $0x14] sm:$0xf]
      %v1289 = vld [vmem:[%s10 + $0x18] sm:$0xf]
      %v1290 = vld [vmem:[%s10 + $0x1c] sm:$0xf]
      %v1291 = vld [vmem:[%s11] sm:$0x1]
      %v1293 = vperm.slane %v1291, 0
      %v1303 = vunpack.c.l.b16 %v1283
      %v1304 = vunpack.c.l.b16 %v1284
      %v1305 = vunpack.c.l.b16 %v1285
      %v1306 = vunpack.c.l.b16 %v1286
      %v1307 = vunpack.c.l.b16 %v1287
      %v1308 = vunpack.c.l.b16 %v1288
      %v1309 = vunpack.c.l.b16 %v1289
      %v1310 = vunpack.c.l.b16 %v1290
      %v1311 = vpack.c.b16 %v1304, %v1303
      %v1312 = vpack.c.b16 %v1306, %v1305
      %v1313 = vpack.c.b16 %v1308, %v1307
      %v1314 = vpack.c.b16 %v1310, %v1309
      %vm1319 = vcmask 523264
      %v1321 = vsel %vm1319, %v1282, 0
      %1323 = vmatpush.bf16.msra.mxu0 0
      %1324 = vmatpush.bf16.msra.mxu0 0
      %1325 = vmatpush.bf16.msra.mxu0 0
      %1326 = vmatpush.bf16.msra.mxu0 0
      %1327 = vmatpush.bf16.msra.mxu0 %v1314
      %1328 = vmatpush.bf16.msra.mxu0 %v1313
      %1329 = vmatpush.bf16.msra.mxu0 %v1312
      %1330 = vmatpush.bf16.msra.mxu0 %v1311
      %1331 = vmatmul.bf16.gmra.mxu0 %v1321
      %v1332 = vpop.f32.mrf.mxu0
      %v1333 = vadd.f32 %v1293, %v1332
      %v1334 = vpop.f32.mrf.mxu0
      %1335 = vdwg.mxu0
      %v1336 = vadd.f32 %v1333, %v1235
      %v1337 = vld [vmem:[%s12] sm:$0x1]
      %v1338 = vld [vmem:[%s13] sm:$0x1]
      %v1339 = vsel %vm588, %v1336, 0.0
      %1340 = vadd.xlane.f32.xlu0 %v1339
      %v1341 = vpop.xlane.xlu0 %1340
      %v1342 = vmul.f32 %v1341, %v1208
      %v1343 = vsub.f32 %v1336, %v1342
      %v1344 = vmul.f32 %v1343, %v1343
      %v1345 = vsel %vm588, %v1344, 0.0
      %1346 = vadd.xlane.f32.xlu0 %v1345
      %v1347 = vpop.xlane.xlu0 %1346
      %v1348 = vmul.f32 %v1347, %v1208
      %v1349 = vadd.f32 %v1348, 1e-12
      %v1350 = vrsqrt.pop %v1349
      %v1351 = vmul.f32 %v1350, %v1349
      %v1352 = vmul.f32 %v1351, %v1350
      %v1353 = vmul.f32 0.5, %v1352
      %v1354 = vsub.f32 1.5, %v1353
      %v1355 = vmul.f32 %v1350, %v1354
      %vm1356 = vweird.f32 %v1349
      %vm1357 = vweird.f32 %v1350
      %vm1358 = vmor %vm1356, %vm1357
      %v1359 = vsel %vm1358, %v1350, %v1355
      %v1360 = vmul.f32 %v1343, %v1359
      %v1362 = vperm.slane %v1337, 0
      %v1364 = vmul.f32 %v1360, %v1362
      %v1366 = vperm.slane %v1338, 0
      %v1368 = vadd.f32 %v1364, %v1366
      %1369 = vst.msk [vmem:[%s476] sm:$0xff] %vm588, %v1368
      %p1370 = scmp.lt.s32.totalorder %s25, 1
      %s1371 = scalar_select %p1370, %s25, 1
      %s1372 = smul.addr %s1371, 8
      %s1373 = scalar_lea.vmem %s14, %s1372
      // Predicated region
      $region77: #{risk_analyzer_forward.4} parent=75 // pred_check
        %p1374 = pneg %p347
      $region78: #{risk_analyzer_forward.4} parent=75 // pred_check_branch
        %1376 = sbr.rel (%p1374) target = $region80
      $region79: #{risk_analyzer_forward.4} parent=75 // pred_region
        _
      $region80: #{risk_analyzer_forward.4} parent=75 // pred_fallthru
        _
    $region76: #{risk_analyzer_forward.4} parent=5 // pred_fallthru
      _
    %p1377 = scmp.le.s32.totalorder 2, %s20
    // Predicated region
    $region81: #{risk_analyzer_forward.4} parent=5 // pred_check
      %p1378 = pneg %p1377
    $region82: #{risk_analyzer_forward.4} parent=5 // pred_check_branch
      %1380 = sbr.rel (%p1378) target = $region84
    $region83: #{risk_analyzer_forward.4} parent=5 // pred_region
      %s1381 = ssub.s32 %s20, 2
      // Predicated region
      $region85: #{risk_analyzer_forward.4} parent=83 // pred_check
        %p1382 = pneg %p353
      $region86: #{risk_analyzer_forward.4} parent=83 // pred_check_branch
        %1384 = sbr.rel (%p1382) target = $region88
      $region87: #{risk_analyzer_forward.4} parent=83 // pred_region
        %p1385 = scmp.lt.s32.totalorder %s26, 1
        %s1386 = scalar_select %p1385, %s26, 1
        %s1387 = smul.addr %s1386, 8
        %s1388 = scalar_lea.vmem %s14, %s1387
      $region88: #{risk_analyzer_forward.4} parent=83 // pred_fallthru
        _
    $region84: #{risk_analyzer_forward.4} parent=5 // pred_fallthru
      _
  $region6: #{risk_analyzer_forward.4} parent=0 // loop_footer
    %s24 = sadd.s32 1, %s20
  $region7: #{risk_analyzer_forward.4} parent=0 // loop_footer_branch
    %19 = sbr.rel target = $region3
  $region8: #{risk_analyzer_forward.4} parent=0 // loop_exit
    _

// kernel: risk_analyzer_forward.3
$region0: #{risk_analyzer_forward.3}
  #allocation0 [shape = 'u32[]', space=smem, size = 0x4, offset = 0x4, fixed_abs, tag = 'smem constant byte address 0x4 - core index']
  #allocation1 [shape = 'u32[72,128]{1,0:T(1,128)}', space=vmem, size = 0x9000, scoped, tag = 'internal scratch']
  %s0 = inlined_call_operand.vmem [shape: f32[16,32], index: 0, kind: input, shape index: {}]
  %s1 = inlined_call_operand.vmem [shape: f32[2,1,8], index: 1, kind: input, shape index: {}]
  %s2 = inlined_call_operand.vmem [shape: f32[1,32], index: 2, kind: input, shape index: {}]
  %s3 = inlined_call_operand.vmem [shape: f32[1,32], index: 3, kind: input, shape index: {}]
  %s4 = inlined_call_operand.vmem [shape: bf16[12,32,8], index: 4, kind: input, shape index: {}]
  %s5 = inlined_call_operand.vmem [shape: f32[12,1,8], index: 5, kind: input, shape index: {}]
  %s6 = inlined_call_operand.vmem [shape: bf16[4,8,32], index: 6, kind: input, shape index: {}]
  %s7 = inlined_call_operand.vmem [shape: f32[1,32], index: 7, kind: input, shape index: {}]
  %s8 = inlined_call_operand.vmem [shape: f32[1,32], index: 8, kind: input, shape index: {}]
  %s9 = inlined_call_operand.vmem [shape: f32[1,32], index: 9, kind: input, shape index: {}]
  %s10 = inlined_call_operand.vmem [shape: bf16[32,64], index: 10, kind: input, shape index: {}]
  %s11 = inlined_call_operand.vmem [shape: f32[1,64], index: 11, kind: input, shape index: {}]
  %s12 = inlined_call_operand.vmem [shape: bf16[64,32], index: 12, kind: input, shape index: {}]
  %s13 = inlined_call_operand.vmem [shape: f32[1,32], index: 13, kind: input, shape index: {}]
  %s14 = inlined_call_operand.vmem [shape: f32[1,32], index: 14, kind: input, shape index: {}]
  %s15 = inlined_call_operand.vmem [shape: f32[1,32], index: 15, kind: input, shape index: {}]
  %s16 = inlined_call_operand.vmem [shape: f32[16,32], index: 16, kind: output, shape index: {}]
  %s17 = sld [smem:[#allocation0]]
  $region97: #{risk_analyzer_forward.3} parent=0
    _
  %s19 = ssub.s32 1, %s17
  %s20 = scalar_select 0, %s19, %s17
  loop: start=0, step=1, limit=4
  $region2: #{risk_analyzer_forward.3} parent=0 // loop_pre_header
    _
  $region3: #{risk_analyzer_forward.3} parent=0 // loop_header
    %s22 = sphi 0, %s26
    %p23 = scmp.ge.s32.totalorder %s22, 4
    %s32 = sphi 0, %s34
    %s35 = sphi 0, %s32
    %s36 = sphi 0, %s35
    %s52 = sphi 0, %s36
    %s58 = sphi 0, %s60
    %s61 = sphi 0, %s58
    %s62 = sphi 0, %s61
    %s78 = sphi 0, %s62
    %s82 = sphi 0, %s82
    %s84 = sphi 0, %s82
    %s85 = sphi 0, %s84
    %s99 = sphi 0, %s85
    %s103 = sphi 0, %s103
    %s105 = sphi 0, %s103
    %s106 = sphi 0, %s105
    %s120 = sphi 0, %s106
    %s124 = sphi 0, %s124
    %s126 = sphi 0, %s124
    %s127 = sphi 0, %s126
    %s141 = sphi 0, %s127
    %s145 = sphi 0, %s145
    %s147 = sphi 0, %s145
    %s148 = sphi 0, %s147
    %s162 = sphi 0, %s148
    %s166 = sphi 0, %s166
    %s168 = sphi 0, %s166
    %s169 = sphi 0, %s168
    %s183 = sphi 0, %s169
    %s187 = sphi 0, %s187
    %s189 = sphi 0, %s187
    %s190 = sphi 0, %s189
    %s204 = sphi 0, %s190
    %s208 = sphi 0, %s208
    %s210 = sphi 0, %s208
    %s211 = sphi 0, %s210
    %s225 = sphi 0, %s211
    %s229 = sphi 0, %s229
    %s231 = sphi 0, %s229
    %s232 = sphi 0, %s231
    %s246 = sphi 0, %s232
    %s250 = sphi 0, %s250
    %s252 = sphi 0, %s250
    %s253 = sphi 0, %s252
    %s267 = sphi 0, %s253
    %s271 = sphi 0, %s271
    %s273 = sphi 0, %s271
    %s274 = sphi 0, %s273
    %s288 = sphi 0, %s274
    %s292 = sphi 0, %s292
    %s294 = sphi 0, %s292
    %s295 = sphi 0, %s294
    %s309 = sphi 0, %s295
    %s313 = sphi 0, %s313
    %s315 = sphi 0, %s313
    %s316 = sphi 0, %s315
    %s330 = sphi 0, %s316
    %s334 = sphi 0, %s334
    %s336 = sphi 0, %s334
    %s337 = sphi 0, %s336
    %s351 = sphi 0, %s337
    %s355 = sphi 0, %s355
    %s357 = sphi 0, %s355
    %s358 = sphi 0, %s357
    %s372 = sphi 0, %s358
    %s378 = sphi 0, %s380
    %s381 = sphi 0, %s378
    %s382 = sphi 0, %s381
    %s398 = sphi 0, %s382
  $region4: #{risk_analyzer_forward.3} parent=0 // loop_header_branch
    %25 = sbr.rel (%p23) target = $region8
  $region5: #{risk_analyzer_forward.3} parent=0 // loop_body
    %s27 = ssub.s32 %s22, 1
    %s28 = ssub.s32 %s22, 2
    %s29 = sadd.s32 %s22, 1
    %s30 = ssub.s32 %s22, %s29
    %p31 = scmp.eq.s32.totalorder %s30, 0
    %s33 = sadd.s32 %s32, 1
    %s34 = scalar_select %p31, %s32, %s33
    %p37 = pneg %p31
    %p38 = scmp.eq.s32.totalorder %s22, 1
    %p39 = por %p37, %p38
    %p40 = scmp.ne.s32.totalorder %s32, %s35
    %p41 = scmp.eq.s32.totalorder %s22, 0
    %p42 = por %p40, %p41
    %p43 = scmp.ne.s32.totalorder %s32, %s35
    %p44 = scmp.eq.s32.totalorder %s27, 1
    %p45 = por %p43, %p44
    %p46 = scmp.ne.s32.totalorder %s35, %s36
    %p47 = scmp.eq.s32.totalorder %s27, 0
    %p48 = por %p46, %p47
    %p49 = scmp.ne.s32.totalorder %s35, %s36
    %p50 = scmp.eq.s32.totalorder %s28, 1
    %p51 = por %p49, %p50
    %p53 = scmp.ne.s32.totalorder %s36, %s52
    %p54 = scmp.eq.s32.totalorder %s28, 0
    %p55 = por %p53, %p54
    %s56 = ssub.s32 %s22, %s29
    %p57 = scmp.eq.s32.totalorder %s56, 0
    %s59 = sadd.s32 %s58, 1
    %s60 = scalar_select %p57, %s58, %s59
    %p63 = pneg %p57
    %p64 = scmp.eq.s32.totalorder %s22, 1
    %p65 = por %p63, %p64
    %p66 = scmp.ne.s32.totalorder %s58, %s61
    %p67 = scmp.eq.s32.totalorder %s22, 0
    %p68 = por %p66, %p67
    %p69 = scmp.ne.s32.totalorder %s58, %s61
    %p70 = scmp.eq.s32.totalorder %s27, 1
    %p71 = por %p69, %p70
    %p72 = scmp.ne.s32.totalorder %s61, %s62
    %p73 = scmp.eq.s32.totalorder %s27, 0
    %p74 = por %p72, %p73
    %p75 = scmp.ne.s32.totalorder %s61, %s62
    %p76 = scmp.eq.s32.totalorder %s28, 1
    %p77 = por %p75, %p76
    %p79 = scmp.ne.s32.totalorder %s62, %s78
    %p80 = scmp.eq.s32.totalorder %s28, 0
    %p81 = por %p79, %p80
    %s83 = sadd.s32 %s82, 1
    %p86 = scmp.eq.s32.totalorder %s22, 1
    %p87 = scmp.ne.s32.totalorder %s82, %s84
    %p88 = scmp.eq.s32.totalorder %s22, 0
    %p89 = por %p87, %p88
    %p90 = scmp.ne.s32.totalorder %s82, %s84
    %p91 = scmp.eq.s32.totalorder %s27, 1
    %p92 = por %p90, %p91
    %p93 = scmp.ne.s32.totalorder %s84, %s85
    %p94 = scmp.eq.s32.totalorder %s27, 0
    %p95 = por %p93, %p94
    %p96 = scmp.ne.s32.totalorder %s84, %s85
    %p97 = scmp.eq.s32.totalorder %s28, 1
    %p98 = por %p96, %p97
    %p100 = scmp.ne.s32.totalorder %s85, %s99
    %p101 = scmp.eq.s32.totalorder %s28, 0
    %p102 = por %p100, %p101
    %s104 = sadd.s32 %s103, 1
    %p107 = scmp.eq.s32.totalorder %s22, 1
    %p108 = scmp.ne.s32.totalorder %s103, %s105
    %p109 = scmp.eq.s32.totalorder %s22, 0
    %p110 = por %p108, %p109
    %p111 = scmp.ne.s32.totalorder %s103, %s105
    %p112 = scmp.eq.s32.totalorder %s27, 1
    %p113 = por %p111, %p112
    %p114 = scmp.ne.s32.totalorder %s105, %s106
    %p115 = scmp.eq.s32.totalorder %s27, 0
    %p116 = por %p114, %p115
    %p117 = scmp.ne.s32.totalorder %s105, %s106
    %p118 = scmp.eq.s32.totalorder %s28, 1
    %p119 = por %p117, %p118
    %p121 = scmp.ne.s32.totalorder %s106, %s120
    %p122 = scmp.eq.s32.totalorder %s28, 0
    %p123 = por %p121, %p122
    %s125 = sadd.s32 %s124, 1
    %p128 = scmp.eq.s32.totalorder %s22, 1
    %p129 = scmp.ne.s32.totalorder %s124, %s126
    %p130 = scmp.eq.s32.totalorder %s22, 0
    %p131 = por %p129, %p130
    %p132 = scmp.ne.s32.totalorder %s124, %s126
    %p133 = scmp.eq.s32.totalorder %s27, 1
    %p134 = por %p132, %p133
    %p135 = scmp.ne.s32.totalorder %s126, %s127
    %p136 = scmp.eq.s32.totalorder %s27, 0
    %p137 = por %p135, %p136
    %p138 = scmp.ne.s32.totalorder %s126, %s127
    %p139 = scmp.eq.s32.totalorder %s28, 1
    %p140 = por %p138, %p139
    %p142 = scmp.ne.s32.totalorder %s127, %s141
    %p143 = scmp.eq.s32.totalorder %s28, 0
    %p144 = por %p142, %p143
    %s146 = sadd.s32 %s145, 1
    %p149 = scmp.eq.s32.totalorder %s22, 1
    %p150 = scmp.ne.s32.totalorder %s145, %s147
    %p151 = scmp.eq.s32.totalorder %s22, 0
    %p152 = por %p150, %p151
    %p153 = scmp.ne.s32.totalorder %s145, %s147
    %p154 = scmp.eq.s32.totalorder %s27, 1
    %p155 = por %p153, %p154
    %p156 = scmp.ne.s32.totalorder %s147, %s148
    %p157 = scmp.eq.s32.totalorder %s27, 0
    %p158 = por %p156, %p157
    %p159 = scmp.ne.s32.totalorder %s147, %s148
    %p160 = scmp.eq.s32.totalorder %s28, 1
    %p161 = por %p159, %p160
    %p163 = scmp.ne.s32.totalorder %s148, %s162
    %p164 = scmp.eq.s32.totalorder %s28, 0
    %p165 = por %p163, %p164
    %s167 = sadd.s32 %s166, 1
    %p170 = scmp.eq.s32.totalorder %s22, 1
    %p171 = scmp.ne.s32.totalorder %s166, %s168
    %p172 = scmp.eq.s32.totalorder %s22, 0
    %p173 = por %p171, %p172
    %p174 = scmp.ne.s32.totalorder %s166, %s168
    %p175 = scmp.eq.s32.totalorder %s27, 1
    %p176 = por %p174, %p175
    %p177 = scmp.ne.s32.totalorder %s168, %s169
    %p178 = scmp.eq.s32.totalorder %s27, 0
    %p179 = por %p177, %p178
    %p180 = scmp.ne.s32.totalorder %s168, %s169
    %p181 = scmp.eq.s32.totalorder %s28, 1
    %p182 = por %p180, %p181
    %p184 = scmp.ne.s32.totalorder %s169, %s183
    %p185 = scmp.eq.s32.totalorder %s28, 0
    %p186 = por %p184, %p185
    %s188 = sadd.s32 %s187, 1
    %p191 = scmp.eq.s32.totalorder %s22, 1
    %p192 = scmp.ne.s32.totalorder %s187, %s189
    %p193 = scmp.eq.s32.totalorder %s22, 0
    %p194 = por %p192, %p193
    %p195 = scmp.ne.s32.totalorder %s187, %s189
    %p196 = scmp.eq.s32.totalorder %s27, 1
    %p197 = por %p195, %p196
    %p198 = scmp.ne.s32.totalorder %s189, %s190
    %p199 = scmp.eq.s32.totalorder %s27, 0
    %p200 = por %p198, %p199
    %p201 = scmp.ne.s32.totalorder %s189, %s190
    %p202 = scmp.eq.s32.totalorder %s28, 1
    %p203 = por %p201, %p202
    %p205 = scmp.ne.s32.totalorder %s190, %s204
    %p206 = scmp.eq.s32.totalorder %s28, 0
    %p207 = por %p205, %p206
    %s209 = sadd.s32 %s208, 1
    %p212 = scmp.eq.s32.totalorder %s22, 1
    %p213 = scmp.ne.s32.totalorder %s208, %s210
    %p214 = scmp.eq.s32.totalorder %s22, 0
    %p215 = por %p213, %p214
    %p216 = scmp.ne.s32.totalorder %s208, %s210
    %p217 = scmp.eq.s32.totalorder %s27, 1
    %p218 = por %p216, %p217
    %p219 = scmp.ne.s32.totalorder %s210, %s211
    %p220 = scmp.eq.s32.totalorder %s27, 0
    %p221 = por %p219, %p220
    %p222 = scmp.ne.s32.totalorder %s210, %s211
    %p223 = scmp.eq.s32.totalorder %s28, 1
    %p224 = por %p222, %p223
    %p226 = scmp.ne.s32.totalorder %s211, %s225
    %p227 = scmp.eq.s32.totalorder %s28, 0
    %p228 = por %p226, %p227
    %s230 = sadd.s32 %s229, 1
    %p233 = scmp.eq.s32.totalorder %s22, 1
    %p234 = scmp.ne.s32.totalorder %s229, %s231
    %p235 = scmp.eq.s32.totalorder %s22, 0
    %p236 = por %p234, %p235
    %p237 = scmp.ne.s32.totalorder %s229, %s231
    %p238 = scmp.eq.s32.totalorder %s27, 1
    %p239 = por %p237, %p238
    %p240 = scmp.ne.s32.totalorder %s231, %s232
    %p241 = scmp.eq.s32.totalorder %s27, 0
    %p242 = por %p240, %p241
    %p243 = scmp.ne.s32.totalorder %s231, %s232
    %p244 = scmp.eq.s32.totalorder %s28, 1
    %p245 = por %p243, %p244
    %p247 = scmp.ne.s32.totalorder %s232, %s246
    %p248 = scmp.eq.s32.totalorder %s28, 0
    %p249 = por %p247, %p248
    %s251 = sadd.s32 %s250, 1
    %p254 = scmp.eq.s32.totalorder %s22, 1
    %p255 = scmp.ne.s32.totalorder %s250, %s252
    %p256 = scmp.eq.s32.totalorder %s22, 0
    %p257 = por %p255, %p256
    %p258 = scmp.ne.s32.totalorder %s250, %s252
    %p259 = scmp.eq.s32.totalorder %s27, 1
    %p260 = por %p258, %p259
    %p261 = scmp.ne.s32.totalorder %s252, %s253
    %p262 = scmp.eq.s32.totalorder %s27, 0
    %p263 = por %p261, %p262
    %p264 = scmp.ne.s32.totalorder %s252, %s253
    %p265 = scmp.eq.s32.totalorder %s28, 1
    %p266 = por %p264, %p265
    %p268 = scmp.ne.s32.totalorder %s253, %s267
    %p269 = scmp.eq.s32.totalorder %s28, 0
    %p270 = por %p268, %p269
    %s272 = sadd.s32 %s271, 1
    %p275 = scmp.eq.s32.totalorder %s22, 1
    %p276 = scmp.ne.s32.totalorder %s271, %s273
    %p277 = scmp.eq.s32.totalorder %s22, 0
    %p278 = por %p276, %p277
    %p279 = scmp.ne.s32.totalorder %s271, %s273
    %p280 = scmp.eq.s32.totalorder %s27, 1
    %p281 = por %p279, %p280
    %p282 = scmp.ne.s32.totalorder %s273, %s274
    %p283 = scmp.eq.s32.totalorder %s27, 0
    %p284 = por %p282, %p283
    %p285 = scmp.ne.s32.totalorder %s273, %s274
    %p286 = scmp.eq.s32.totalorder %s28, 1
    %p287 = por %p285, %p286
    %p289 = scmp.ne.s32.totalorder %s274, %s288
    %p290 = scmp.eq.s32.totalorder %s28, 0
    %p291 = por %p289, %p290
    %s293 = sadd.s32 %s292, 1
    %p296 = scmp.eq.s32.totalorder %s22, 1
    %p297 = scmp.ne.s32.totalorder %s292, %s294
    %p298 = scmp.eq.s32.totalorder %s22, 0
    %p299 = por %p297, %p298
    %p300 = scmp.ne.s32.totalorder %s292, %s294
    %p301 = scmp.eq.s32.totalorder %s27, 1
    %p302 = por %p300, %p301
    %p303 = scmp.ne.s32.totalorder %s294, %s295
    %p304 = scmp.eq.s32.totalorder %s27, 0
    %p305 = por %p303, %p304
    %p306 = scmp.ne.s32.totalorder %s294, %s295
    %p307 = scmp.eq.s32.totalorder %s28, 1
    %p308 = por %p306, %p307
    %p310 = scmp.ne.s32.totalorder %s295, %s309
    %p311 = scmp.eq.s32.totalorder %s28, 0
    %p312 = por %p310, %p311
    %s314 = sadd.s32 %s313, 1
    %p317 = scmp.eq.s32.totalorder %s22, 1
    %p318 = scmp.ne.s32.totalorder %s313, %s315
    %p319 = scmp.eq.s32.totalorder %s22, 0
    %p320 = por %p318, %p319
    %p321 = scmp.ne.s32.totalorder %s313, %s315
    %p322 = scmp.eq.s32.totalorder %s27, 1
    %p323 = por %p321, %p322
    %p324 = scmp.ne.s32.totalorder %s315, %s316
    %p325 = scmp.eq.s32.totalorder %s27, 0
    %p326 = por %p324, %p325
    %p327 = scmp.ne.s32.totalorder %s315, %s316
    %p328 = scmp.eq.s32.totalorder %s28, 1
    %p329 = por %p327, %p328
    %p331 = scmp.ne.s32.totalorder %s316, %s330
    %p332 = scmp.eq.s32.totalorder %s28, 0
    %p333 = por %p331, %p332
    %s335 = sadd.s32 %s334, 1
    %p338 = scmp.eq.s32.totalorder %s22, 1
    %p339 = scmp.ne.s32.totalorder %s334, %s336
    %p340 = scmp.eq.s32.totalorder %s22, 0
    %p341 = por %p339, %p340
    %p342 = scmp.ne.s32.totalorder %s334, %s336
    %p343 = scmp.eq.s32.totalorder %s27, 1
    %p344 = por %p342, %p343
    %p345 = scmp.ne.s32.totalorder %s336, %s337
    %p346 = scmp.eq.s32.totalorder %s27, 0
    %p347 = por %p345, %p346
    %p348 = scmp.ne.s32.totalorder %s336, %s337
    %p349 = scmp.eq.s32.totalorder %s28, 1
    %p350 = por %p348, %p349
    %p352 = scmp.ne.s32.totalorder %s337, %s351
    %p353 = scmp.eq.s32.totalorder %s28, 0
    %p354 = por %p352, %p353
    %s356 = sadd.s32 %s355, 1
    %p359 = scmp.eq.s32.totalorder %s22, 1
    %p360 = scmp.ne.s32.totalorder %s355, %s357
    %p361 = scmp.eq.s32.totalorder %s22, 0
    %p362 = por %p360, %p361
    %p363 = scmp.ne.s32.totalorder %s355, %s357
    %p364 = scmp.eq.s32.totalorder %s27, 1
    %p365 = por %p363, %p364
    %p366 = scmp.ne.s32.totalorder %s357, %s358
    %p367 = scmp.eq.s32.totalorder %s27, 0
    %p368 = por %p366, %p367
    %p369 = scmp.ne.s32.totalorder %s357, %s358
    %p370 = scmp.eq.s32.totalorder %s28, 1
    %p371 = por %p369, %p370
    %p373 = scmp.ne.s32.totalorder %s358, %s372
    %p374 = scmp.eq.s32.totalorder %s28, 0
    %p375 = por %p373, %p374
    %s376 = ssub.s32 %s22, %s29
    %p377 = scmp.eq.s32.totalorder %s376, 0
    %s379 = sadd.s32 %s378, 1
    %s380 = scalar_select %p377, %s378, %s379
    %p383 = pneg %p377
    %p384 = scmp.eq.s32.totalorder %s22, 1
    %p385 = por %p383, %p384
    %p386 = scmp.ne.s32.totalorder %s378, %s381
    %p387 = scmp.eq.s32.totalorder %s22, 0
    %p388 = por %p386, %p387
    %p389 = scmp.ne.s32.totalorder %s378, %s381
    %p390 = scmp.eq.s32.totalorder %s27, 1
    %p391 = por %p389, %p390
    %p392 = scmp.ne.s32.totalorder %s381, %s382
    %p393 = scmp.eq.s32.totalorder %s27, 0
    %p394 = por %p392, %p393
    %p395 = scmp.ne.s32.totalorder %s381, %s382
    %p396 = scmp.eq.s32.totalorder %s28, 1
    %p397 = por %p395, %p396
    %p399 = scmp.ne.s32.totalorder %s382, %s398
    %p400 = scmp.eq.s32.totalorder %s28, 0
    %p401 = por %p399, %p400
    %p402 = scmp.le.s32.totalorder 1, %s22
    %p403 = scmp.lt.s32.totalorder %s22, 3
    %p404 = pnand %p402, %p403
    %p405 = pneg %p404
    // Predicated region
    $region9: #{risk_analyzer_forward.3} parent=5 // pred_check
      _
    $region10: #{risk_analyzer_forward.3} parent=5 // pred_check_branch
      %407 = sbr.rel (%p404) target = $region12
    $region11: #{risk_analyzer_forward.3} parent=5 // pred_region
      %s408 = ssub.s32 %s22, 1
      // Predicated region
      $region13: #{risk_analyzer_forward.3} parent=11 // pred_check
        %p409 = pneg %p95
      $region14: #{risk_analyzer_forward.3} parent=11 // pred_check_branch
        %411 = sbr.rel (%p409) target = $region16
      $region15: #{risk_analyzer_forward.3} parent=11 // pred_region
        _
      $region16: #{risk_analyzer_forward.3} parent=11 // pred_fallthru
        _
      // Predicated region
      $region17: #{risk_analyzer_forward.3} parent=11 // pred_check
        %p412 = pneg %p116
      $region18: #{risk_analyzer_forward.3} parent=11 // pred_check_branch
        %414 = sbr.rel (%p412) target = $region20
      $region19: #{risk_analyzer_forward.3} parent=11 // pred_region
        _
      $region20: #{risk_analyzer_forward.3} parent=11 // pred_fallthru
        _
      // Predicated region
      $region21: #{risk_analyzer_forward.3} parent=11 // pred_check
        %p415 = pneg %p137
      $region22: #{risk_analyzer_forward.3} parent=11 // pred_check_branch
        %417 = sbr.rel (%p415) target = $region24
      $region23: #{risk_analyzer_forward.3} parent=11 // pred_region
        _
      $region24: #{risk_analyzer_forward.3} parent=11 // pred_fallthru
        _
      // Predicated region
      $region25: #{risk_analyzer_forward.3} parent=11 // pred_check
        %p418 = pneg %p158
      $region26: #{risk_analyzer_forward.3} parent=11 // pred_check_branch
        %420 = sbr.rel (%p418) target = $region28
      $region27: #{risk_analyzer_forward.3} parent=11 // pred_region
        _
      $region28: #{risk_analyzer_forward.3} parent=11 // pred_fallthru
        _
      // Predicated region
      $region29: #{risk_analyzer_forward.3} parent=11 // pred_check
        %p421 = pneg %p179
      $region30: #{risk_analyzer_forward.3} parent=11 // pred_check_branch
        %423 = sbr.rel (%p421) target = $region32
      $region31: #{risk_analyzer_forward.3} parent=11 // pred_region
        _
      $region32: #{risk_analyzer_forward.3} parent=11 // pred_fallthru
        _
      // Predicated region
      $region33: #{risk_analyzer_forward.3} parent=11 // pred_check
        %p424 = pneg %p200
      $region34: #{risk_analyzer_forward.3} parent=11 // pred_check_branch
        %426 = sbr.rel (%p424) target = $region36
      $region35: #{risk_analyzer_forward.3} parent=11 // pred_region
        _
      $region36: #{risk_analyzer_forward.3} parent=11 // pred_fallthru
        _
      // Predicated region
      $region37: #{risk_analyzer_forward.3} parent=11 // pred_check
        %p427 = pneg %p221
      $region38: #{risk_analyzer_forward.3} parent=11 // pred_check_branch
        %429 = sbr.rel (%p427) target = $region40
      $region39: #{risk_analyzer_forward.3} parent=11 // pred_region
        _
      $region40: #{risk_analyzer_forward.3} parent=11 // pred_fallthru
        _
      // Predicated region
      $region41: #{risk_analyzer_forward.3} parent=11 // pred_check
        %p430 = pneg %p242
      $region42: #{risk_analyzer_forward.3} parent=11 // pred_check_branch
        %432 = sbr.rel (%p430) target = $region44
      $region43: #{risk_analyzer_forward.3} parent=11 // pred_region
        _
      $region44: #{risk_analyzer_forward.3} parent=11 // pred_fallthru
        _
      // Predicated region
      $region45: #{risk_analyzer_forward.3} parent=11 // pred_check
        %p433 = pneg %p263
      $region46: #{risk_analyzer_forward.3} parent=11 // pred_check_branch
        %435 = sbr.rel (%p433) target = $region48
      $region47: #{risk_analyzer_forward.3} parent=11 // pred_region
        _
      $region48: #{risk_analyzer_forward.3} parent=11 // pred_fallthru
        _
      // Predicated region
      $region49: #{risk_analyzer_forward.3} parent=11 // pred_check
        %p436 = pneg %p284
      $region50: #{risk_analyzer_forward.3} parent=11 // pred_check_branch
        %438 = sbr.rel (%p436) target = $region52
      $region51: #{risk_analyzer_forward.3} parent=11 // pred_region
        _
      $region52: #{risk_analyzer_forward.3} parent=11 // pred_fallthru
        _
      // Predicated region
      $region53: #{risk_analyzer_forward.3} parent=11 // pred_check
        %p439 = pneg %p305
      $region54: #{risk_analyzer_forward.3} parent=11 // pred_check_branch
        %441 = sbr.rel (%p439) target = $region56
      $region55: #{risk_analyzer_forward.3} parent=11 // pred_region
        _
      $region56: #{risk_analyzer_forward.3} parent=11 // pred_fallthru
        _
      // Predicated region
      $region57: #{risk_analyzer_forward.3} parent=11 // pred_check
        %p442 = pneg %p326
      $region58: #{risk_analyzer_forward.3} parent=11 // pred_check_branch
        %444 = sbr.rel (%p442) target = $region60
      $region59: #{risk_analyzer_forward.3} parent=11 // pred_region
        _
      $region60: #{risk_analyzer_forward.3} parent=11 // pred_fallthru
        _
      // Predicated region
      $region61: #{risk_analyzer_forward.3} parent=11 // pred_check
        %p445 = pneg %p347
      $region62: #{risk_analyzer_forward.3} parent=11 // pred_check_branch
        %447 = sbr.rel (%p445) target = $region64
      $region63: #{risk_analyzer_forward.3} parent=11 // pred_region
        _
      $region64: #{risk_analyzer_forward.3} parent=11 // pred_fallthru
        _
      // Predicated region
      $region65: #{risk_analyzer_forward.3} parent=11 // pred_check
        %p448 = pneg %p368
      $region66: #{risk_analyzer_forward.3} parent=11 // pred_check_branch
        %450 = sbr.rel (%p448) target = $region68
      $region67: #{risk_analyzer_forward.3} parent=11 // pred_region
        _
      $region68: #{risk_analyzer_forward.3} parent=11 // pred_fallthru
        _
    $region12: #{risk_analyzer_forward.3} parent=5 // pred_fallthru
      _
    %p451 = scmp.lt.s32.totalorder %s22, 2
    // Predicated region
    $region69: #{risk_analyzer_forward.3} parent=5 // pred_check
      %p452 = pneg %p451
    $region70: #{risk_analyzer_forward.3} parent=5 // pred_check_branch
      %454 = sbr.rel (%p452) target = $region72
    $region71: #{risk_analyzer_forward.3} parent=5 // pred_region
      // Predicated region
      $region73: #{risk_analyzer_forward.3} parent=71 // pred_check
        %p455 = pneg %p42
      $region74: #{risk_analyzer_forward.3} parent=71 // pred_check_branch
        %457 = sbr.rel (%p455) target = $region76
      $region75: #{risk_analyzer_forward.3} parent=71 // pred_region
        %p458 = scmp.lt.s32.totalorder %s22, 1
        %s459 = scalar_select %p458, %s22, 1
        %s460 = smul.addr %s459, 8
        %s461 = scalar_lea.vmem %s0, %s460
      $region76: #{risk_analyzer_forward.3} parent=71 // pred_fallthru
        _
      // Predicated region
      $region77: #{risk_analyzer_forward.3} parent=71 // pred_check
        %p462 = pneg %p68
      $region78: #{risk_analyzer_forward.3} parent=71 // pred_check_branch
        %464 = sbr.rel (%p462) target = $region80
      $region79: #{risk_analyzer_forward.3} parent=71 // pred_region
        %p465 = scmp.lt.s32.totalorder %s22, 1
        %s466 = scalar_select %p465, %s22, 1
        %s467 = scalar_lea.vmem %s1, %s466
      $region80: #{risk_analyzer_forward.3} parent=71 // pred_fallthru
        _
    $region72: #{risk_analyzer_forward.3} parent=5 // pred_fallthru
      _
    %p468 = scmp.le.s32.totalorder 1, %s22
    %p469 = scmp.lt.s32.totalorder %s22, 3
    %p470 = pnand %p468, %p469
    %p471 = pneg %p470
    // Predicated region
    $region81: #{risk_analyzer_forward.3} parent=5 // pred_check
      _
    $region82: #{risk_analyzer_forward.3} parent=5 // pred_check_branch
      %473 = sbr.rel (%p470) target = $region84
    $region83: #{risk_analyzer_forward.3} parent=5 // pred_region
      %s474 = ssub.s32 %s22, 1
      %p475 = scmp.lt.s32.totalorder %s27, 1
      %s476 = scalar_select %p475, %s27, 1
      %s477 = smul.addr %s476, 8
      %s478 = scalar_lea.vmem %s0, %s477
      %p479 = pneg %p48
      %p480 = pneg %p45
      %p481 = scmp.lt.s32.totalorder %s27, 1
      %s482 = scalar_select %p481, %s27, 1
      %s483 = scalar_lea.vmem %s1, %s482
      %p484 = pneg %p74
      %p485 = pneg %p71
      %p486 = pneg %p95
      %p487 = pneg %p92
      %p488 = pneg %p116
      %p489 = pneg %p113
      %p490 = pneg %p137
      %p491 = pneg %p134
      %p492 = pneg %p158
      %p493 = pneg %p155
      %p494 = pneg %p179
      %p495 = pneg %p176
      %p496 = pneg %p200
      %p497 = pneg %p197
      %p498 = pneg %p221
      %p499 = pneg %p218
      %p500 = pneg %p242
      %p501 = pneg %p239
      %p502 = pneg %p263
      %p503 = pneg %p260
      %p504 = pneg %p284
      %p505 = pneg %p281
      %p506 = pneg %p305
      %p507 = pneg %p302
      %p508 = pneg %p326
      %p509 = pneg %p323
      %p510 = pneg %p347
      %p511 = pneg %p344
      %p512 = pneg %p368
      %p513 = pneg %p365
      %p514 = pneg %p394
      %p515 = pneg %p391
      %p516 = scmp.lt.s32.totalorder %s27, 1
      %s517 = scalar_select %p516, %s27, 1
      %s518 = smul.addr %s517, 8
      %s519 = scalar_lea.vmem %s16, %s518
      %p520 = scmp.lt.s32.totalorder %s27, 1
      %s521 = scalar_select %p520, %s27, 1
      %s522 = smul.addr %s521, 8
      %s523 = scalar_lea.vmem %s0, %s522
      %p524 = scmp.lt.s32.totalorder %s27, 1
      %s525 = scalar_select %p524, %s27, 1
      %s526 = scalar_lea.vmem %s1, %s525
      %p527 = scmp.lt.s32.totalorder %s27, 1
      %s528 = scalar_select %p527, %s27, 1
      %s529 = smul.addr %s528, 8
      %s530 = scalar_lea.vmem %s16, %s529
      %v532 = vld [vmem:[%s523] sm:$0xff]
      %v533 = vld [vmem:[%s2] sm:$0x1]
      %v534 = vld [vmem:[%s3] sm:$0x1]
      %vm535 = vcmask 261120
      %v536 = vsel %vm535, %v532, 0.0
      %537 = vadd.xlane.f32.xlu0 %v536
      %v538 = vpop.xlane.xlu0 %537
      %v539 = vrcp.pop 32.0
      %v540 = vmul.f32 32.0, %v539
      %v541 = vsub.f32 1.0, %v540
      %v542 = vmul.f32 %v539, %v541
      %v543 = vadd.f32 %v539, %v542
      %vm544 = vweird.f32 %v539
      %v545 = vsel %vm544, %v539, %v543
      %v546 = vmul.f32 %v538, %v545
      %v547 = vsub.f32 %v532, %v546
      %v548 = vmul.f32 %v547, %v547
      %v549 = vsel %vm535, %v548, 0.0
      %550 = vadd.xlane.f32.xlu0 %v549
      %v551 = vpop.xlane.xlu0 %550
      %v552 = vmul.f32 %v551, %v545
      %v553 = vadd.f32 %v552, 1e-12
      %v554 = vrsqrt.pop %v553
      %v555 = vmul.f32 %v554, %v553
      %v556 = vmul.f32 %v555, %v554
      %v557 = vmul.f32 0.5, %v556
      %v558 = vsub.f32 1.5, %v557
      %v559 = vmul.f32 %v554, %v558
      %vm560 = vweird.f32 %v553
      %vm561 = vweird.f32 %v554
      %vm562 = vmor %vm560, %vm561
      %v563 = vsel %vm562, %v554, %v559
      %v564 = vmul.f32 %v547, %v563
      %v566 = vperm.slane %v533, 0
      %v568 = vmul.f32 %v564, %v566
      %v570 = vperm.slane %v534, 0
      %v572 = vadd.f32 %v568, %v570
      %v573 = vpack.c.bf16 %v572, %v572
      %v574 = vld [vmem:[%s4] sm:$0xf]
      %v575 = vld [vmem:[%s4 + $0x4] sm:$0xf]
      %v576 = vld [vmem:[%s4 + $0x8] sm:$0xf]
      %v577 = vld [vmem:[%s4 + $0xc] sm:$0xf]
      %v578 = vld [vmem:[%s4 + $0x10] sm:$0xf]
      %v579 = vld [vmem:[%s4 + $0x14] sm:$0xf]
      %v580 = vld [vmem:[%s4 + $0x18] sm:$0xf]
      %v581 = vld [vmem:[%s4 + $0x1c] sm:$0xf]
      %v582 = vld [vmem:[%s4 + $0x20] sm:$0xf]
      %v583 = vld [vmem:[%s4 + $0x24] sm:$0xf]
      %v584 = vld [vmem:[%s4 + $0x28] sm:$0xf]
      %v585 = vld [vmem:[%s4 + $0x2c] sm:$0xf]
      %v586 = vld [vmem:[%s4 + $0x30] sm:$0xf]
      %v587 = vld [vmem:[%s4 + $0x34] sm:$0xf]
      %v588 = vld [vmem:[%s4 + $0x38] sm:$0xf]
      %v589 = vld [vmem:[%s4 + $0x3c] sm:$0xf]
      %v590 = vld [vmem:[%s4 + $0x40] sm:$0xf]
      %v591 = vld [vmem:[%s4 + $0x44] sm:$0xf]
      %v592 = vld [vmem:[%s4 + $0x48] sm:$0xf]
      %v593 = vld [vmem:[%s4 + $0x4c] sm:$0xf]
      %v594 = vld [vmem:[%s4 + $0x50] sm:$0xf]
      %v595 = vld [vmem:[%s4 + $0x54] sm:$0xf]
      %v596 = vld [vmem:[%s4 + $0x58] sm:$0xf]
      %v597 = vld [vmem:[%s4 + $0x5c] sm:$0xf]
      %v598 = vld [vmem:[%s4 + $0x60] sm:$0xf]
      %v599 = vld [vmem:[%s4 + $0x64] sm:$0xf]
      %v600 = vld [vmem:[%s4 + $0x68] sm:$0xf]
      %v601 = vld [vmem:[%s4 + $0x6c] sm:$0xf]
      %v602 = vld [vmem:[%s4 + $0x70] sm:$0xf]
      %v603 = vld [vmem:[%s4 + $0x74] sm:$0xf]
      %v604 = vld [vmem:[%s4 + $0x78] sm:$0xf]
      %v605 = vld [vmem:[%s4 + $0x7c] sm:$0xf]
      %v606 = vld [vmem:[%s4 + $0x80] sm:$0xf]
      %v607 = vld [vmem:[%s4 + $0x84] sm:$0xf]
      %v608 = vld [vmem:[%s4 + $0x88] sm:$0xf]
      %v609 = vld [vmem:[%s4 + $0x8c] sm:$0xf]
      %v610 = vld [vmem:[%s4 + $0x90] sm:$0xf]
      %v611 = vld [vmem:[%s4 + $0x94] sm:$0xf]
      %v612 = vld [vmem:[%s4 + $0x98] sm:$0xf]
      %v613 = vld [vmem:[%s4 + $0x9c] sm:$0xf]
      %v614 = vld [vmem:[%s4 + $0xa0] sm:$0xf]
      %v615 = vld [vmem:[%s4 + $0xa4] sm:$0xf]
      %v616 = vld [vmem:[%s4 + $0xa8] sm:$0xf]
      %v617 = vld [vmem:[%s4 + $0xac] sm:$0xf]
      %v618 = vld [vmem:[%s4 + $0xb0] sm:$0xf]
      %v619 = vld [vmem:[%s4 + $0xb4] sm:$0xf]
      %v620 = vld [vmem:[%s4 + $0xb8] sm:$0xf]
      %v621 = vld [vmem:[%s4 + $0xbc] sm:$0xf]
      %v622 = vld [vmem:[%s5] sm:$0x1]
      %v623 = vld [vmem:[%s5 + $0x1] sm:$0x1]
      %v624 = vld [vmem:[%s5 + $0x2] sm:$0x1]
      %v625 = vld [vmem:[%s5 + $0x3] sm:$0x1]
      %v626 = vld [vmem:[%s5 + $0x4] sm:$0x1]
      %v627 = vld [vmem:[%s5 + $0x5] sm:$0x1]
      %v628 = vld [vmem:[%s5 + $0x6] sm:$0x1]
      %v629 = vld [vmem:[%s5 + $0x7] sm:$0x1]
      %v630 = vld [vmem:[%s5 + $0x8] sm:$0x1]
      %v631 = vld [vmem:[%s5 + $0x9] sm:$0x1]
      %v632 = vld [vmem:[%s5 + $0xa] sm:$0x1]
      %v633 = vld [vmem:[%s5 + $0xb] sm:$0x1]
      %v646 = vperm.slane %v622, 0
      %v647 = vperm.slane %v623, 0
      %v648 = vperm.slane %v624, 0
      %v649 = vperm.slane %v625, 0
      %v650 = vperm.slane %v626, 0
      %v651 = vperm.slane %v627, 0
      %v652 = vperm.slane %v628, 0
      %v653 = vperm.slane %v629, 0
      %v654 = vperm.slane %v630, 0
      %v655 = vperm.slane %v631, 0
      %v656 = vperm.slane %v632, 0
      %v657 = vperm.slane %v633, 0
      %v674 = vunpack.c.l.b16 %v574
      %v675 = vunpack.c.l.b16 %v575
      %v676 = vunpack.c.l.b16 %v576
      %v677 = vunpack.c.l.b16 %v577
      %v678 = vpack.c.b16 %v675, %v674
      %v679 = vpack.c.b16 %v677, %v676
      %v683 = vsel %vm535, %v573, 0
      %685 = vmatpush.bf16.msra.mxu0 0
      %686 = vmatpush.bf16.msra.mxu0 0
      %687 = vmatpush.bf16.msra.mxu0 0
      %688 = vmatpush.bf16.msra.mxu0 0
      %689 = vmatpush.bf16.msra.mxu0 0
      %690 = vmatpush.bf16.msra.mxu0 0
      %691 = vmatpush.bf16.msra.mxu0 %v679
      %692 = vmatpush.bf16.msra.mxu0 %v678
      %693 = vmatmul.bf16.gmra.mxu0 %v683
      %v694 = vpop.f32.mrf.mxu0
      %v695 = vadd.f32 %v646, %v694
      %v696 = vpop.f32.mrf.mxu0
      %697 = vdwg.mxu0
      %v702 = vunpack.c.l.b16 %v578
      %v703 = vunpack.c.l.b16 %v579
      %v704 = vunpack.c.l.b16 %v580
      %v705 = vunpack.c.l.b16 %v581
      %v706 = vpack.c.b16 %v703, %v702
      %v707 = vpack.c.b16 %v705, %v704
      %710 = vmatpush.bf16.msra.mxu0 0
      %711 = vmatpush.bf16.msra.mxu0 0
      %712 = vmatpush.bf16.msra.mxu0 0
      %713 = vmatpush.bf16.msra.mxu0 0
      %714 = vmatpush.bf16.msra.mxu0 0
      %715 = vmatpush.bf16.msra.mxu0 0
      %716 = vmatpush.bf16.msra.mxu0 %v707
      %717 = vmatpush.bf16.msra.mxu0 %v706
      %718 = vmatmul.bf16.gmra.mxu0 %v683
      %v719 = vpop.f32.mrf.mxu0
      %v720 = vadd.f32 %v647, %v719
      %v721 = vpop.f32.mrf.mxu0
      %722 = vdwg.mxu0
      %v727 = vunpack.c.l.b16 %v582
      %v728 = vunpack.c.l.b16 %v583
      %v729 = vunpack.c.l.b16 %v584
      %v730 = vunpack.c.l.b16 %v585
      %v731 = vpack.c.b16 %v728, %v727
      %v732 = vpack.c.b16 %v730, %v729
      %735 = vmatpush.bf16.msra.mxu0 0
      %736 = vmatpush.bf16.msra.mxu0 0
      %737 = vmatpush.bf16.msra.mxu0 0
      %738 = vmatpush.bf16.msra.mxu0 0
      %739 = vmatpush.bf16.msra.mxu0 0
      %740 = vmatpush.bf16.msra.mxu0 0
      %741 = vmatpush.bf16.msra.mxu0 %v732
      %742 = vmatpush.bf16.msra.mxu0 %v731
      %743 = vmatmul.bf16.gmra.mxu0 %v683
      %v744 = vpop.f32.mrf.mxu0
      %v745 = vadd.f32 %v648, %v744
      %v746 = vpop.f32.mrf.mxu0
      %747 = vdwg.mxu0
      %v752 = vunpack.c.l.b16 %v586
      %v753 = vunpack.c.l.b16 %v587
      %v754 = vunpack.c.l.b16 %v588
      %v755 = vunpack.c.l.b16 %v589
      %v756 = vpack.c.b16 %v753, %v752
      %v757 = vpack.c.b16 %v755, %v754
      %760 = vmatpush.bf16.msra.mxu0 0
      %761 = vmatpush.bf16.msra.mxu0 0
      %762 = vmatpush.bf16.msra.mxu0 0
      %763 = vmatpush.bf16.msra.mxu0 0
      %764 = vmatpush.bf16.msra.mxu0 0
      %765 = vmatpush.bf16.msra.mxu0 0
      %766 = vmatpush.bf16.msra.mxu0 %v757
      %767 = vmatpush.bf16.msra.mxu0 %v756
      %768 = vmatmul.bf16.gmra.mxu0 %v683
      %v769 = vpop.f32.mrf.mxu0
      %v770 = vadd.f32 %v649, %v769
      %v771 = vpop.f32.mrf.mxu0
      %772 = vdwg.mxu0
      %v777 = vunpack.c.l.b16 %v590
      %v778 = vunpack.c.l.b16 %v591
      %v779 = vunpack.c.l.b16 %v592
      %v780 = vunpack.c.l.b16 %v593
      %v781 = vpack.c.b16 %v778, %v777
      %v782 = vpack.c.b16 %v780, %v779
      %785 = vmatpush.bf16.msra.mxu0 0
      %786 = vmatpush.bf16.msra.mxu0 0
      %787 = vmatpush.bf16.msra.mxu0 0
      %788 = vmatpush.bf16.msra.mxu0 0
      %789 = vmatpush.bf16.msra.mxu0 0
      %790 = vmatpush.bf16.msra.mxu0 0
      %791 = vmatpush.bf16.msra.mxu0 %v782
      %792 = vmatpush.bf16.msra.mxu0 %v781
      %793 = vmatmul.bf16.gmra.mxu0 %v683
      %v794 = vpop.f32.mrf.mxu0
      %v795 = vadd.f32 %v650, %v794
      %v796 = vpop.f32.mrf.mxu0
      %797 = vdwg.mxu0
      %v802 = vunpack.c.l.b16 %v594
      %v803 = vunpack.c.l.b16 %v595
      %v804 = vunpack.c.l.b16 %v596
      %v805 = vunpack.c.l.b16 %v597
      %v806 = vpack.c.b16 %v803, %v802
      %v807 = vpack.c.b16 %v805, %v804
      %810 = vmatpush.bf16.msra.mxu0 0
      %811 = vmatpush.bf16.msra.mxu0 0
      %812 = vmatpush.bf16.msra.mxu0 0
      %813 = vmatpush.bf16.msra.mxu0 0
      %814 = vmatpush.bf16.msra.mxu0 0
      %815 = vmatpush.bf16.msra.mxu0 0
      %816 = vmatpush.bf16.msra.mxu0 %v807
      %817 = vmatpush.bf16.msra.mxu0 %v806
      %818 = vmatmul.bf16.gmra.mxu0 %v683
      %v819 = vpop.f32.mrf.mxu0
      %v820 = vadd.f32 %v651, %v819
      %v821 = vpop.f32.mrf.mxu0
      %822 = vdwg.mxu0
      %v827 = vunpack.c.l.b16 %v598
      %v828 = vunpack.c.l.b16 %v599
      %v829 = vunpack.c.l.b16 %v600
      %v830 = vunpack.c.l.b16 %v601
      %v831 = vpack.c.b16 %v828, %v827
      %v832 = vpack.c.b16 %v830, %v829
      %835 = vmatpush.bf16.msra.mxu0 0
      %836 = vmatpush.bf16.msra.mxu0 0
      %837 = vmatpush.bf16.msra.mxu0 0
      %838 = vmatpush.bf16.msra.mxu0 0
      %839 = vmatpush.bf16.msra.mxu0 0
      %840 = vmatpush.bf16.msra.mxu0 0
      %841 = vmatpush.bf16.msra.mxu0 %v832
      %842 = vmatpush.bf16.msra.mxu0 %v831
      %843 = vmatmul.bf16.gmra.mxu0 %v683
      %v844 = vpop.f32.mrf.mxu0
      %v845 = vadd.f32 %v652, %v844
      %v846 = vpop.f32.mrf.mxu0
      %847 = vdwg.mxu0
      %v852 = vunpack.c.l.b16 %v602
      %v853 = vunpack.c.l.b16 %v603
      %v854 = vunpack.c.l.b16 %v604
      %v855 = vunpack.c.l.b16 %v605
      %v856 = vpack.c.b16 %v853, %v852
      %v857 = vpack.c.b16 %v855, %v854
      %860 = vmatpush.bf16.msra.mxu0 0
      %861 = vmatpush.bf16.msra.mxu0 0
      %862 = vmatpush.bf16.msra.mxu0 0
      %863 = vmatpush.bf16.msra.mxu0 0
      %864 = vmatpush.bf16.msra.mxu0 0
      %865 = vmatpush.bf16.msra.mxu0 0
      %866 = vmatpush.bf16.msra.mxu0 %v857
      %867 = vmatpush.bf16.msra.mxu0 %v856
      %868 = vmatmul.bf16.gmra.mxu0 %v683
      %v869 = vpop.f32.mrf.mxu0
      %v870 = vadd.f32 %v653, %v869
      %v871 = vpop.f32.mrf.mxu0
      %872 = vdwg.mxu0
      %v877 = vunpack.c.l.b16 %v606
      %v878 = vunpack.c.l.b16 %v607
      %v879 = vunpack.c.l.b16 %v608
      %v880 = vunpack.c.l.b16 %v609
      %v881 = vpack.c.b16 %v878, %v877
      %v882 = vpack.c.b16 %v880, %v879
      %885 = vmatpush.bf16.msra.mxu0 0
      %886 = vmatpush.bf16.msra.mxu0 0
      %887 = vmatpush.bf16.msra.mxu0 0
      %888 = vmatpush.bf16.msra.mxu0 0
      %889 = vmatpush.bf16.msra.mxu0 0
      %890 = vmatpush.bf16.msra.mxu0 0
      %891 = vmatpush.bf16.msra.mxu0 %v882
      %892 = vmatpush.bf16.msra.mxu0 %v881
      %893 = vmatmul.bf16.gmra.mxu0 %v683
      %v894 = vpop.f32.mrf.mxu0
      %v895 = vadd.f32 %v654, %v894
      %v896 = vpop.f32.mrf.mxu0
      %897 = vdwg.mxu0
      %v902 = vunpack.c.l.b16 %v610
      %v903 = vunpack.c.l.b16 %v611
      %v904 = vunpack.c.l.b16 %v612
      %v905 = vunpack.c.l.b16 %v613
      %v906 = vpack.c.b16 %v903, %v902
      %v907 = vpack.c.b16 %v905, %v904
      %910 = vmatpush.bf16.msra.mxu0 0
      %911 = vmatpush.bf16.msra.mxu0 0
      %912 = vmatpush.bf16.msra.mxu0 0
      %913 = vmatpush.bf16.msra.mxu0 0
      %914 = vmatpush.bf16.msra.mxu0 0
      %915 = vmatpush.bf16.msra.mxu0 0
      %916 = vmatpush.bf16.msra.mxu0 %v907
      %917 = vmatpush.bf16.msra.mxu0 %v906
      %918 = vmatmul.bf16.gmra.mxu0 %v683
      %v919 = vpop.f32.mrf.mxu0
      %v920 = vadd.f32 %v655, %v919
      %v921 = vpop.f32.mrf.mxu0
      %922 = vdwg.mxu0
      %v927 = vunpack.c.l.b16 %v614
      %v928 = vunpack.c.l.b16 %v615
      %v929 = vunpack.c.l.b16 %v616
      %v930 = vunpack.c.l.b16 %v617
      %v931 = vpack.c.b16 %v928, %v927
      %v932 = vpack.c.b16 %v930, %v929
      %935 = vmatpush.bf16.msra.mxu0 0
      %936 = vmatpush.bf16.msra.mxu0 0
      %937 = vmatpush.bf16.msra.mxu0 0
      %938 = vmatpush.bf16.msra.mxu0 0
      %939 = vmatpush.bf16.msra.mxu0 0
      %940 = vmatpush.bf16.msra.mxu0 0
      %941 = vmatpush.bf16.msra.mxu0 %v932
      %942 = vmatpush.bf16.msra.mxu0 %v931
      %943 = vmatmul.bf16.gmra.mxu0 %v683
      %v944 = vpop.f32.mrf.mxu0
      %v945 = vadd.f32 %v656, %v944
      %v946 = vpop.f32.mrf.mxu0
      %947 = vdwg.mxu0
      %v952 = vunpack.c.l.b16 %v618
      %v953 = vunpack.c.l.b16 %v619
      %v954 = vunpack.c.l.b16 %v620
      %v955 = vunpack.c.l.b16 %v621
      %v956 = vpack.c.b16 %v953, %v952
      %v957 = vpack.c.b16 %v955, %v954
      %960 = vmatpush.bf16.msra.mxu0 0
      %961 = vmatpush.bf16.msra.mxu0 0
      %962 = vmatpush.bf16.msra.mxu0 0
      %963 = vmatpush.bf16.msra.mxu0 0
      %964 = vmatpush.bf16.msra.mxu0 0
      %965 = vmatpush.bf16.msra.mxu0 0
      %966 = vmatpush.bf16.msra.mxu0 %v957
      %967 = vmatpush.bf16.msra.mxu0 %v956
      %968 = vmatmul.bf16.gmra.mxu0 %v683
      %v969 = vpop.f32.mrf.mxu0
      %v970 = vadd.f32 %v657, %v969
      %v971 = vpop.f32.mrf.mxu0
      %972 = vdwg.mxu0
      %v973 = vpack.c.bf16 %v695, %v695
      %v974 = vpack.c.bf16 %v720, %v720
      %v975 = vpack.c.bf16 %v745, %v745
      %v976 = vpack.c.bf16 %v770, %v770
      %v977 = vpack.c.bf16 %v795, %v795
      %v978 = vpack.c.bf16 %v820, %v820
      %v979 = vpack.c.bf16 %v845, %v845
      %v980 = vpack.c.bf16 %v870, %v870
      %v981 = vpack.c.bf16 %v895, %v895
      %v982 = vpack.c.bf16 %v920, %v920
      %v983 = vpack.c.bf16 %v945, %v945
      %v984 = vpack.c.bf16 %v970, %v970
      %v985 = vld [vmem:[%s526] sm:$0x1]
      %v986 = vsub.f32 1.0, %v985
      %v987 = vmul.f32 %v986, -1e+09
      %v989 = vperm.slane %v987, 0
      %vm991 = vcmask 64512
      %v993 = vsel %vm991, %v973, 0
      %v996 = vsel %vm991, %v977, 0
      %998 = vmatpush.bf16.xpose.msra.mxu0 0
      %999 = vmatpush.bf16.xpose.msra.mxu0 0
      %1000 = vmatpush.bf16.xpose.msra.mxu0 0
      %1001 = vmatpush.bf16.xpose.msra.mxu0 0
      %1002 = vmatpush.bf16.xpose.msra.mxu0 0
      %1003 = vmatpush.bf16.xpose.msra.mxu0 0
      %1004 = vmatpush.bf16.xpose.msra.mxu0 0
      %1005 = vmatpush.bf16.xpose.msra.mxu0 %v996
      %1006 = vmatmul.bf16.gmra.mxu0 %v993
      %v1007 = vpop.f32.mrf.mxu0
      %v1008 = vadd.f32 %v989, %v1007
      %v1009 = vpop.f32.mrf.mxu0
      %1010 = vdwg.mxu0
      %v1012 = vsel %vm991, %v974, 0
      %v1015 = vsel %vm991, %v978, 0
      %1017 = vmatpush.bf16.xpose.msra.mxu0 0
      %1018 = vmatpush.bf16.xpose.msra.mxu0 0
      %1019 = vmatpush.bf16.xpose.msra.mxu0 0
      %1020 = vmatpush.bf16.xpose.msra.mxu0 0
      %1021 = vmatpush.bf16.xpose.msra.mxu0 0
      %1022 = vmatpush.bf16.xpose.msra.mxu0 0
      %1023 = vmatpush.bf16.xpose.msra.mxu0 0
      %1024 = vmatpush.bf16.xpose.msra.mxu0 %v1015
      %1025 = vmatmul.bf16.gmra.mxu0 %v1012
      %v1026 = vpop.f32.mrf.mxu0
      %v1027 = vadd.f32 %v989, %v1026
      %v1028 = vpop.f32.mrf.mxu0
      %1029 = vdwg.mxu0
      %v1031 = vsel %vm991, %v975, 0
      %v1034 = vsel %vm991, %v979, 0
      %1036 = vmatpush.bf16.xpose.msra.mxu0 0
      %1037 = vmatpush.bf16.xpose.msra.mxu0 0
      %1038 = vmatpush.bf16.xpose.msra.mxu0 0
      %1039 = vmatpush.bf16.xpose.msra.mxu0 0
      %1040 = vmatpush.bf16.xpose.msra.mxu0 0
      %1041 = vmatpush.bf16.xpose.msra.mxu0 0
      %1042 = vmatpush.bf16.xpose.msra.mxu0 0
      %1043 = vmatpush.bf16.xpose.msra.mxu0 %v1034
      %1044 = vmatmul.bf16.gmra.mxu0 %v1031
      %v1045 = vpop.f32.mrf.mxu0
      %v1046 = vadd.f32 %v989, %v1045
      %v1047 = vpop.f32.mrf.mxu0
      %1048 = vdwg.mxu0
      %v1050 = vsel %vm991, %v976, 0
      %v1053 = vsel %vm991, %v980, 0
      %1055 = vmatpush.bf16.xpose.msra.mxu0 0
      %1056 = vmatpush.bf16.xpose.msra.mxu0 0
      %1057 = vmatpush.bf16.xpose.msra.mxu0 0
      %1058 = vmatpush.bf16.xpose.msra.mxu0 0
      %1059 = vmatpush.bf16.xpose.msra.mxu0 0
      %1060 = vmatpush.bf16.xpose.msra.mxu0 0
      %1061 = vmatpush.bf16.xpose.msra.mxu0 0
      %1062 = vmatpush.bf16.xpose.msra.mxu0 %v1053
      %1063 = vmatmul.bf16.gmra.mxu0 %v1050
      %v1064 = vpop.f32.mrf.mxu0
      %v1065 = vadd.f32 %v989, %v1064
      %v1066 = vpop.f32.mrf.mxu0
      %1067 = vdwg.mxu0
      %v1068 = vsel %vm991, %v1008, -inf
      %1069 = vmax.xlane.f32.xlu0 %v1068
      %v1070 = vpop.xlane.xlu0 %1069
      %v1071 = vsel %vm991, %v1027, -inf
      %1072 = vmax.xlane.f32.xlu0 %v1071
      %v1073 = vpop.xlane.xlu0 %1072
      %v1074 = vsel %vm991, %v1046, -inf
      %1075 = vmax.xlane.f32.xlu0 %v1074
      %v1076 = vpop.xlane.xlu0 %1075
      %v1077 = vsel %vm991, %v1065, -inf
      %1078 = vmax.xlane.f32.xlu0 %v1077
      %v1079 = vpop.xlane.xlu0 %1078
      %v1080 = vsub.f32 %v1008, %v1070
      %v1081 = vsub.f32 %v1027, %v1073
      %v1082 = vsub.f32 %v1046, %v1076
      %v1083 = vsub.f32 %v1065, %v1079
      %v1084 = vmul.f32 %v1080, 1.442695
      %v1085 = vpow.pop %v1084
      %v1086 = vmul.f32 %v1081, 1.442695
      %v1087 = vpow.pop %v1086
      %v1088 = vmul.f32 %v1082, 1.442695
      %v1089 = vpow.pop %v1088
      %v1090 = vmul.f32 %v1083, 1.442695
      %v1091 = vpow.pop %v1090
      %v1092 = vsel %vm991, %v1085, 0.0
      %1093 = vadd.xlane.f32.xlu0 %v1092
      %v1094 = vpop.xlane.xlu0 %1093
      %v1095 = vsel %vm991, %v1087, 0.0
      %1096 = vadd.xlane.f32.xlu0 %v1095
      %v1097 = vpop.xlane.xlu0 %1096
      %v1098 = vsel %vm991, %v1089, 0.0
      %1099 = vadd.xlane.f32.xlu0 %v1098
      %v1100 = vpop.xlane.xlu0 %1099
      %v1101 = vsel %vm991, %v1091, 0.0
      %1102 = vadd.xlane.f32.xlu0 %v1101
      %v1103 = vpop.xlane.xlu0 %1102
      %v1104 = vpack.c.bf16 %v1085, %v1085
      %v1105 = vpack.c.bf16 %v1087, %v1087
      %v1106 = vpack.c.bf16 %v1089, %v1089
      %v1107 = vpack.c.bf16 %v1091, %v1091
      %v1109 = vsel %vm991, %v1104, 0
      %vm1111 = vcmask 1043456
      %v1113 = vsel %vm1111, %v981, 0
      %1115 = vmatpush.bf16.msra.mxu0 0
      %1116 = vmatpush.bf16.msra.mxu0 0
      %1117 = vmatpush.bf16.msra.mxu0 0
      %1118 = vmatpush.bf16.msra.mxu0 0
      %1119 = vmatpush.bf16.msra.mxu0 0
      %1120 = vmatpush.bf16.msra.mxu0 0
      %1121 = vmatpush.bf16.msra.mxu0 0
      %1122 = vmatpush.bf16.msra.mxu0 %v1113
      %1123 = vmatmul.bf16.gmra.mxu0 %v1109
      %v1124 = vpop.f32.mrf.mxu0
      %v1125 = vadd.f32 0.0, %v1124
      %v1126 = vpop.f32.mrf.mxu0
      %1127 = vdwg.mxu0
      %v1129 = vsel %vm991, %v1105, 0
      %v1132 = vsel %vm1111, %v982, 0
      %1134 = vmatpush.bf16.msra.mxu0 0
      %1135 = vmatpush.bf16.msra.mxu0 0
      %1136 = vmatpush.bf16.msra.mxu0 0
      %1137 = vmatpush.bf16.msra.mxu0 0
      %1138 = vmatpush.bf16.msra.mxu0 0
      %1139 = vmatpush.bf16.msra.mxu0 0
      %1140 = vmatpush.bf16.msra.mxu0 0
      %1141 = vmatpush.bf16.msra.mxu0 %v1132
      %1142 = vmatmul.bf16.gmra.mxu0 %v1129
      %v1143 = vpop.f32.mrf.mxu0
      %v1144 = vadd.f32 0.0, %v1143
      %v1145 = vpop.f32.mrf.mxu0
      %1146 = vdwg.mxu0
      %v1148 = vsel %vm991, %v1106, 0
      %v1151 = vsel %vm1111, %v983, 0
      %1153 = vmatpush.bf16.msra.mxu0 0
      %1154 = vmatpush.bf16.msra.mxu0 0
      %1155 = vmatpush.bf16.msra.mxu0 0
      %1156 = vmatpush.bf16.msra.mxu0 0
      %1157 = vmatpush.bf16.msra.mxu0 0
      %1158 = vmatpush.bf16.msra.mxu0 0
      %1159 = vmatpush.bf16.msra.mxu0 0
      %1160 = vmatpush.bf16.msra.mxu0 %v1151
      %1161 = vmatmul.bf16.gmra.mxu0 %v1148
      %v1162 = vpop.f32.mrf.mxu0
      %v1163 = vadd.f32 0.0, %v1162
      %v1164 = vpop.f32.mrf.mxu0
      %1165 = vdwg.mxu0
      %v1167 = vsel %vm991, %v1107, 0
      %v1170 = vsel %vm1111, %v984, 0
      %1172 = vmatpush.bf16.msra.mxu0 0
      %1173 = vmatpush.bf16.msra.mxu0 0
      %1174 = vmatpush.bf16.msra.mxu0 0
      %1175 = vmatpush.bf16.msra.mxu0 0
      %1176 = vmatpush.bf16.msra.mxu0 0
      %1177 = vmatpush.bf16.msra.mxu0 0
      %1178 = vmatpush.bf16.msra.mxu0 0
      %1179 = vmatpush.bf16.msra.mxu0 %v1170
      %1180 = vmatmul.bf16.gmra.mxu0 %v1167
      %v1181 = vpop.f32.mrf.mxu0
      %v1182 = vadd.f32 0.0, %v1181
      %v1183 = vpop.f32.mrf.mxu0
      %1184 = vdwg.mxu0
      %v1185 = vrcp.pop %v1094
      %v1186 = vrcp.pop %v1097
      %v1187 = vrcp.pop %v1100
      %v1188 = vrcp.pop %v1103
      %v1189 = vmul.f32 %v1125, %v1185
      %v1190 = vmul.f32 %v1144, %v1186
      %v1191 = vmul.f32 %v1163, %v1187
      %v1192 = vmul.f32 %v1182, %v1188
      %v1193 = vpack.c.bf16 %v1189, %v1189
      %v1194 = vpack.c.bf16 %v1190, %v1190
      %v1195 = vpack.c.bf16 %v1191, %v1191
      %v1196 = vpack.c.bf16 %v1192, %v1192
      %v1197 = vld [vmem:[%s6] sm:$0xf]
      %v1198 = vld [vmem:[%s6 + $0x4] sm:$0xf]
      %v1199 = vld [vmem:[%s6 + $0x8] sm:$0xf]
      %v1200 = vld [vmem:[%s6 + $0xc] sm:$0xf]
      %v1202 = vsel %vm991, %v1193, 0
      %v1205 = vsel %vm1111, %v1197, 0
      %1207 = vmatpush.bf16.msra.mxu0 0
      %1208 = vmatpush.bf16.msra.mxu0 0
      %1209 = vmatpush.bf16.msra.mxu0 0
      %1210 = vmatpush.bf16.msra.mxu0 0
      %1211 = vmatpush.bf16.msra.mxu0 0
      %1212 = vmatpush.bf16.msra.mxu0 0
      %1213 = vmatpush.bf16.msra.mxu0 0
      %1214 = vmatpush.bf16.msra.mxu0 %v1205
      %1215 = vmatmul.bf16.gmra.mxu0 %v1202
      %v1216 = vpop.f32.mrf.mxu0
      %v1217 = vadd.f32 0.0, %v1216
      %v1218 = vpop.f32.mrf.mxu0
      %1219 = vdwg.mxu0
      %v1221 = vsel %vm991, %v1194, 0
      %v1224 = vsel %vm1111, %v1198, 0
      %1226 = vmatpush.bf16.msra.mxu0 0
      %1227 = vmatpush.bf16.msra.mxu0 0
      %1228 = vmatpush.bf16.msra.mxu0 0
      %1229 = vmatpush.bf16.msra.mxu0 0
      %1230 = vmatpush.bf16.msra.mxu0 0
      %1231 = vmatpush.bf16.msra.mxu0 0
      %1232 = vmatpush.bf16.msra.mxu0 0
      %1233 = vmatpush.bf16.msra.mxu0 %v1224
      %1234 = vmatmul.bf16.gmra.mxu0 %v1221
      %v1235 = vpop.f32.mrf.mxu0
      %v1236 = vadd.f32 0.0, %v1235
      %v1237 = vpop.f32.mrf.mxu0
      %1238 = vdwg.mxu0
      %v1240 = vsel %vm991, %v1195, 0
      %v1243 = vsel %vm1111, %v1199, 0
      %1245 = vmatpush.bf16.msra.mxu0 0
      %1246 = vmatpush.bf16.msra.mxu0 0
      %1247 = vmatpush.bf16.msra.mxu0 0
      %1248 = vmatpush.bf16.msra.mxu0 0
      %1249 = vmatpush.bf16.msra.mxu0 0
      %1250 = vmatpush.bf16.msra.mxu0 0
      %1251 = vmatpush.bf16.msra.mxu0 0
      %1252 = vmatpush.bf16.msra.mxu0 %v1243
      %1253 = vmatmul.bf16.gmra.mxu0 %v1240
      %v1254 = vpop.f32.mrf.mxu0
      %v1255 = vadd.f32 0.0, %v1254
      %v1256 = vpop.f32.mrf.mxu0
      %1257 = vdwg.mxu0
      %v1259 = vsel %vm991, %v1196, 0
      %v1262 = vsel %vm1111, %v1200, 0
      %1264 = vmatpush.bf16.msra.mxu0 0
      %1265 = vmatpush.bf16.msra.mxu0 0
      %1266 = vmatpush.bf16.msra.mxu0 0
      %1267 = vmatpush.bf16.msra.mxu0 0
      %1268 = vmatpush.bf16.msra.mxu0 0
      %1269 = vmatpush.bf16.msra.mxu0 0
      %1270 = vmatpush.bf16.msra.mxu0 0
      %1271 = vmatpush.bf16.msra.mxu0 %v1262
      %1272 = vmatmul.bf16.gmra.mxu0 %v1259
      %v1273 = vpop.f32.mrf.mxu0
      %v1274 = vadd.f32 0.0, %v1273
      %v1275 = vpop.f32.mrf.mxu0
      %1276 = vdwg.mxu0
      %v1277 = vsel %vm535, %v1217, 0.0
      %v1278 = vsel %vm535, %v1236, 0.0
      %v1279 = vadd.f32 %v1277, %v1278
      %v1280 = vsel %vm535, %v1255, 0.0
      %v1281 = vadd.f32 %v1279, %v1280
      %v1282 = vsel %vm535, %v1274, 0.0
      %v1283 = vadd.f32 %v1281, %v1282
      %v1284 = vld [vmem:[%s7] sm:$0x1]
      %v1286 = vperm.slane %v1284, 0
      %v1288 = vadd.f32 %v1283, %v1286
      %v1289 = vadd.f32 %v1288, %v572
      %v1290 = vld [vmem:[%s8] sm:$0x1]
      %v1291 = vld [vmem:[%s9] sm:$0x1]
      %v1292 = vsel %vm535, %v1289, 0.0
      %1293 = vadd.xlane.f32.xlu0 %v1292
      %v1294 = vpop.xlane.xlu0 %1293
      %v1295 = vmul.f32 %v1294, %v545
      %v1296 = vsub.f32 %v1289, %v1295
      %v1297 = vmul.f32 %v1296, %v1296
      %v1298 = vsel %vm535, %v1297, 0.0
      %1299 = vadd.xlane.f32.xlu0 %v1298
      %v1300 = vpop.xlane.xlu0 %1299
      %v1301 = vmul.f32 %v1300, %v545
      %v1302 = vadd.f32 %v1301, 1e-12
      %v1303 = vrsqrt.pop %v1302
      %v1304 = vmul.f32 %v1303, %v1302
      %v1305 = vmul.f32 %v1304, %v1303
      %v1306 = vmul.f32 0.5, %v1305
      %v1307 = vsub.f32 1.5, %v1306
      %v1308 = vmul.f32 %v1303, %v1307
      %vm1309 = vweird.f32 %v1302
      %vm1310 = vweird.f32 %v1303
      %vm1311 = vmor %vm1309, %vm1310
      %v1312 = vsel %vm1311, %v1303, %v1308
      %v1313 = vmul.f32 %v1296, %v1312
      %v1315 = vperm.slane %v1290, 0
      %v1317 = vmul.f32 %v1313, %v1315
      %v1319 = vperm.slane %v1291, 0
      %v1321 = vadd.f32 %v1317, %v1319
      %v1322 = vpack.c.bf16 %v1321, %v1321
      %v1323 = vld [vmem:[%s10] sm:$0xf]
      %v1324 = vld [vmem:[%s10 + $0x4] sm:$0xf]
      %v1325 = vld [vmem:[%s10 + $0x8] sm:$0xf]
      %v1326 = vld [vmem:[%s10 + $0xc] sm:$0xf]
      %v1327 = vld [vmem:[%s11] sm:$0x1]
      %v1329 = vperm.slane %v1327, 0
      %v1335 = vunpack.c.l.b16 %v1323
      %v1336 = vunpack.c.l.b16 %v1324
      %v1337 = vunpack.c.l.b16 %v1325
      %v1338 = vunpack.c.l.b16 %v1326
      %v1339 = vpack.c.b16 %v1336, %v1335
      %v1340 = vpack.c.b16 %v1338, %v1337
      %v1344 = vsel %vm535, %v1322, 0
      %1346 = vmatpush.bf16.msra.mxu0 0
      %1347 = vmatpush.bf16.msra.mxu0 0
      %1348 = vmatpush.bf16.msra.mxu0 0
      %1349 = vmatpush.bf16.msra.mxu0 0
      %1350 = vmatpush.bf16.msra.mxu0 0
      %1351 = vmatpush.bf16.msra.mxu0 0
      %1352 = vmatpush.bf16.msra.mxu0 %v1340
      %1353 = vmatpush.bf16.msra.mxu0 %v1339
      %1354 = vmatmul.bf16.gmra.mxu0 %v1344
      %v1355 = vpop.f32.mrf.mxu0
      %v1356 = vadd.f32 %v1329, %v1355
      %v1357 = vpop.f32.mrf.mxu0
      %1358 = vdwg.mxu0
      %v1359 = vmul.f32 %v1356, 0.5
      %v1360 = vmul.f32 %v1356, 0.044715
      %v1361 = vmul.f32 %v1360, %v1356
      %v1362 = vmul.f32 %v1361, %v1356
      %v1363 = vadd.f32 %v1356, %v1362
      %v1364 = vmul.f32 %v1363, 0.7978846
      %v1365 = vtanh.pop %v1364
      %v1366 = vadd.f32 %v1365, 1.0
      %v1367 = vmul.f32 %v1359, %v1366
      %v1368 = vpack.c.bf16 %v1367, %v1367
      %v1369 = vld [vmem:[%s12] sm:$0xf]
      %v1370 = vld [vmem:[%s12 + $0x4] sm:$0xf]
      %v1371 = vld [vmem:[%s12 + $0x8] sm:$0xf]
      %v1372 = vld [vmem:[%s12 + $0xc] sm:$0xf]
      %v1373 = vld [vmem:[%s12 + $0x10] sm:$0xf]
      %v1374 = vld [vmem:[%s12 + $0x14] sm:$0xf]
      %v1375 = vld [vmem:[%s12 + $0x18] sm:$0xf]
      %v1376 = vld [vmem:[%s12 + $0x1c] sm:$0xf]
      %v1377 = vld [vmem:[%s13] sm:$0x1]
      %v1379 = vperm.slane %v1377, 0
      %v1389 = vunpack.c.l.b16 %v1369
      %v1390 = vunpack.c.l.b16 %v1370
      %v1391 = vunpack.c.l.b16 %v1371
      %v1392 = vunpack.c.l.b16 %v1372
      %v1393 = vunpack.c.l.b16 %v1373
      %v1394 = vunpack.c.l.b16 %v1374
      %v1395 = vunpack.c.l.b16 %v1375
      %v1396 = vunpack.c.l.b16 %v1376
      %v1397 = vpack.c.b16 %v1390, %v1389
      %v1398 = vpack.c.b16 %v1392, %v1391
      %v1399 = vpack.c.b16 %v1394, %v1393
      %v1400 = vpack.c.b16 %v1396, %v1395
      %vm1405 = vcmask 523264
      %v1407 = vsel %vm1405, %v1368, 0
      %1409 = vmatpush.bf16.msra.mxu0 0
      %1410 = vmatpush.bf16.msra.mxu0 0
      %1411 = vmatpush.bf16.msra.mxu0 0
      %1412 = vmatpush.bf16.msra.mxu0 0
      %1413 = vmatpush.bf16.msra.mxu0 %v1400
      %1414 = vmatpush.bf16.msra.mxu0 %v1399
      %1415 = vmatpush.bf16.msra.mxu0 %v1398
      %1416 = vmatpush.bf16.msra.mxu0 %v1397
      %1417 = vmatmul.bf16.gmra.mxu0 %v1407
      %v1418 = vpop.f32.mrf.mxu0
      %v1419 = vadd.f32 %v1379, %v1418
      %v1420 = vpop.f32.mrf.mxu0
      %1421 = vdwg.mxu0
      %v1422 = vadd.f32 %v1419, %v1321
      %v1423 = vld [vmem:[%s14] sm:$0x1]
      %v1424 = vld [vmem:[%s15] sm:$0x1]
      %v1425 = vsel %vm535, %v1422, 0.0
      %1426 = vadd.xlane.f32.xlu0 %v1425
      %v1427 = vpop.xlane.xlu0 %1426
      %v1428 = vmul.f32 %v1427, %v545
      %v1429 = vsub.f32 %v1422, %v1428
      %v1430 = vmul.f32 %v1429, %v1429
      %v1431 = vsel %vm535, %v1430, 0.0
      %1432 = vadd.xlane.f32.xlu0 %v1431
      %v1433 = vpop.xlane.xlu0 %1432
      %v1434 = vmul.f32 %v1433, %v545
      %v1435 = vadd.f32 %v1434, 1e-12
      %v1436 = vrsqrt.pop %v1435
      %v1437 = vmul.f32 %v1436, %v1435
      %v1438 = vmul.f32 %v1437, %v1436
      %v1439 = vmul.f32 0.5, %v1438
      %v1440 = vsub.f32 1.5, %v1439
      %v1441 = vmul.f32 %v1436, %v1440
      %vm1442 = vweird.f32 %v1435
      %vm1443 = vweird.f32 %v1436
      %vm1444 = vmor %vm1442, %vm1443
      %v1445 = vsel %vm1444, %v1436, %v1441
      %v1446 = vmul.f32 %v1429, %v1445
      %v1448 = vperm.slane %v1423, 0
      %v1450 = vmul.f32 %v1446, %v1448
      %v1452 = vperm.slane %v1424, 0
      %v1454 = vadd.f32 %v1450, %v1452
      %1455 = vst.msk [vmem:[%s530] sm:$0xff] %vm535, %v1454
      %p1456 = scmp.lt.s32.totalorder %s27, 1
      %s1457 = scalar_select %p1456, %s27, 1
      %s1458 = smul.addr %s1457, 8
      %s1459 = scalar_lea.vmem %s16, %s1458
      // Predicated region
      $region85: #{risk_analyzer_forward.3} parent=83 // pred_check
        %p1460 = pneg %p391
      $region86: #{risk_analyzer_forward.3} parent=83 // pred_check_branch
        %1462 = sbr.rel (%p1460) target = $region88
      $region87: #{risk_analyzer_forward.3} parent=83 // pred_region
        _
      $region88: #{risk_analyzer_forward.3} parent=83 // pred_fallthru
        _
    $region84: #{risk_analyzer_forward.3} parent=5 // pred_fallthru
      _
    %p1463 = scmp.le.s32.totalorder 2, %s22
    // Predicated region
    $region89: #{risk_analyzer_forward.3} parent=5 // pred_check
      %p1464 = pneg %p1463
    $region90: #{risk_analyzer_forward.3} parent=5 // pred_check_branch
      %1466 = sbr.rel (%p1464) target = $region92
    $region91: #{risk_analyzer_forward.3} parent=5 // pred_region
      %s1467 = ssub.s32 %s22, 2
      // Predicated region
      $region93: #{risk_analyzer_forward.3} parent=91 // pred_check
        %p1468 = pneg %p397
      $region94: #{risk_analyzer_forward.3} parent=91 // pred_check_branch
        %1470 = sbr.rel (%p1468) target = $region96
      $region95: #{risk_analyzer_forward.3} parent=91 // pred_region
        %p1471 = scmp.lt.s32.totalorder %s28, 1
        %s1472 = scalar_select %p1471, %s28, 1
        %s1473 = smul.addr %s1472, 8
        %s1474 = scalar_lea.vmem %s16, %s1473
      $region96: #{risk_analyzer_forward.3} parent=91 // pred_fallthru
        _
    $region92: #{risk_analyzer_forward.3} parent=5 // pred_fallthru
      _
  $region6: #{risk_analyzer_forward.3} parent=0 // loop_footer
    %s26 = sadd.s32 1, %s22
  $region7: #{risk_analyzer_forward.3} parent=0 // loop_footer_branch
    %21 = sbr.rel target = $region3
  $region8: #{risk_analyzer_forward.3} parent=0 // loop_exit
    _

</llo_original>
